<compile_context>
chip_gen: v6e
topology: v6e:2x2x1
jax: 0.10.0
libtpu: 0.0.40
codegen_flags: <defaults>
</compile_context>

<pallas_src>
import functools
import math

import jax
import jax.numpy as jnp
from jax.experimental import pallas as pl
from jax.experimental.pallas import tpu as pltpu

BN_EPS = 1e-5
_VMEM_LIMIT = 48 * 1024 * 1024   # < v7x 64 MiB physical, > every default scoped limit
_PAD_COORD = 1.0e4               # far-away coordinate for padded points -> g == 0
_POS_PACK = 8                    # positions zero-padded 3 -> 8 coords (sublane-native K)


def _tile(n, target):
    """Largest multiple of 128 that divides n and is <= target (fallback n)."""
    best = None
    t = 128
    while t <= min(target, n):
        if n % t == 0:
            best = t
        t += 128
    return best if best is not None else n


# ----------------------------------------------------------------------------
# Lattice layer core (Gaussian-filter approximation, flash-style online).
# ----------------------------------------------------------------------------
def _lattice_accumulate(x_kv, posq_ref, poskt_ref, acc_ref, *,
                        neg_half_lambda_sq, d2_on_mxu):
    """acc += g @ x_kv for one (tq, tkv) tile.  x_kv: (tkv, Cin+1) bf16,
    last column is all-ones so acc[:, Cin] accumulates the row normalizer."""
    pq = posq_ref[0]                                   # (tq, 8)  f32
    pk = poskt_ref[0]                                  # (8, tkv) f32

    if d2_on_mxu:
        # d2 = |q|^2 + |k|^2 - 2 q.k with the cross term on the (idle) MXU.
        # qsq/ksq are derived from the SAME bf16-rounded coordinates so the
        # diagonal distance is exactly 0; clamp guards f32 cancellation.
        pqb = pq.astype(jnp.bfloat16)
        pkb = pk.astype(jnp.bfloat16)
        pqf = pqb.astype(jnp.float32)
        pkf = pkb.astype(jnp.float32)
        qsq = pqf[:, 0:1] ** 2 + pqf[:, 1:2] ** 2 + pqf[:, 2:3] ** 2   # (tq, 1)
        ksq = pkf[0:1, :] ** 2 + pkf[1:2, :] ** 2 + pkf[2:3, :] ** 2   # (1, tkv)
        cross = jnp.dot(pqb, pkb, preferred_element_type=jnp.float32)  # (tq, tkv)
        d2 = jnp.maximum(qsq + ksq - 2.0 * cross, 0.0)
    else:
        # Exact f32 per-coordinate path (VPU); used when the MXU is busy
        # (Cin = 256 layers) and precision matters most.
        d2 = (pq[:, 0:1] - pk[0:1, :]) ** 2
        d2 = d2 + (pq[:, 1:2] - pk[1:2, :]) ** 2
        d2 = d2 + (pq[:, 2:3] - pk[2:3, :]) ** 2                       # (tq, tkv)

    # Gaussian splat/slice weights, bf16 straight away (no f32 g temporary).
    g = jnp.exp(neg_half_lambda_sq * d2).astype(jnp.bfloat16)
    acc_ref[...] += jnp.dot(g, x_kv, preferred_element_type=jnp.float32)


def _lattice_finalize(acc_ref, w_ref, shift_ref, o_ref, *, cin):
    """Normalize, channel-mix (weight carries a zero column whose shift is 1,
    so output column Cout is exactly 1 -> the ones column of the activation)."""
    acc = acc_ref[...]                                      # (tq, Cin+1) f32
    inv = pl.reciprocal(acc[:, cin:cin + 1], approx=True)   # 1 / sum_j g_ij
    filtered = (acc[:, :cin] * inv).astype(jnp.bfloat16)    # (tq, Cin)
    y = jnp.dot(filtered, w_ref[...], preferred_element_type=jnp.float32)
    y = jnp.maximum(y + shift_ref[...], 0.0)                # (tq, Cout+1), last col = 1
    o_ref[0] = y.astype(o_ref.dtype)


def _lattice_kernel(x_ref, posq_ref, poskt_ref, w_ref, shift_ref, o_ref,
                    acc_ref, *, neg_half_lambda_sq, d2_on_mxu, cin):
    j = pl.program_id(2)

    @pl.when(j == 0)
    def _init():
        acc_ref[...] = jnp.zeros_like(acc_ref)

    _lattice_accumulate(x_ref[0], posq_ref, poskt_ref, acc_ref,
                        neg_half_lambda_sq=neg_half_lambda_sq,
                        d2_on_mxu=d2_on_mxu)

    @pl.when(j == pl.num_programs(2) - 1)
    def _fin():
        _lattice_finalize(acc_ref, w_ref, shift_ref, o_ref, cin=cin)


def _lattice_kernel_fused_in(xraw_ref, posq_ref, poskt_ref, w_in_ref,
                             shift_in_ref, w_ref, shift_ref, o_ref, acc_ref, *,
                             neg_half_lambda_sq, d2_on_mxu, cin):
    """Layer-1 variant: the kv features are the fused mlp1 stem
    relu(x @ W1 + b1) recomputed in-kernel from the raw points (tiny matmul),
    already carrying the ones column (zero weight column, shift = 1)."""
    j = pl.program_id(2)

    @pl.when(j == 0)
    def _init():
        acc_ref[...] = jnp.zeros_like(acc_ref)

    h = jnp.dot(xraw_ref[0], w_in_ref[...],
                preferred_element_type=jnp.float32)          # (tkv, Cin+1) f32
    h = jnp.maximum(h + shift_in_ref[...], 0.0)
    _lattice_accumulate(h.astype(jnp.bfloat16), posq_ref, poskt_ref, acc_ref,
                        neg_half_lambda_sq=neg_half_lambda_sq,
                        d2_on_mxu=d2_on_mxu)

    @pl.when(j == pl.num_programs(2) - 1)
    def _fin():
        _lattice_finalize(acc_ref, w_ref, shift_ref, o_ref, cin=cin)


def _lattice_compiler_params():
    return pltpu.CompilerParams(
        dimension_semantics=("parallel", "parallel", "arbitrary"),
        vmem_limit_bytes=_VMEM_LIMIT)


def lattice_layer(x_aug, pos, pos_t, w, shift, *, pos_lambda, d2_on_mxu,
                  tq_target=512, tkv_target=1024):
    """x_aug: (B, N, Cin+1) bf16 (last column ones), pos: (B, N, 8) f32,
    pos_t: (B, 8, N) f32, w: (Cin, Cout+1) bf16, shift: (1, Cout+1) f32.
    Returns (B, N, Cout+1) bf16 with last column = 1."""
    B, N, cin1 = x_aug.shape
    cin = cin1 - 1
    cout1 = w.shape[1]
    pdim = pos.shape[2]
    tq = _tile(N, tq_target)
    tkv = _tile(N, tkv_target)
    kernel = functools.partial(
        _lattice_kernel, neg_half_lambda_sq=-0.5 * float(pos_lambda) ** 2,
        d2_on_mxu=d2_on_mxu, cin=cin)
    return pl.pallas_call(
        kernel,
        out_shape=jax.ShapeDtypeStruct((B, N, cout1), jnp.bfloat16),
        grid_spec=pltpu.PrefetchScalarGridSpec(
            num_scalar_prefetch=0,
            grid=(B, N // tq, N // tkv),
            in_specs=[
                pl.BlockSpec((1, tkv, cin1), lambda b, i, j: (b, j, 0)),
                pl.BlockSpec((1, tq, pdim), lambda b, i, j: (b, i, 0)),
                pl.BlockSpec((1, pdim, tkv), lambda b, i, j: (b, 0, j)),
                pl.BlockSpec(w.shape, lambda b, i, j: (0, 0)),
                pl.BlockSpec(shift.shape, lambda b, i, j: (0, 0)),
            ],
            out_specs=pl.BlockSpec((1, tq, cout1), lambda b, i, j: (b, i, 0)),
            scratch_shapes=[pltpu.VMEM((tq, cin1), jnp.float32)],
        ),
        compiler_params=_lattice_compiler_params(),
    )(x_aug, pos, pos_t, w, shift)


def lattice_layer_fused_in(xraw, pos, pos_t, w_in, shift_in, w, shift, *,
                           pos_lambda, d2_on_mxu=True,
                           tq_target=512, tkv_target=1024):
    """First lattice layer with the mlp1 stem fused in.
    xraw: (B, N, 8) f32 raw points, w_in: (8, Cin+1) f32, shift_in: (1, Cin+1)."""
    B, N, pdim = xraw.shape
    cin1 = w_in.shape[1]
    cin = cin1 - 1
    cout1 = w.shape[1]
    tq = _tile(N, tq_target)
    tkv = _tile(N, tkv_target)
    kernel = functools.partial(
        _lattice_kernel_fused_in, neg_half_lambda_sq=-0.5 * float(pos_lambda) ** 2,
        d2_on_mxu=d2_on_mxu, cin=cin)
    return pl.pallas_call(
        kernel,
        out_shape=jax.ShapeDtypeStruct((B, N, cout1), jnp.bfloat16),
        grid_spec=pltpu.PrefetchScalarGridSpec(
            num_scalar_prefetch=0,
            grid=(B, N // tq, N // tkv),
            in_specs=[
                pl.BlockSpec((1, tkv, pdim), lambda b, i, j: (b, j, 0)),
                pl.BlockSpec((1, tq, pdim), lambda b, i, j: (b, i, 0)),
                pl.BlockSpec((1, pdim, tkv), lambda b, i, j: (b, 0, j)),
                pl.BlockSpec(w_in.shape, lambda b, i, j: (0, 0)),
                pl.BlockSpec(shift_in.shape, lambda b, i, j: (0, 0)),
                pl.BlockSpec(w.shape, lambda b, i, j: (0, 0)),
                pl.BlockSpec(shift.shape, lambda b, i, j: (0, 0)),
            ],
            out_specs=pl.BlockSpec((1, tq, cout1), lambda b, i, j: (b, i, 0)),
            scratch_shapes=[pltpu.VMEM((tq, cin1), jnp.float32)],
        ),
        compiler_params=_lattice_compiler_params(),
    )(xraw, pos, pos_t, w_in, shift_in, w, shift)


# ----------------------------------------------------------------------------
# Fused segmentation head: mlp2a(concat) -> ReLU -> mlp2b -> ReLU -> mlp2c.
# Concat replaced by a sum of per-segment matmuls; one-hot folded into a
# per-batch bias row; classifier padded to 128 columns for lane-dense stores.
# ----------------------------------------------------------------------------
def _head_kernel(x1_ref, x2_ref, x3_ref, x4_ref, x5_ref,
                 wa1_ref, wa2_ref, wa3_ref, wa4_ref, wa5_ref,
                 bias_a_ref, wb_ref, shift_b_ref, wc_ref, bias_c_ref, o_ref):
    def mm(x_ref, w_ref):
        return jnp.dot(x_ref[0], w_ref[...], preferred_element_type=jnp.float32)

    h = (mm(x1_ref, wa1_ref) + mm(x2_ref, wa2_ref) + mm(x3_ref, wa3_ref)
         + mm(x4_ref, wa4_ref) + mm(x5_ref, wa5_ref))
    h = jnp.maximum(h + bias_a_ref[0], 0.0)                        # (tn, 256)

    h = jnp.dot(h.astype(jnp.bfloat16), wb_ref[...],
                preferred_element_type=jnp.float32)
    h = jnp.maximum(h + shift_b_ref[...], 0.0)                     # (tn, 128)

    # Dropout(0.3) -> identity at inference.
    y = jnp.dot(h.astype(jnp.bfloat16), wc_ref[...],
                preferred_element_type=jnp.float32)
    o_ref[0] = (y + bias_c_ref[...]).astype(o_ref.dtype)           # (tn, 128)


def head_mlp(xs, wa_list, bias_a, wb, shift_b, wc, bias_c, *, tn_target=1024):
    """xs: list of (B, N, C_s+1) bf16; bias_a: (B, 1, 256) f32.
    Returns (B, N, 128) f32 logits (classifier padded to 128 columns)."""
    B, N, _ = xs[0].shape
    cpad = wc.shape[1]
    tn = _tile(N, tn_target)

    x_specs = [pl.BlockSpec((1, tn, x.shape[2]), lambda b, i: (b, i, 0))
               for x in xs]
    wa_specs = [pl.BlockSpec(w.shape, lambda b, i: (0, 0)) for w in wa_list]
    in_specs = x_specs + wa_specs + [
        pl.BlockSpec((1, 1, bias_a.shape[2]), lambda b, i: (b, 0, 0)),
        pl.BlockSpec(wb.shape, lambda b, i: (0, 0)),
        pl.BlockSpec(shift_b.shape, lambda b, i: (0, 0)),
        pl.BlockSpec(wc.shape, lambda b, i: (0, 0)),
        pl.BlockSpec(bias_c.shape, lambda b, i: (0, 0)),
    ]
    return pl.pallas_call(
        _head_kernel,
        out_shape=jax.ShapeDtypeStruct((B, N, cpad), jnp.float32),
        grid_spec=pltpu.PrefetchScalarGridSpec(
            num_scalar_prefetch=0,
            grid=(B, N // tn),
            in_specs=in_specs,
            out_specs=pl.BlockSpec((1, tn, cpad), lambda b, i: (b, i, 0)),
        ),
        compiler_params=pltpu.CompilerParams(
            dimension_semantics=("parallel", "parallel"),
            vmem_limit_bytes=_VMEM_LIMIT),
    )(*xs, *wa_list, bias_a, wb, shift_b, wc, bias_c)


# ----------------------------------------------------------------------------
# Parameter construction (mirrors initialize_weights(); eval-mode BatchNorm
# folded into the weights as a scale, shift stays explicit and zero here).
# ----------------------------------------------------------------------------
def make_params(key, class_nums, category_nums):
    s = 1.0 / math.sqrt(1.0 + BN_EPS)   # folded BN scale (gamma=1, var=1)

    def nrm(k, shape):
        return 0.01 * jax.random.normal(k, shape, dtype=jnp.float32)

    def mix_aug(k, cin, cout):
        # Lattice channel-mix weight (BN scale folded) + a zero column whose
        # shift is 1 -> output column `cout` is exactly 1 (the ones column the
        # downstream consumer uses as the Gaussian row normalizer).
        w = nrm(k, (cin, cout)) * s
        w_aug = jnp.concatenate([w, jnp.zeros((cin, 1), jnp.float32)], axis=1)
        shift = jnp.zeros((1, cout + 1), jnp.float32).at[0, cout].set(1.0)
        return w_aug.astype(jnp.bfloat16), shift

    ks = jax.random.split(key, 9)

    # mlp1 stem (3 -> 32), fused into lattice layer 1; input coords are
    # zero-padded to 8, hidden width is 33 with the ones-producing column.
    w1 = nrm(ks[0], (3, 32)) * s
    mlp1_w = jnp.zeros((_POS_PACK, 33), jnp.float32).at[:3, :32].set(w1)
    mlp1_shift = jnp.zeros((1, 33), jnp.float32).at[0, 32].set(1.0)

    pl1_w, pl1_shift = mix_aug(ks[1], 32, 64)
    pl2_w, pl2_shift = mix_aug(ks[2], 64, 128)
    pl3_w, pl3_shift = mix_aug(ks[3], 128, 256)
    pl4_w, pl4_shift = mix_aug(ks[4], 256, 256)
    pl5_w, pl5_shift = mix_aug(ks[5], 256, 256)

    cat_in = 64 + 128 + 3 * 256 + category_nums
    w2a = nrm(ks[6], (cat_in, 256)) * s   # mlp2a weight (BN scale folded)

    def seg_aug(lo, hi):
        # One concat segment of mlp2a, plus a zero row that absorbs the
        # ones column carried by the incoming activation.
        seg = w2a[lo:hi]
        return jnp.concatenate(
            [seg, jnp.zeros((1, 256), jnp.float32)], axis=0).astype(jnp.bfloat16)

    wc = nrm(ks[8], (128, class_nums))    # mlp2c, no BN after, bias zero
    wc_pad = jnp.zeros((128, 128), jnp.float32).at[:, :class_nums].set(wc)

    return {
        "class_nums": class_nums,
        "mlp1_w": mlp1_w, "mlp1_shift": mlp1_shift,
        "pl1_w": pl1_w, "pl1_shift": pl1_shift,
        "pl2_w": pl2_w, "pl2_shift": pl2_shift,
        "pl3_w": pl3_w, "pl3_shift": pl3_shift,
        "pl4_w": pl4_w, "pl4_shift": pl4_shift,
        "pl5_w": pl5_w, "pl5_shift": pl5_shift,
        # mlp2a split by concat segment: [x1(64) x2(128) x3(256) x4(256) x5(256) one_hot]
        "mlp2a_w1": seg_aug(0, 64), "mlp2a_w2": seg_aug(64, 192),
        "mlp2a_w3": seg_aug(192, 448), "mlp2a_w4": seg_aug(448, 704),
        "mlp2a_w5": seg_aug(704, 960),
        "mlp2a_wcat": w2a[960:],                                  # (cat, 256) f32
        "mlp2a_shift": jnp.zeros((1, 256), jnp.float32),
        "mlp2b_w": (nrm(ks[7], (256, 128)) * s).astype(jnp.bfloat16),
        "mlp2b_shift": jnp.zeros((1, 128), jnp.float32),
        "mlp2c_w": wc_pad.astype(jnp.bfloat16),
        "mlp2c_b": jnp.zeros((1, 128), jnp.float32),
    }


# ----------------------------------------------------------------------------
# Forward pass (mirrors SplatNetSegment.forward, inference mode).
# ----------------------------------------------------------------------------
def splatnet_forward(params, x_ncw, labels, position, *, pos_lambda=64.0):
    """x_ncw: (B, 3, N) (PyTorch layout), labels: (B,), position: (B, N, 3).
    Returns logits in PyTorch layout (B, class_nums, N)."""
    B, _, N = x_ncw.shape
    nclass = params["class_nums"]

    x = jnp.transpose(x_ncw, (0, 2, 1)).astype(jnp.float32)       # (B, N, 3)
    pos = position.astype(jnp.float32)                            # (B, N, 3)

    # Pad N to a multiple of 128; padded points sit far away so their Gaussian
    # weight underflows to exactly 0 and never contaminates real points.
    Np = ((N + 127) // 128) * 128
    if Np != N:
        padn = Np - N
        x = jnp.pad(x, ((0, 0), (0, padn), (0, 0)))
        pos = jnp.pad(pos, ((0, 0), (0, padn), (0, 0)),
                      constant_values=_PAD_COORD)

    # Zero-pad coordinates 3 -> 8 (sublane-native K for the cross-term matmul).
    x8 = jnp.pad(x, ((0, 0), (0, 0), (0, _POS_PACK - 3)))
    pos8 = jnp.pad(pos, ((0, 0), (0, 0), (0, _POS_PACK - 3)))
    pos8_t = jnp.transpose(pos8, (0, 2, 1))                       # (B, 8, Np)

    x1 = lattice_layer_fused_in(
        x8, pos8, pos8_t, params["mlp1_w"], params["mlp1_shift"],
        params["pl1_w"], params["pl1_shift"],
        pos_lambda=pos_lambda, d2_on_mxu=True)                    # (B,Np,65)
    x2 = lattice_layer(x1, pos8, pos8_t, params["pl2_w"], params["pl2_shift"],
                       pos_lambda=pos_lambda / 2, d2_on_mxu=True)   # (B,Np,129)
    x3 = lattice_layer(x2, pos8, pos8_t, params["pl3_w"], params["pl3_shift"],
                       pos_lambda=pos_lambda / 4, d2_on_mxu=False)  # (B,Np,257)
    x4 = lattice_layer(x3, pos8, pos8_t, params["pl4_w"], params["pl4_shift"],
                       pos_lambda=pos_lambda / 8, d2_on_mxu=False)  # (B,Np,257)
    x5 = lattice_layer(x4, pos8, pos8_t, params["pl5_w"], params["pl5_shift"],
                       pos_lambda=pos_lambda / 16, d2_on_mxu=False) # (B,Np,257)

    # One-hot category @ W_cat == selecting one row of W_cat per batch; fold
    # it (plus the mlp2a BN shift) into a per-batch bias row.
    bias_a = params["mlp2a_wcat"][labels] + params["mlp2a_shift"]   # (B, 256)
    bias_a = bias_a[:, None, :]                                     # (B, 1, 256)

    logits = head_mlp(
        [x1, x2, x3, x4, x5],
        [params["mlp2a_w1"], params["mlp2a_w2"], params["mlp2a_w3"],
         params["mlp2a_w4"], params["mlp2a_w5"]],
        bias_a,
        params["mlp2b_w"], params["mlp2b_shift"],
        params["mlp2c_w"], params["mlp2c_b"])                       # (B, Np, 128)

    logits = logits[:, :N, :nclass]                                 # drop pads
    return jnp.transpose(logits, (0, 2, 1))                        # (B, nclass, N)


if __name__ == "__main__":
    B, N = 2, 256
    class_nums, category_nums = 8, 16

    key = jax.random.PRNGKey(0)
    k_param, k_x, k_lab = jax.random.split(key, 3)

    params = make_params(k_param, class_nums, category_nums)

    x = jax.random.normal(k_x, (B, 3, N), dtype=jnp.float32)        # NCW, like torch
    labels = jax.random.randint(k_lab, (B,), 0, category_nums)      # (B,)
    position = jnp.transpose(x, (0, 2, 1))                          # (B, N, 3)

    out = splatnet_forward(params, x, labels, position, pos_lambda=64.0)
    out = jax.block_until_ready(out)

    assert out.shape == (B, class_nums, N), out.shape
    assert bool(jnp.all(jnp.isfinite(out)))
    print("KERNEL_OK")
</pallas_src>

<mosaic_0001>
module attributes {stable_mosaic.version = 11 : i64} {
  func.func @_lattice_kernel_fused_in(%arg0: i32, %arg1: i32, %arg2: i32, %arg3: memref<1x256x8xf32, #tpu.memory_space<vmem>>, %arg4: memref<1x256x8xf32, #tpu.memory_space<vmem>>, %arg5: memref<1x8x256xf32, #tpu.memory_space<vmem>>, %arg6: memref<8x33xf32, #tpu.memory_space<vmem>>, %arg7: memref<1x33xf32, #tpu.memory_space<vmem>>, %arg8: memref<32x65xbf16, #tpu.memory_space<vmem>>, %arg9: memref<1x65xf32, #tpu.memory_space<vmem>>, %arg10: memref<1x256x65xbf16, #tpu.memory_space<vmem>>, %arg11: memref<256x33xf32, #tpu.memory_space<vmem>>) attributes {dimension_semantics = [#tpu.dimension_semantics<parallel>, #tpu.dimension_semantics<parallel>, #tpu.dimension_semantics<arbitrary>], iteration_bounds = array<i64: 2, 1, 1>, scalar_prefetch = 0 : i64, scratch_operands = 1 : i64, tpu.core_type = #tpu.core_type<tc>, window_params = [{transform_indices = @transform_0, window_bounds = array<i64: 1, 256, 8>}, {transform_indices = @transform_1, window_bounds = array<i64: 1, 256, 8>}, {transform_indices = @transform_2, window_bounds = array<i64: 1, 8, 256>}, {pipeline_mode = #tpu.pipeline_mode<synchronous>, transform_indices = @transform_3, window_bounds = array<i64: 8, 33>}, {pipeline_mode = #tpu.pipeline_mode<synchronous>, transform_indices = @transform_4, window_bounds = array<i64: 1, 33>}, {pipeline_mode = #tpu.pipeline_mode<synchronous>, transform_indices = @transform_5, window_bounds = array<i64: 32, 65>}, {pipeline_mode = #tpu.pipeline_mode<synchronous>, transform_indices = @transform_6, window_bounds = array<i64: 1, 65>}, {transform_indices = @transform_7, window_bounds = array<i64: 1, 256, 65>}]} {
    %c0_i32 = arith.constant 0 : i32
    %0 = arith.cmpi eq, %arg2, %c0_i32 : i32
    %1 = arith.extui %0 : i1 to i32
    %c0_i32_0 = arith.constant 0 : i32
    %2 = arith.cmpi ne, %1, %c0_i32_0 : i32
    scf.if %2 {
      %cst_25 = arith.constant 0.000000e+00 : f32
      %57 = vector.broadcast %cst_25 : f32 to vector<256x33xf32>
      %c0_26 = arith.constant 0 : index
      %c0_27 = arith.constant 0 : index
      %58 = vector.load %arg11[%c0_26, %c0_27] : memref<256x33xf32, #tpu.memory_space<vmem>>, vector<256x33xf32>
      tpu.vector_store %arg11[%c0_26, %c0_27], %57 {strides = array<i32>} : memref<256x33xf32, #tpu.memory_space<vmem>>, vector<256x33xf32>,
    } else {
    }
    %c0 = arith.constant 0 : index
    %c0_1 = arith.constant 0 : index
    %c0_2 = arith.constant 0 : index
    %3 = vector.load %arg3[%c0, %c0_1, %c0_2] : memref<1x256x8xf32, #tpu.memory_space<vmem>>, vector<1x256x8xf32>
    %4 = vector.shape_cast %3 : vector<1x256x8xf32> to vector<256x8xf32>
    %c0_3 = arith.constant 0 : index
    %c0_4 = arith.constant 0 : index
    %5 = vector.load %arg6[%c0_3, %c0_4] : memref<8x33xf32, #tpu.memory_space<vmem>>, vector<8x33xf32>
    %cst = arith.constant dense<0.000000e+00> : vector<256x33xf32>
    %6 = tpu.matmul %4, %5, %cst {dimension_numbers = #tpu.dot_dimension_numbers<[1], [0], [0], [1], [0, 0, 1, 1], [], []>} : vector<256x8xf32>, vector<8x33xf32>, vector<256x33xf32> -> vector<256x33xf32>
    %c0_5 = arith.constant 0 : index
    %c0_6 = arith.constant 0 : index
    %7 = vector.load %arg7[%c0_5, %c0_6] : memref<1x33xf32, #tpu.memory_space<vmem>>, vector<1x33xf32>
    %8 = vector.broadcast %7 : vector<1x33xf32> to vector<256x33xf32>
    %9 = arith.addf %6, %8 : vector<256x33xf32>
    %cst_7 = arith.constant 0.000000e+00 : f32
    %10 = vector.broadcast %cst_7 : f32 to vector<256x33xf32>
    %11 = arith.maximumf %9, %10 : vector<256x33xf32>
    %12 = arith.truncf %11 : vector<256x33xf32> to vector<256x33xbf16>
    %c0_8 = arith.constant 0 : index
    %c0_9 = arith.constant 0 : index
    %c0_10 = arith.constant 0 : index
    %13 = vector.load %arg4[%c0_8, %c0_9, %c0_10] : memref<1x256x8xf32, #tpu.memory_space<vmem>>, vector<1x256x8xf32>
    %14 = vector.shape_cast %13 : vector<1x256x8xf32> to vector<256x8xf32>
    %c0_11 = arith.constant 0 : index
    %c0_12 = arith.constant 0 : index
    %c0_13 = arith.constant 0 : index
    %15 = vector.load %arg5[%c0_11, %c0_12, %c0_13] : memref<1x8x256xf32, #tpu.memory_space<vmem>>, vector<1x8x256xf32>
    %16 = vector.shape_cast %15 : vector<1x8x256xf32> to vector<8x256xf32>
    %17 = arith.truncf %14 : vector<256x8xf32> to vector<256x8xbf16>
    %18 = arith.truncf %16 : vector<8x256xf32> to vector<8x256xbf16>
    %19 = arith.extf %17 : vector<256x8xbf16> to vector<256x8xf32>
    %20 = arith.extf %18 : vector<8x256xbf16> to vector<8x256xf32>
    %21 = vector.extract_strided_slice %19 {offsets = [0, 0], sizes = [256, 1], strides = [1, 1]} : vector<256x8xf32> to vector<256x1xf32>
    %22 = arith.mulf %21, %21 : vector<256x1xf32>
    %23 = vector.extract_strided_slice %19 {offsets = [0, 1], sizes = [256, 1], strides = [1, 1]} : vector<256x8xf32> to vector<256x1xf32>
    %24 = arith.mulf %23, %23 : vector<256x1xf32>
    %25 = arith.addf %22, %24 : vector<256x1xf32>
    %26 = vector.extract_strided_slice %19 {offsets = [0, 2], sizes = [256, 1], strides = [1, 1]} : vector<256x8xf32> to vector<256x1xf32>
    %27 = arith.mulf %26, %26 : vector<256x1xf32>
    %28 = arith.addf %25, %27 : vector<256x1xf32>
    %29 = vector.extract_strided_slice %20 {offsets = [0, 0], sizes = [1, 256], strides = [1, 1]} : vector<8x256xf32> to vector<1x256xf32>
    %30 = arith.mulf %29, %29 : vector<1x256xf32>
    %31 = vector.extract_strided_slice %20 {offsets = [1, 0], sizes = [1, 256], strides = [1, 1]} : vector<8x256xf32> to vector<1x256xf32>
    %32 = arith.mulf %31, %31 : vector<1x256xf32>
    %33 = arith.addf %30, %32 : vector<1x256xf32>
    %34 = vector.extract_strided_slice %20 {offsets = [2, 0], sizes = [1, 256], strides = [1, 1]} : vector<8x256xf32> to vector<1x256xf32>
    %35 = arith.mulf %34, %34 : vector<1x256xf32>
    %36 = arith.addf %33, %35 : vector<1x256xf32>
    %cst_14 = arith.constant dense<0.000000e+00> : vector<256x256xf32>
    %37 = tpu.matmul %17, %18, %cst_14 {dimension_numbers = #tpu.dot_dimension_numbers<[1], [0], [0], [1], [0, 0, 1, 1], [], []>} : vector<256x8xbf16>, vector<8x256xbf16>, vector<256x256xf32> -> vector<256x256xf32>
    %38 = vector.broadcast %28 : vector<256x1xf32> to vector<256x256xf32>
    %39 = vector.broadcast %36 : vector<1x256xf32> to vector<256x256xf32>
    %40 = arith.addf %38, %39 : vector<256x256xf32>
    %cst_15 = arith.constant 2.000000e+00 : f32
    %41 = vector.broadcast %cst_15 : f32 to vector<256x256xf32>
    %42 = arith.mulf %41, %37 : vector<256x256xf32>
    %43 = arith.subf %40, %42 : vector<256x256xf32>
    %cst_16 = arith.constant 0.000000e+00 : f32
    %44 = vector.broadcast %cst_16 : f32 to vector<256x256xf32>
    %45 = arith.maximumf %43, %44 : vector<256x256xf32>
    %cst_17 = arith.constant -2.048000e+03 : f32
    %46 = vector.broadcast %cst_17 : f32 to vector<256x256xf32>
    %47 = arith.mulf %46, %45 : vector<256x256xf32>
    %48 = math.exp %47 : vector<256x256xf32>
    %49 = arith.truncf %48 : vector<256x256xf32> to vector<256x256xbf16>
    %c0_18 = arith.constant 0 : index
    %c0_19 = arith.constant 0 : index
    %50 = vector.load %arg11[%c0_18, %c0_19] : memref<256x33xf32, #tpu.memory_space<vmem>>, vector<256x33xf32>
    %cst_20 = arith.constant dense<0.000000e+00> : vector<256x33xf32>
    %51 = tpu.matmul %49, %12, %cst_20 {dimension_numbers = #tpu.dot_dimension_numbers<[1], [0], [0], [1], [0, 0, 1, 1], [], []>} : vector<256x256xbf16>, vector<256x33xbf16>, vector<256x33xf32> -> vector<256x33xf32>
    %52 = arith.addf %50, %51 : vector<256x33xf32>
    %c0_21 = arith.constant 0 : index
    %c0_22 = arith.constant 0 : index
    %53 = vector.load %arg11[%c0_21, %c0_22] : memref<256x33xf32, #tpu.memory_space<vmem>>, vector<256x33xf32>
    tpu.vector_store %arg11[%c0_21, %c0_22], %52 {strides = array<i32>} : memref<256x33xf32, #tpu.memory_space<vmem>>, vector<256x33xf32>,
    %c0_i32_23 = arith.constant 0 : i32
    %54 = arith.cmpi eq, %arg2, %c0_i32_23 : i32
    %55 = arith.extui %54 : i1 to i32
    %c0_i32_24 = arith.constant 0 : i32
    %56 = arith.cmpi ne, %55, %c0_i32_24 : i32
    scf.if %56 {
      %c0_25 = arith.constant 0 : index
      %c0_26 = arith.constant 0 : index
      %57 = vector.load %arg11[%c0_25, %c0_26] : memref<256x33xf32, #tpu.memory_space<vmem>>, vector<256x33xf32>
      %58 = vector.extract_strided_slice %57 {offsets = [0, 32], sizes = [256, 1], strides = [1, 1]} : vector<256x33xf32> to vector<256x1xf32>
      %59 = tpu.reciprocal %58 {approx = true} : vector<256x1xf32> -> vector<256x1xf32>
      %60 = vector.extract_strided_slice %57 {offsets = [0, 0], sizes = [256, 32], strides = [1, 1]} : vector<256x33xf32> to vector<256x32xf32>
      %61 = vector.broadcast %59 : vector<256x1xf32> to vector<256x32xf32>
      %62 = arith.mulf %60, %61 : vector<256x32xf32>
      %63 = arith.truncf %62 : vector<256x32xf32> to vector<256x32xbf16>
      %c0_27 = arith.constant 0 : index
      %c0_28 = arith.constant 0 : index
      %64 = vector.load %arg8[%c0_27, %c0_28] : memref<32x65xbf16, #tpu.memory_space<vmem>>, vector<32x65xbf16>
      %cst_29 = arith.constant dense<0.000000e+00> : vector<256x65xf32>
      %65 = tpu.matmul %63, %64, %cst_29 {dimension_numbers = #tpu.dot_dimension_numbers<[1], [0], [0], [1], [0, 0, 1, 1], [], []>} : vector<256x32xbf16>, vector<32x65xbf16>, vector<256x65xf32> -> vector<256x65xf32>
      %c0_30 = arith.constant 0 : index
      %c0_31 = arith.constant 0 : index
      %66 = vector.load %arg9[%c0_30, %c0_31] : memref<1x65xf32, #tpu.memory_space<vmem>>, vector<1x65xf32>
      %67 = vector.broadcast %66 : vector<1x65xf32> to vector<256x65xf32>
      %68 = arith.addf %65, %67 : vector<256x65xf32>
      %cst_32 = arith.constant 0.000000e+00 : f32
      %69 = vector.broadcast %cst_32 : f32 to vector<256x65xf32>
      %70 = arith.maximumf %68, %69 : vector<256x65xf32>
      %71 = arith.truncf %70 : vector<256x65xf32> to vector<256x65xbf16>
      %c0_33 = arith.constant 0 : index
      %c0_34 = arith.constant 0 : index
      %c0_35 = arith.constant 0 : index
      %72 = vector.load %arg10[%c0_33, %c0_34, %c0_35] : memref<1x256x65xbf16, #tpu.memory_space<vmem>>, vector<1x256x65xbf16>
      %73 = vector.shape_cast %72 : vector<1x256x65xbf16> to vector<256x65xbf16>
      %74 = vector.shape_cast %71 : vector<256x65xbf16> to vector<1x256x65xbf16>
      tpu.vector_store %arg10[%c0_33, %c0_34, %c0_35], %74 {strides = array<i32>} : memref<1x256x65xbf16, #tpu.memory_space<vmem>>, vector<1x256x65xbf16>,
    } else {
    }
    return
  }
  func.func @transform_0(%arg0: i32, %arg1: i32, %arg2: i32) -> (i32, i32, i32) {
    %c0_i32 = arith.constant 0 : i32
    %c0_i32_0 = arith.constant 0 : i32
    return %arg0, %arg2, %c0_i32 : i32, i32, i32
  }
  func.func @transform_1(%arg0: i32, %arg1: i32, %arg2: i32) -> (i32, i32, i32) {
    %c0_i32 = arith.constant 0 : i32
    %c0_i32_0 = arith.constant 0 : i32
    return %arg0, %arg1, %c0_i32 : i32, i32, i32
  }
  func.func @transform_2(%arg0: i32, %arg1: i32, %arg2: i32) -> (i32, i32, i32) {
    %c0_i32 = arith.constant 0 : i32
    %c0_i32_0 = arith.constant 0 : i32
    return %arg0, %c0_i32, %arg2 : i32, i32, i32
  }
  func.func @transform_3(%arg0: i32, %arg1: i32, %arg2: i32) -> (i32, i32) {
    %c0_i32 = arith.constant 0 : i32
    %c0_i32_0 = arith.constant 0 : i32
    %c0_i32_1 = arith.constant 0 : i32
    return %c0_i32, %c0_i32_0 : i32, i32
  }
  func.func @transform_4(%arg0: i32, %arg1: i32, %arg2: i32) -> (i32, i32) {
    %c0_i32 = arith.constant 0 : i32
    %c0_i32_0 = arith.constant 0 : i32
    %c0_i32_1 = arith.constant 0 : i32
    return %c0_i32, %c0_i32_0 : i32, i32
  }
  func.func @transform_5(%arg0: i32, %arg1: i32, %arg2: i32) -> (i32, i32) {
    %c0_i32 = arith.constant 0 : i32
    %c0_i32_0 = arith.constant 0 : i32
    %c0_i32_1 = arith.constant 0 : i32
    return %c0_i32, %c0_i32_0 : i32, i32
  }
  func.func @transform_6(%arg0: i32, %arg1: i32, %arg2: i32) -> (i32, i32) {
    %c0_i32 = arith.constant 0 : i32
    %c0_i32_0 = arith.constant 0 : i32
    %c0_i32_1 = arith.constant 0 : i32
    return %c0_i32, %c0_i32_0 : i32, i32
  }
  func.func @transform_7(%arg0: i32, %arg1: i32, %arg2: i32) -> (i32, i32, i32) {
    %c0_i32 = arith.constant 0 : i32
    %c0_i32_0 = arith.constant 0 : i32
    return %arg0, %arg1, %c0_i32 : i32, i32, i32
  }
}

</mosaic_0001>

<llo_original>
// kernel: tpu_custom_call.1
$region0: #{tpu_custom_call.1}
  #allocation0 [shape = 'u32[]', space=smem, size = 0x4, offset = 0x4, fixed_abs, tag = 'smem constant byte address 0x4 - core index']
  #allocation1 [shape = 'u32[144,128]{1,0:T(1,128)}', space=vmem, size = 0x12000, scoped, tag = 'internal scratch']
  #allocation2 [shape = 'f32[256,33]{1,0:T(8,128)}', space=vmem, size = 0x20000, scoped, tag = 'scratch operand']
  %s0 = inlined_call_operand.vmem [shape: f32[2,256,8], index: 0, kind: input, shape index: {}]
  %s1 = inlined_call_operand.vmem [shape: f32[2,256,8], index: 1, kind: input, shape index: {}]
  %s2 = inlined_call_operand.vmem [shape: f32[2,8,256], index: 2, kind: input, shape index: {}]
  %s3 = inlined_call_operand.vmem [shape: f32[8,33], index: 3, kind: input, shape index: {}]
  %s4 = inlined_call_operand.vmem [shape: f32[1,33], index: 4, kind: input, shape index: {}]
  %s5 = inlined_call_operand.vmem [shape: bf16[32,65], index: 5, kind: input, shape index: {}]
  %s6 = inlined_call_operand.vmem [shape: f32[1,65], index: 6, kind: input, shape index: {}]
  %s7 = inlined_call_operand.vmem [shape: bf16[2,256,65], index: 7, kind: output, shape index: {}]
  %s8 = sld [smem:[#allocation0]]
  $region69: #{tpu_custom_call.1} parent=0
    _
  %s10 = ssub.s32 1, %s8
  %s11 = scalar_select 0, %s10, %s8
  loop: start=0, step=1, limit=4
  $region2: #{tpu_custom_call.1} parent=0 // loop_pre_header
    _
  $region3: #{tpu_custom_call.1} parent=0 // loop_header
    %s13 = sphi 0, %s17
    %p14 = scmp.ge.s32.totalorder %s13, 4
    %s20 = sphi 0, %s39
    %s21 = sphi 0, %s35
    %s22 = sphi 0, %s31
    %s23 = sphi 0, %s20
    %s24 = sphi 0, %s21
    %s25 = sphi 0, %s22
    %s26 = sphi 0, %s23
    %s27 = sphi 0, %s24
    %s28 = sphi 0, %s25
    %s44 = sphi 0, %s46
    %s47 = sphi 0, %s44
    %s48 = sphi 0, %s47
    %s64 = sphi 0, %s48
    %s72 = sphi 0, %s74
    %s75 = sphi 0, %s72
    %s76 = sphi 0, %s75
    %s92 = sphi 0, %s76
    %s100 = sphi 0, %s102
    %s103 = sphi 0, %s100
    %s104 = sphi 0, %s103
    %s120 = sphi 0, %s104
    %s124 = sphi 0, %s124
    %s126 = sphi 0, %s124
    %s127 = sphi 0, %s126
    %s141 = sphi 0, %s127
    %s145 = sphi 0, %s145
    %s147 = sphi 0, %s145
    %s148 = sphi 0, %s147
    %s162 = sphi 0, %s148
    %s166 = sphi 0, %s166
    %s168 = sphi 0, %s166
    %s169 = sphi 0, %s168
    %s183 = sphi 0, %s169
    %s187 = sphi 0, %s187
    %s189 = sphi 0, %s187
    %s190 = sphi 0, %s189
    %s204 = sphi 0, %s190
    %s212 = sphi 0, %s214
    %s215 = sphi 0, %s212
    %s216 = sphi 0, %s215
    %s232 = sphi 0, %s216
  $region4: #{tpu_custom_call.1} parent=0 // loop_header_branch
    %16 = sbr.rel (%p14) target = $region8
  $region5: #{tpu_custom_call.1} parent=0 // loop_body
    %s18 = ssub.s32 %s13, 1
    %s19 = ssub.s32 %s13, 2
    %s29 = sadd.s32 1, %s22
    %p30 = scmp.ge.s32.totalorder %s29, 1
    %s31 = scalar_select %p30, 0, %s29
    %s32 = sadd.s32 1, %s21
    %s33 = scalar_select %p30, %s32, %s21
    %p34 = scmp.ge.s32.totalorder %s33, 1
    %s35 = scalar_select %p34, 0, %s33
    %s36 = sadd.s32 1, %s20
    %s37 = scalar_select %p34, %s36, %s20
    %p38 = scmp.ge.s32.totalorder %s37, 2
    %s39 = scalar_select %p38, 0, %s37
    %s40 = ssub.s32 %s20, %s39
    %s41 = ssub.s32 %s22, %s31
    %s42 = sor.u32 %s40, %s41
    %p43 = scmp.eq.s32.totalorder %s42, 0
    %s45 = sadd.s32 %s44, 1
    %s46 = scalar_select %p43, %s44, %s45
    %p49 = pneg %p43
    %p50 = scmp.eq.s32.totalorder %s13, 1
    %p51 = por %p49, %p50
    %p52 = scmp.ne.s32.totalorder %s44, %s47
    %p53 = scmp.eq.s32.totalorder %s13, 0
    %p54 = por %p52, %p53
    %p55 = scmp.ne.s32.totalorder %s44, %s47
    %p56 = scmp.eq.s32.totalorder %s18, 1
    %p57 = por %p55, %p56
    %p58 = scmp.ne.s32.totalorder %s47, %s48
    %p59 = scmp.eq.s32.totalorder %s18, 0
    %p60 = por %p58, %p59
    %p61 = scmp.ne.s32.totalorder %s47, %s48
    %p62 = scmp.eq.s32.totalorder %s19, 1
    %p63 = por %p61, %p62
    %p65 = scmp.ne.s32.totalorder %s48, %s64
    %p66 = scmp.eq.s32.totalorder %s19, 0
    %p67 = por %p65, %p66
    %s68 = ssub.s32 %s20, %s39
    %s69 = ssub.s32 %s21, %s35
    %s70 = sor.u32 %s68, %s69
    %p71 = scmp.eq.s32.totalorder %s70, 0
    %s73 = sadd.s32 %s72, 1
    %s74 = scalar_select %p71, %s72, %s73
    %p77 = pneg %p71
    %p78 = scmp.eq.s32.totalorder %s13, 1
    %p79 = por %p77, %p78
    %p80 = scmp.ne.s32.totalorder %s72, %s75
    %p81 = scmp.eq.s32.totalorder %s13, 0
    %p82 = por %p80, %p81
    %p83 = scmp.ne.s32.totalorder %s72, %s75
    %p84 = scmp.eq.s32.totalorder %s18, 1
    %p85 = por %p83, %p84
    %p86 = scmp.ne.s32.totalorder %s75, %s76
    %p87 = scmp.eq.s32.totalorder %s18, 0
    %p88 = por %p86, %p87
    %p89 = scmp.ne.s32.totalorder %s75, %s76
    %p90 = scmp.eq.s32.totalorder %s19, 1
    %p91 = por %p89, %p90
    %p93 = scmp.ne.s32.totalorder %s76, %s92
    %p94 = scmp.eq.s32.totalorder %s19, 0
    %p95 = por %p93, %p94
    %s96 = ssub.s32 %s20, %s39
    %s97 = ssub.s32 %s22, %s31
    %s98 = sor.u32 %s96, %s97
    %p99 = scmp.eq.s32.totalorder %s98, 0
    %s101 = sadd.s32 %s100, 1
    %s102 = scalar_select %p99, %s100, %s101
    %p105 = pneg %p99
    %p106 = scmp.eq.s32.totalorder %s13, 1
    %p107 = por %p105, %p106
    %p108 = scmp.ne.s32.totalorder %s100, %s103
    %p109 = scmp.eq.s32.totalorder %s13, 0
    %p110 = por %p108, %p109
    %p111 = scmp.ne.s32.totalorder %s100, %s103
    %p112 = scmp.eq.s32.totalorder %s18, 1
    %p113 = por %p111, %p112
    %p114 = scmp.ne.s32.totalorder %s103, %s104
    %p115 = scmp.eq.s32.totalorder %s18, 0
    %p116 = por %p114, %p115
    %p117 = scmp.ne.s32.totalorder %s103, %s104
    %p118 = scmp.eq.s32.totalorder %s19, 1
    %p119 = por %p117, %p118
    %p121 = scmp.ne.s32.totalorder %s104, %s120
    %p122 = scmp.eq.s32.totalorder %s19, 0
    %p123 = por %p121, %p122
    %s125 = sadd.s32 %s124, 1
    %p128 = scmp.eq.s32.totalorder %s13, 1
    %p129 = scmp.ne.s32.totalorder %s124, %s126
    %p130 = scmp.eq.s32.totalorder %s13, 0
    %p131 = por %p129, %p130
    %p132 = scmp.ne.s32.totalorder %s124, %s126
    %p133 = scmp.eq.s32.totalorder %s18, 1
    %p134 = por %p132, %p133
    %p135 = scmp.ne.s32.totalorder %s126, %s127
    %p136 = scmp.eq.s32.totalorder %s18, 0
    %p137 = por %p135, %p136
    %p138 = scmp.ne.s32.totalorder %s126, %s127
    %p139 = scmp.eq.s32.totalorder %s19, 1
    %p140 = por %p138, %p139
    %p142 = scmp.ne.s32.totalorder %s127, %s141
    %p143 = scmp.eq.s32.totalorder %s19, 0
    %p144 = por %p142, %p143
    %s146 = sadd.s32 %s145, 1
    %p149 = scmp.eq.s32.totalorder %s13, 1
    %p150 = scmp.ne.s32.totalorder %s145, %s147
    %p151 = scmp.eq.s32.totalorder %s13, 0
    %p152 = por %p150, %p151
    %p153 = scmp.ne.s32.totalorder %s145, %s147
    %p154 = scmp.eq.s32.totalorder %s18, 1
    %p155 = por %p153, %p154
    %p156 = scmp.ne.s32.totalorder %s147, %s148
    %p157 = scmp.eq.s32.totalorder %s18, 0
    %p158 = por %p156, %p157
    %p159 = scmp.ne.s32.totalorder %s147, %s148
    %p160 = scmp.eq.s32.totalorder %s19, 1
    %p161 = por %p159, %p160
    %p163 = scmp.ne.s32.totalorder %s148, %s162
    %p164 = scmp.eq.s32.totalorder %s19, 0
    %p165 = por %p163, %p164
    %s167 = sadd.s32 %s166, 1
    %p170 = scmp.eq.s32.totalorder %s13, 1
    %p171 = scmp.ne.s32.totalorder %s166, %s168
    %p172 = scmp.eq.s32.totalorder %s13, 0
    %p173 = por %p171, %p172
    %p174 = scmp.ne.s32.totalorder %s166, %s168
    %p175 = scmp.eq.s32.totalorder %s18, 1
    %p176 = por %p174, %p175
    %p177 = scmp.ne.s32.totalorder %s168, %s169
    %p178 = scmp.eq.s32.totalorder %s18, 0
    %p179 = por %p177, %p178
    %p180 = scmp.ne.s32.totalorder %s168, %s169
    %p181 = scmp.eq.s32.totalorder %s19, 1
    %p182 = por %p180, %p181
    %p184 = scmp.ne.s32.totalorder %s169, %s183
    %p185 = scmp.eq.s32.totalorder %s19, 0
    %p186 = por %p184, %p185
    %s188 = sadd.s32 %s187, 1
    %p191 = scmp.eq.s32.totalorder %s13, 1
    %p192 = scmp.ne.s32.totalorder %s187, %s189
    %p193 = scmp.eq.s32.totalorder %s13, 0
    %p194 = por %p192, %p193
    %p195 = scmp.ne.s32.totalorder %s187, %s189
    %p196 = scmp.eq.s32.totalorder %s18, 1
    %p197 = por %p195, %p196
    %p198 = scmp.ne.s32.totalorder %s189, %s190
    %p199 = scmp.eq.s32.totalorder %s18, 0
    %p200 = por %p198, %p199
    %p201 = scmp.ne.s32.totalorder %s189, %s190
    %p202 = scmp.eq.s32.totalorder %s19, 1
    %p203 = por %p201, %p202
    %p205 = scmp.ne.s32.totalorder %s190, %s204
    %p206 = scmp.eq.s32.totalorder %s19, 0
    %p207 = por %p205, %p206
    %s208 = ssub.s32 %s20, %s39
    %s209 = ssub.s32 %s21, %s35
    %s210 = sor.u32 %s208, %s209
    %p211 = scmp.eq.s32.totalorder %s210, 0
    %s213 = sadd.s32 %s212, 1
    %s214 = scalar_select %p211, %s212, %s213
    %p217 = pneg %p211
    %p218 = scmp.eq.s32.totalorder %s13, 1
    %p219 = por %p217, %p218
    %p220 = scmp.ne.s32.totalorder %s212, %s215
    %p221 = scmp.eq.s32.totalorder %s13, 0
    %p222 = por %p220, %p221
    %p223 = scmp.ne.s32.totalorder %s212, %s215
    %p224 = scmp.eq.s32.totalorder %s18, 1
    %p225 = por %p223, %p224
    %p226 = scmp.ne.s32.totalorder %s215, %s216
    %p227 = scmp.eq.s32.totalorder %s18, 0
    %p228 = por %p226, %p227
    %p229 = scmp.ne.s32.totalorder %s215, %s216
    %p230 = scmp.eq.s32.totalorder %s19, 1
    %p231 = por %p229, %p230
    %p233 = scmp.ne.s32.totalorder %s216, %s232
    %p234 = scmp.eq.s32.totalorder %s19, 0
    %p235 = por %p233, %p234
    %p236 = scmp.le.s32.totalorder 1, %s13
    %p237 = scmp.lt.s32.totalorder %s13, 3
    %p238 = pnand %p236, %p237
    %p239 = pneg %p238
    // Predicated region
    $region9: #{tpu_custom_call.1} parent=5 // pred_check
      _
    $region10: #{tpu_custom_call.1} parent=5 // pred_check_branch
      %241 = sbr.rel (%p238) target = $region12
    $region11: #{tpu_custom_call.1} parent=5 // pred_region
      %s242 = ssub.s32 %s13, 1
      // Predicated region
      $region13: #{tpu_custom_call.1} parent=11 // pred_check
        %p243 = pneg %p137
      $region14: #{tpu_custom_call.1} parent=11 // pred_check_branch
        %245 = sbr.rel (%p243) target = $region16
      $region15: #{tpu_custom_call.1} parent=11 // pred_region
        _
      $region16: #{tpu_custom_call.1} parent=11 // pred_fallthru
        _
      // Predicated region
      $region17: #{tpu_custom_call.1} parent=11 // pred_check
        %p246 = pneg %p158
      $region18: #{tpu_custom_call.1} parent=11 // pred_check_branch
        %248 = sbr.rel (%p246) target = $region20
      $region19: #{tpu_custom_call.1} parent=11 // pred_region
        _
      $region20: #{tpu_custom_call.1} parent=11 // pred_fallthru
        _
      // Predicated region
      $region21: #{tpu_custom_call.1} parent=11 // pred_check
        %p249 = pneg %p179
      $region22: #{tpu_custom_call.1} parent=11 // pred_check_branch
        %251 = sbr.rel (%p249) target = $region24
      $region23: #{tpu_custom_call.1} parent=11 // pred_region
        _
      $region24: #{tpu_custom_call.1} parent=11 // pred_fallthru
        _
      // Predicated region
      $region25: #{tpu_custom_call.1} parent=11 // pred_check
        %p252 = pneg %p200
      $region26: #{tpu_custom_call.1} parent=11 // pred_check_branch
        %254 = sbr.rel (%p252) target = $region28
      $region27: #{tpu_custom_call.1} parent=11 // pred_region
        _
      $region28: #{tpu_custom_call.1} parent=11 // pred_fallthru
        _
    $region12: #{tpu_custom_call.1} parent=5 // pred_fallthru
      _
    %p255 = scmp.lt.s32.totalorder %s13, 2
    // Predicated region
    $region29: #{tpu_custom_call.1} parent=5 // pred_check
      %p256 = pneg %p255
    $region30: #{tpu_custom_call.1} parent=5 // pred_check_branch
      %258 = sbr.rel (%p256) target = $region32
    $region31: #{tpu_custom_call.1} parent=5 // pred_region
      // Predicated region
      $region33: #{tpu_custom_call.1} parent=31 // pred_check
        %p259 = pneg %p54
      $region34: #{tpu_custom_call.1} parent=31 // pred_check_branch
        %261 = sbr.rel (%p259) target = $region36
      $region35: #{tpu_custom_call.1} parent=31 // pred_region
        %s262 = smul.u32 32, %s22
        %p263 = scmp.lt.s32.totalorder %s20, 1
        %s264 = scalar_select %p263, %s20, 1
        %p265 = scmp.lt.s32.totalorder %s262, 31
        %s266 = scalar_select %p265, %s262, 31
        %s267 = smul.addr %s264, 32
        %s268 = sadd.s32 %s266, %s267
        %s269 = smul.addr %s268, 8
        %s270 = scalar_lea.vmem %s0, %s269
        %s271 = smul.u32 32, %s22
      $region36: #{tpu_custom_call.1} parent=31 // pred_fallthru
        _
      // Predicated region
      $region37: #{tpu_custom_call.1} parent=31 // pred_check
        %p272 = pneg %p82
      $region38: #{tpu_custom_call.1} parent=31 // pred_check_branch
        %274 = sbr.rel (%p272) target = $region40
      $region39: #{tpu_custom_call.1} parent=31 // pred_region
        %s275 = smul.u32 32, %s21
        %p276 = scmp.lt.s32.totalorder %s20, 1
        %s277 = scalar_select %p276, %s20, 1
        %p278 = scmp.lt.s32.totalorder %s275, 31
        %s279 = scalar_select %p278, %s275, 31
        %s280 = smul.addr %s277, 32
        %s281 = sadd.s32 %s279, %s280
        %s282 = smul.addr %s281, 8
        %s283 = scalar_lea.vmem %s1, %s282
        %s284 = smul.u32 32, %s21
      $region40: #{tpu_custom_call.1} parent=31 // pred_fallthru
        _
      // Predicated region
      $region41: #{tpu_custom_call.1} parent=31 // pred_check
        %p285 = pneg %p110
      $region42: #{tpu_custom_call.1} parent=31 // pred_check_branch
        %287 = sbr.rel (%p285) target = $region44
      $region43: #{tpu_custom_call.1} parent=31 // pred_region
        %s288 = smul.u32 2, %s22
        %p289 = scmp.lt.s32.totalorder %s20, 1
        %s290 = scalar_select %p289, %s20, 1
        %p291 = scmp.lt.s32.totalorder %s288, 1
        %s292 = scalar_select %p291, %s288, 1
        %s293 = smul.addr %s290, 2
        %s294 = sadd.s32 %s292, %s293
        %s295 = smul.addr %s294, 8
        %s296 = scalar_lea.vmem %s2, %s295
        %s297 = smul.u32 2, %s22
      $region44: #{tpu_custom_call.1} parent=31 // pred_fallthru
        _
    $region32: #{tpu_custom_call.1} parent=5 // pred_fallthru
      _
    %p298 = scmp.le.s32.totalorder 1, %s13
    %p299 = scmp.lt.s32.totalorder %s13, 3
    %p300 = pnand %p298, %p299
    %p301 = pneg %p300
    // Predicated region
    $region45: #{tpu_custom_call.1} parent=5 // pred_check
      _
    $region46: #{tpu_custom_call.1} parent=5 // pred_check_branch
      %303 = sbr.rel (%p300) target = $region48
    $region47: #{tpu_custom_call.1} parent=5 // pred_region
      %s304 = ssub.s32 %s13, 1
      %s305 = smul.u32 32, %s25
      %p306 = scmp.lt.s32.totalorder %s23, 1
      %s307 = scalar_select %p306, %s23, 1
      %p308 = scmp.lt.s32.totalorder %s305, 31
      %s309 = scalar_select %p308, %s305, 31
      %s310 = smul.addr %s307, 32
      %s311 = sadd.s32 %s309, %s310
      %s312 = smul.addr %s311, 8
      %s313 = scalar_lea.vmem %s0, %s312
      %p314 = pneg %p60
      %p315 = pneg %p57
      %s316 = smul.u32 32, %s24
      %p317 = scmp.lt.s32.totalorder %s23, 1
      %s318 = scalar_select %p317, %s23, 1
      %p319 = scmp.lt.s32.totalorder %s316, 31
      %s320 = scalar_select %p319, %s316, 31
      %s321 = smul.addr %s318, 32
      %s322 = sadd.s32 %s320, %s321
      %s323 = smul.addr %s322, 8
      %s324 = scalar_lea.vmem %s1, %s323
      %p325 = pneg %p88
      %p326 = pneg %p85
      %s327 = smul.u32 2, %s25
      %p328 = scmp.lt.s32.totalorder %s23, 1
      %s329 = scalar_select %p328, %s23, 1
      %p330 = scmp.lt.s32.totalorder %s327, 1
      %s331 = scalar_select %p330, %s327, 1
      %s332 = smul.addr %s329, 2
      %s333 = sadd.s32 %s331, %s332
      %s334 = smul.addr %s333, 8
      %s335 = scalar_lea.vmem %s2, %s334
      %p336 = pneg %p116
      %p337 = pneg %p113
      %p338 = pneg %p137
      %p339 = pneg %p134
      %p340 = pneg %p158
      %p341 = pneg %p155
      %p342 = pneg %p179
      %p343 = pneg %p176
      %p344 = pneg %p200
      %p345 = pneg %p197
      %p346 = pneg %p228
      %p347 = pneg %p225
      %s348 = smul.u32 32, %s24
      %p349 = scmp.lt.s32.totalorder %s23, 1
      %s350 = scalar_select %p349, %s23, 1
      %p351 = scmp.lt.s32.totalorder %s348, 31
      %s352 = scalar_select %p351, %s348, 31
      %s353 = smul.addr %s350, 32
      %s354 = sadd.s32 %s352, %s353
      %s355 = smul.addr %s354, 4
      %s356 = scalar_lea.vmem %s7, %s355
      %s357 = smul.u32 32, %s25
      %p358 = scmp.lt.s32.totalorder %s23, 1
      %s359 = scalar_select %p358, %s23, 1
      %p360 = scmp.lt.s32.totalorder %s357, 31
      %s361 = scalar_select %p360, %s357, 31
      %s362 = smul.addr %s359, 32
      %s363 = sadd.s32 %s361, %s362
      %s364 = smul.addr %s363, 8
      %s365 = scalar_lea.vmem %s0, %s364
      %s366 = smul.u32 32, %s25
      %s367 = smul.u32 32, %s24
      %p368 = scmp.lt.s32.totalorder %s23, 1
      %s369 = scalar_select %p368, %s23, 1
      %p370 = scmp.lt.s32.totalorder %s367, 31
      %s371 = scalar_select %p370, %s367, 31
      %s372 = smul.addr %s369, 32
      %s373 = sadd.s32 %s371, %s372
      %s374 = smul.addr %s373, 8
      %s375 = scalar_lea.vmem %s1, %s374
      %s376 = smul.u32 32, %s24
      %s377 = smul.u32 2, %s25
      %p378 = scmp.lt.s32.totalorder %s23, 1
      %s379 = scalar_select %p378, %s23, 1
      %p380 = scmp.lt.s32.totalorder %s377, 1
      %s381 = scalar_select %p380, %s377, 1
      %s382 = smul.addr %s379, 2
      %s383 = sadd.s32 %s381, %s382
      %s384 = smul.addr %s383, 8
      %s385 = scalar_lea.vmem %s2, %s384
      %s386 = smul.u32 2, %s25
      %s387 = smul.u32 32, %s24
      %p388 = scmp.lt.s32.totalorder %s23, 1
      %s389 = scalar_select %p388, %s23, 1
      %p390 = scmp.lt.s32.totalorder %s387, 31
      %s391 = scalar_select %p390, %s387, 31
      %s392 = smul.addr %s389, 32
      %s393 = sadd.s32 %s391, %s392
      %s394 = smul.addr %s393, 4
      %s395 = scalar_lea.vmem %s7, %s394
      %s396 = smul.u32 32, %s24
      %p398 = scmp.eq.s32.totalorder %s25, 0
      // Predicated region
      $region49: #{tpu_custom_call.1} parent=47 // pred_check
        %p399 = pneg %p398
      $region50: #{tpu_custom_call.1} parent=47 // pred_check_branch
        %401 = sbr.rel (%p399) target = $region52
      $region51: #{tpu_custom_call.1} parent=47 // pred_region
        %vm402 = vcmask 269312
        %403 = vst.msk [vmem:[#allocation2] sm:$0xff] %vm402, 0.0
        %404 = vst.msk [vmem:[#allocation2 + $0x8] sm:$0xff] %vm402, 0.0
        %405 = vst.msk [vmem:[#allocation2 + $0x10] sm:$0xff] %vm402, 0.0
        %406 = vst.msk [vmem:[#allocation2 + $0x18] sm:$0xff] %vm402, 0.0
        %407 = vst.msk [vmem:[#allocation2 + $0x20] sm:$0xff] %vm402, 0.0
        %408 = vst.msk [vmem:[#allocation2 + $0x28] sm:$0xff] %vm402, 0.0
        %409 = vst.msk [vmem:[#allocation2 + $0x30] sm:$0xff] %vm402, 0.0
        %410 = vst.msk [vmem:[#allocation2 + $0x38] sm:$0xff] %vm402, 0.0
        %411 = vst.msk [vmem:[#allocation2 + $0x40] sm:$0xff] %vm402, 0.0
        %412 = vst.msk [vmem:[#allocation2 + $0x48] sm:$0xff] %vm402, 0.0
        %413 = vst.msk [vmem:[#allocation2 + $0x50] sm:$0xff] %vm402, 0.0
        %414 = vst.msk [vmem:[#allocation2 + $0x58] sm:$0xff] %vm402, 0.0
        %415 = vst.msk [vmem:[#allocation2 + $0x60] sm:$0xff] %vm402, 0.0
        %416 = vst.msk [vmem:[#allocation2 + $0x68] sm:$0xff] %vm402, 0.0
        %417 = vst.msk [vmem:[#allocation2 + $0x70] sm:$0xff] %vm402, 0.0
        %418 = vst.msk [vmem:[#allocation2 + $0x78] sm:$0xff] %vm402, 0.0
        %419 = vst.msk [vmem:[#allocation2 + $0x80] sm:$0xff] %vm402, 0.0
        %420 = vst.msk [vmem:[#allocation2 + $0x88] sm:$0xff] %vm402, 0.0
        %421 = vst.msk [vmem:[#allocation2 + $0x90] sm:$0xff] %vm402, 0.0
        %422 = vst.msk [vmem:[#allocation2 + $0x98] sm:$0xff] %vm402, 0.0
        %423 = vst.msk [vmem:[#allocation2 + $0xa0] sm:$0xff] %vm402, 0.0
        %424 = vst.msk [vmem:[#allocation2 + $0xa8] sm:$0xff] %vm402, 0.0
        %425 = vst.msk [vmem:[#allocation2 + $0xb0] sm:$0xff] %vm402, 0.0
        %426 = vst.msk [vmem:[#allocation2 + $0xb8] sm:$0xff] %vm402, 0.0
        %427 = vst.msk [vmem:[#allocation2 + $0xc0] sm:$0xff] %vm402, 0.0
        %428 = vst.msk [vmem:[#allocation2 + $0xc8] sm:$0xff] %vm402, 0.0
        %429 = vst.msk [vmem:[#allocation2 + $0xd0] sm:$0xff] %vm402, 0.0
        %430 = vst.msk [vmem:[#allocation2 + $0xd8] sm:$0xff] %vm402, 0.0
        %431 = vst.msk [vmem:[#allocation2 + $0xe0] sm:$0xff] %vm402, 0.0
        %432 = vst.msk [vmem:[#allocation2 + $0xe8] sm:$0xff] %vm402, 0.0
        %433 = vst.msk [vmem:[#allocation2 + $0xf0] sm:$0xff] %vm402, 0.0
        %434 = vst.msk [vmem:[#allocation2 + $0xf8] sm:$0xff] %vm402, 0.0
      $region52: #{tpu_custom_call.1} parent=47 // pred_fallthru
        _
      %v435 = vld [vmem:[%s365] sm:$0xff]
      %v436 = vld [vmem:[%s365 + $0x8] sm:$0xff]
      %v437 = vld [vmem:[%s365 + $0x10] sm:$0xff]
      %v438 = vld [vmem:[%s365 + $0x18] sm:$0xff]
      %v439 = vld [vmem:[%s365 + $0x20] sm:$0xff]
      %v440 = vld [vmem:[%s365 + $0x28] sm:$0xff]
      %v441 = vld [vmem:[%s365 + $0x30] sm:$0xff]
      %v442 = vld [vmem:[%s365 + $0x38] sm:$0xff]
      %v443 = vld [vmem:[%s365 + $0x40] sm:$0xff]
      %v444 = vld [vmem:[%s365 + $0x48] sm:$0xff]
      %v445 = vld [vmem:[%s365 + $0x50] sm:$0xff]
      %v446 = vld [vmem:[%s365 + $0x58] sm:$0xff]
      %v447 = vld [vmem:[%s365 + $0x60] sm:$0xff]
      %v448 = vld [vmem:[%s365 + $0x68] sm:$0xff]
      %v449 = vld [vmem:[%s365 + $0x70] sm:$0xff]
      %v450 = vld [vmem:[%s365 + $0x78] sm:$0xff]
      %v451 = vld [vmem:[%s365 + $0x80] sm:$0xff]
      %v452 = vld [vmem:[%s365 + $0x88] sm:$0xff]
      %v453 = vld [vmem:[%s365 + $0x90] sm:$0xff]
      %v454 = vld [vmem:[%s365 + $0x98] sm:$0xff]
      %v455 = vld [vmem:[%s365 + $0xa0] sm:$0xff]
      %v456 = vld [vmem:[%s365 + $0xa8] sm:$0xff]
      %v457 = vld [vmem:[%s365 + $0xb0] sm:$0xff]
      %v458 = vld [vmem:[%s365 + $0xb8] sm:$0xff]
      %v459 = vld [vmem:[%s365 + $0xc0] sm:$0xff]
      %v460 = vld [vmem:[%s365 + $0xc8] sm:$0xff]
      %v461 = vld [vmem:[%s365 + $0xd0] sm:$0xff]
      %v462 = vld [vmem:[%s365 + $0xd8] sm:$0xff]
      %v463 = vld [vmem:[%s365 + $0xe0] sm:$0xff]
      %v464 = vld [vmem:[%s365 + $0xe8] sm:$0xff]
      %v465 = vld [vmem:[%s365 + $0xf0] sm:$0xff]
      %v466 = vld [vmem:[%s365 + $0xf8] sm:$0xff]
      %v467 = vld [vmem:[%s3] sm:$0xff]
      %v468 = vld [vmem:[%s4] sm:$0x1]
      %v470 = vlaneseq
      %v471 = vshrl.u32 %v470, 7
      %v472 = vsub.s32 0, %v471
      %v473 = vrot.slane %v468, %v472
      %vm475 = vcmask 64512
      %v477 = vsel %vm475, %v435, 0
      %v480 = vsel %vm475, %v436, 0
      %v483 = vsel %vm475, %v437, 0
      %v486 = vsel %vm475, %v438, 0
      %v489 = vsel %vm475, %v439, 0
      %v492 = vsel %vm475, %v440, 0
      %v495 = vsel %vm475, %v441, 0
      %v498 = vsel %vm475, %v442, 0
      %v501 = vsel %vm475, %v443, 0
      %v504 = vsel %vm475, %v444, 0
      %v507 = vsel %vm475, %v445, 0
      %v510 = vsel %vm475, %v446, 0
      %v513 = vsel %vm475, %v447, 0
      %v516 = vsel %vm475, %v448, 0
      %v519 = vsel %vm475, %v449, 0
      %v522 = vsel %vm475, %v450, 0
      %v525 = vsel %vm475, %v451, 0
      %v528 = vsel %vm475, %v452, 0
      %v531 = vsel %vm475, %v453, 0
      %v534 = vsel %vm475, %v454, 0
      %v537 = vsel %vm475, %v455, 0
      %v540 = vsel %vm475, %v456, 0
      %v543 = vsel %vm475, %v457, 0
      %v546 = vsel %vm475, %v458, 0
      %v549 = vsel %vm475, %v459, 0
      %v552 = vsel %vm475, %v460, 0
      %v555 = vsel %vm475, %v461, 0
      %v558 = vsel %vm475, %v462, 0
      %v561 = vsel %vm475, %v463, 0
      %v564 = vsel %vm475, %v464, 0
      %v567 = vsel %vm475, %v465, 0
      %v570 = vsel %vm475, %v466, 0
      %572 = vmatprep.subr.mxu0 0.0
      %573 = vmatpush1.msra.mxu0 0.0
      %574 = vmatprep.subr.mxu0 0.0
      %575 = vmatpush1.msra.mxu0 0.0
      %576 = vmatprep.subr.mxu0 0.0
      %577 = vmatpush1.msra.mxu0 0.0
      %578 = vmatprep.subr.mxu0 0.0
      %579 = vmatpush1.msra.mxu0 0.0
      %580 = vmatprep.subr.mxu0 0.0
      %581 = vmatpush1.msra.mxu0 0.0
      %582 = vmatprep.subr.mxu0 0.0
      %583 = vmatpush1.msra.mxu0 0.0
      %584 = vmatprep.subr.mxu0 0.0
      %585 = vmatpush1.msra.mxu0 0.0
      %586 = vmatprep.subr.mxu0 0.0
      %587 = vmatpush1.msra.mxu0 0.0
      %588 = vmatprep.subr.mxu0 0.0
      %589 = vmatpush1.msra.mxu0 0.0
      %590 = vmatprep.subr.mxu0 0.0
      %591 = vmatpush1.msra.mxu0 0.0
      %592 = vmatprep.subr.mxu0 0.0
      %593 = vmatpush1.msra.mxu0 0.0
      %594 = vmatprep.subr.mxu0 0.0
      %595 = vmatpush1.msra.mxu0 0.0
      %596 = vmatprep.subr.mxu0 0.0
      %597 = vmatpush1.msra.mxu0 0.0
      %598 = vmatprep.subr.mxu0 0.0
      %599 = vmatpush1.msra.mxu0 0.0
      %600 = vmatprep.subr.mxu0 0.0
      %601 = vmatpush1.msra.mxu0 0.0
      %602 = vmatprep.subr.mxu0 0.0
      %603 = vmatpush1.msra.mxu0 %v467
      %604 = vmatprep.subr.mxu0 0.0
      %605 = vmatpush2.msra.mxu0 0.0
      %606 = vmatprep.subr.mxu0 0.0
      %607 = vmatpush2.msra.mxu0 0.0
      %608 = vmatprep.subr.mxu0 0.0
      %609 = vmatpush2.msra.mxu0 0.0
      %610 = vmatprep.subr.mxu0 0.0
      %611 = vmatpush2.msra.mxu0 0.0
      %612 = vmatprep.subr.mxu0 0.0
      %613 = vmatpush2.msra.mxu0 0.0
      %614 = vmatprep.subr.mxu0 0.0
      %615 = vmatpush2.msra.mxu0 0.0
      %616 = vmatprep.subr.mxu0 0.0
      %617 = vmatpush2.msra.mxu0 0.0
      %618 = vmatprep.subr.mxu0 0.0
      %619 = vmatpush2.msra.mxu0 0.0
      %620 = vmatprep.subr.mxu0 0.0
      %621 = vmatpush2.msra.mxu0 0.0
      %622 = vmatprep.subr.mxu0 0.0
      %623 = vmatpush2.msra.mxu0 0.0
      %624 = vmatprep.subr.mxu0 0.0
      %625 = vmatpush2.msra.mxu0 0.0
      %626 = vmatprep.subr.mxu0 0.0
      %627 = vmatpush2.msra.mxu0 0.0
      %628 = vmatprep.subr.mxu0 0.0
      %629 = vmatpush2.msra.mxu0 0.0
      %630 = vmatprep.subr.mxu0 0.0
      %631 = vmatpush2.msra.mxu0 0.0
      %632 = vmatprep.subr.mxu0 0.0
      %633 = vmatpush2.msra.mxu0 0.0
      %634 = vmatprep.subr.mxu0 0.0
      %635 = vmatpush2.msra.mxu0 0.0
      %636 = vmatprep.mubr.f32.mxu0 0.0
      %637 = vmatmul.mubr.f32.gmra.mxu0 %v477
      %v638 = vpop.f32.mrf.mxu0
      %v639 = vadd.f32 %v473, %v638
      %v640 = vpop.f32.mrf.mxu0
      %641 = vmatprep.mubr.f32.mxu0 0.0
      %642 = vmatmul.mubr.f32.gmra.mxu0 %v480
      %v643 = vpop.f32.mrf.mxu0
      %v644 = vadd.f32 %v473, %v643
      %v645 = vpop.f32.mrf.mxu0
      %646 = vmatprep.mubr.f32.mxu0 0.0
      %647 = vmatmul.mubr.f32.gmra.mxu0 %v483
      %v648 = vpop.f32.mrf.mxu0
      %v649 = vadd.f32 %v473, %v648
      %v650 = vpop.f32.mrf.mxu0
      %651 = vmatprep.mubr.f32.mxu0 0.0
      %652 = vmatmul.mubr.f32.gmra.mxu0 %v486
      %v653 = vpop.f32.mrf.mxu0
      %v654 = vadd.f32 %v473, %v653
      %v655 = vpop.f32.mrf.mxu0
      %656 = vmatprep.mubr.f32.mxu0 0.0
      %657 = vmatmul.mubr.f32.gmra.mxu0 %v489
      %v658 = vpop.f32.mrf.mxu0
      %v659 = vadd.f32 %v473, %v658
      %v660 = vpop.f32.mrf.mxu0
      %661 = vmatprep.mubr.f32.mxu0 0.0
      %662 = vmatmul.mubr.f32.gmra.mxu0 %v492
      %v663 = vpop.f32.mrf.mxu0
      %v664 = vadd.f32 %v473, %v663
      %v665 = vpop.f32.mrf.mxu0
      %666 = vmatprep.mubr.f32.mxu0 0.0
      %667 = vmatmul.mubr.f32.gmra.mxu0 %v495
      %v668 = vpop.f32.mrf.mxu0
      %v669 = vadd.f32 %v473, %v668
      %v670 = vpop.f32.mrf.mxu0
      %671 = vmatprep.mubr.f32.mxu0 0.0
      %672 = vmatmul.mubr.f32.gmra.mxu0 %v498
      %v673 = vpop.f32.mrf.mxu0
      %v674 = vadd.f32 %v473, %v673
      %v675 = vpop.f32.mrf.mxu0
      %676 = vmatprep.mubr.f32.mxu0 0.0
      %677 = vmatmul.mubr.f32.gmra.mxu0 %v501
      %v678 = vpop.f32.mrf.mxu0
      %v679 = vadd.f32 %v473, %v678
      %v680 = vpop.f32.mrf.mxu0
      %681 = vmatprep.mubr.f32.mxu0 0.0
      %682 = vmatmul.mubr.f32.gmra.mxu0 %v504
      %v683 = vpop.f32.mrf.mxu0
      %v684 = vadd.f32 %v473, %v683
      %v685 = vpop.f32.mrf.mxu0
      %686 = vmatprep.mubr.f32.mxu0 0.0
      %687 = vmatmul.mubr.f32.gmra.mxu0 %v507
      %v688 = vpop.f32.mrf.mxu0
      %v689 = vadd.f32 %v473, %v688
      %v690 = vpop.f32.mrf.mxu0
      %691 = vmatprep.mubr.f32.mxu0 0.0
      %692 = vmatmul.mubr.f32.gmra.mxu0 %v510
      %v693 = vpop.f32.mrf.mxu0
      %v694 = vadd.f32 %v473, %v693
      %v695 = vpop.f32.mrf.mxu0
      %696 = vmatprep.mubr.f32.mxu0 0.0
      %697 = vmatmul.mubr.f32.gmra.mxu0 %v513
      %v698 = vpop.f32.mrf.mxu0
      %v699 = vadd.f32 %v473, %v698
      %v700 = vpop.f32.mrf.mxu0
      %701 = vmatprep.mubr.f32.mxu0 0.0
      %702 = vmatmul.mubr.f32.gmra.mxu0 %v516
      %v703 = vpop.f32.mrf.mxu0
      %v704 = vadd.f32 %v473, %v703
      %v705 = vpop.f32.mrf.mxu0
      %706 = vmatprep.mubr.f32.mxu0 0.0
      %707 = vmatmul.mubr.f32.gmra.mxu0 %v519
      %v708 = vpop.f32.mrf.mxu0
      %v709 = vadd.f32 %v473, %v708
      %v710 = vpop.f32.mrf.mxu0
      %711 = vmatprep.mubr.f32.mxu0 0.0
      %712 = vmatmul.mubr.f32.gmra.mxu0 %v522
      %v713 = vpop.f32.mrf.mxu0
      %v714 = vadd.f32 %v473, %v713
      %v715 = vpop.f32.mrf.mxu0
      %716 = vmatprep.mubr.f32.mxu0 0.0
      %717 = vmatmul.mubr.f32.gmra.mxu0 %v525
      %v718 = vpop.f32.mrf.mxu0
      %v719 = vadd.f32 %v473, %v718
      %v720 = vpop.f32.mrf.mxu0
      %721 = vmatprep.mubr.f32.mxu0 0.0
      %722 = vmatmul.mubr.f32.gmra.mxu0 %v528
      %v723 = vpop.f32.mrf.mxu0
      %v724 = vadd.f32 %v473, %v723
      %v725 = vpop.f32.mrf.mxu0
      %726 = vmatprep.mubr.f32.mxu0 0.0
      %727 = vmatmul.mubr.f32.gmra.mxu0 %v531
      %v728 = vpop.f32.mrf.mxu0
      %v729 = vadd.f32 %v473, %v728
      %v730 = vpop.f32.mrf.mxu0
      %731 = vmatprep.mubr.f32.mxu0 0.0
      %732 = vmatmul.mubr.f32.gmra.mxu0 %v534
      %v733 = vpop.f32.mrf.mxu0
      %v734 = vadd.f32 %v473, %v733
      %v735 = vpop.f32.mrf.mxu0
      %736 = vmatprep.mubr.f32.mxu0 0.0
      %737 = vmatmul.mubr.f32.gmra.mxu0 %v537
      %v738 = vpop.f32.mrf.mxu0
      %v739 = vadd.f32 %v473, %v738
      %v740 = vpop.f32.mrf.mxu0
      %741 = vmatprep.mubr.f32.mxu0 0.0
      %742 = vmatmul.mubr.f32.gmra.mxu0 %v540
      %v743 = vpop.f32.mrf.mxu0
      %v744 = vadd.f32 %v473, %v743
      %v745 = vpop.f32.mrf.mxu0
      %746 = vmatprep.mubr.f32.mxu0 0.0
      %747 = vmatmul.mubr.f32.gmra.mxu0 %v543
      %v748 = vpop.f32.mrf.mxu0
      %v749 = vadd.f32 %v473, %v748
      %v750 = vpop.f32.mrf.mxu0
      %751 = vmatprep.mubr.f32.mxu0 0.0
      %752 = vmatmul.mubr.f32.gmra.mxu0 %v546
      %v753 = vpop.f32.mrf.mxu0
      %v754 = vadd.f32 %v473, %v753
      %v755 = vpop.f32.mrf.mxu0
      %756 = vmatprep.mubr.f32.mxu0 0.0
      %757 = vmatmul.mubr.f32.gmra.mxu0 %v549
      %v758 = vpop.f32.mrf.mxu0
      %v759 = vadd.f32 %v473, %v758
      %v760 = vpop.f32.mrf.mxu0
      %761 = vmatprep.mubr.f32.mxu0 0.0
      %762 = vmatmul.mubr.f32.gmra.mxu0 %v552
      %v763 = vpop.f32.mrf.mxu0
      %v764 = vadd.f32 %v473, %v763
      %v765 = vpop.f32.mrf.mxu0
      %766 = vmatprep.mubr.f32.mxu0 0.0
      %767 = vmatmul.mubr.f32.gmra.mxu0 %v555
      %v768 = vpop.f32.mrf.mxu0
      %v769 = vadd.f32 %v473, %v768
      %v770 = vpop.f32.mrf.mxu0
      %771 = vmatprep.mubr.f32.mxu0 0.0
      %772 = vmatmul.mubr.f32.gmra.mxu0 %v558
      %v773 = vpop.f32.mrf.mxu0
      %v774 = vadd.f32 %v473, %v773
      %v775 = vpop.f32.mrf.mxu0
      %776 = vmatprep.mubr.f32.mxu0 0.0
      %777 = vmatmul.mubr.f32.gmra.mxu0 %v561
      %v778 = vpop.f32.mrf.mxu0
      %v779 = vadd.f32 %v473, %v778
      %v780 = vpop.f32.mrf.mxu0
      %781 = vmatprep.mubr.f32.mxu0 0.0
      %782 = vmatmul.mubr.f32.gmra.mxu0 %v564
      %v783 = vpop.f32.mrf.mxu0
      %v784 = vadd.f32 %v473, %v783
      %v785 = vpop.f32.mrf.mxu0
      %786 = vmatprep.mubr.f32.mxu0 0.0
      %787 = vmatmul.mubr.f32.gmra.mxu0 %v567
      %v788 = vpop.f32.mrf.mxu0
      %v789 = vadd.f32 %v473, %v788
      %v790 = vpop.f32.mrf.mxu0
      %791 = vmatprep.mubr.f32.mxu0 0.0
      %792 = vmatmul.mubr.f32.gmra.mxu0 %v570
      %v793 = vpop.f32.mrf.mxu0
      %v794 = vadd.f32 %v473, %v793
      %v795 = vpop.f32.mrf.mxu0
      %796 = vdwg.mxu0
      %v797 = vmax.f32 %v639, 0.0
      %v798 = vmax.f32 %v644, 0.0
      %v799 = vmax.f32 %v649, 0.0
      %v800 = vmax.f32 %v654, 0.0
      %v801 = vmax.f32 %v659, 0.0
      %v802 = vmax.f32 %v664, 0.0
      %v803 = vmax.f32 %v669, 0.0
      %v804 = vmax.f32 %v674, 0.0
      %v805 = vmax.f32 %v679, 0.0
      %v806 = vmax.f32 %v684, 0.0
      %v807 = vmax.f32 %v689, 0.0
      %v808 = vmax.f32 %v694, 0.0
      %v809 = vmax.f32 %v699, 0.0
      %v810 = vmax.f32 %v704, 0.0
      %v811 = vmax.f32 %v709, 0.0
      %v812 = vmax.f32 %v714, 0.0
      %v813 = vmax.f32 %v719, 0.0
      %v814 = vmax.f32 %v724, 0.0
      %v815 = vmax.f32 %v729, 0.0
      %v816 = vmax.f32 %v734, 0.0
      %v817 = vmax.f32 %v739, 0.0
      %v818 = vmax.f32 %v744, 0.0
      %v819 = vmax.f32 %v749, 0.0
      %v820 = vmax.f32 %v754, 0.0
      %v821 = vmax.f32 %v759, 0.0
      %v822 = vmax.f32 %v764, 0.0
      %v823 = vmax.f32 %v769, 0.0
      %v824 = vmax.f32 %v774, 0.0
      %v825 = vmax.f32 %v779, 0.0
      %v826 = vmax.f32 %v784, 0.0
      %v827 = vmax.f32 %v789, 0.0
      %v828 = vmax.f32 %v794, 0.0
      %v829 = vpack.c.bf16 %v798, %v797
      %v830 = vpack.c.bf16 %v800, %v799
      %v831 = vpack.c.bf16 %v802, %v801
      %v832 = vpack.c.bf16 %v804, %v803
      %v833 = vpack.c.bf16 %v806, %v805
      %v834 = vpack.c.bf16 %v808, %v807
      %v835 = vpack.c.bf16 %v810, %v809
      %v836 = vpack.c.bf16 %v812, %v811
      %v837 = vpack.c.bf16 %v814, %v813
      %v838 = vpack.c.bf16 %v816, %v815
      %v839 = vpack.c.bf16 %v818, %v817
      %v840 = vpack.c.bf16 %v820, %v819
      %v841 = vpack.c.bf16 %v822, %v821
      %v842 = vpack.c.bf16 %v824, %v823
      %v843 = vpack.c.bf16 %v826, %v825
      %v844 = vpack.c.bf16 %v828, %v827
      %v845 = vld [vmem:[%s375] sm:$0xff]
      %v846 = vld [vmem:[%s375 + $0x8] sm:$0xff]
      %v847 = vld [vmem:[%s375 + $0x10] sm:$0xff]
      %v848 = vld [vmem:[%s375 + $0x18] sm:$0xff]
      %v849 = vld [vmem:[%s375 + $0x20] sm:$0xff]
      %v850 = vld [vmem:[%s375 + $0x28] sm:$0xff]
      %v851 = vld [vmem:[%s375 + $0x30] sm:$0xff]
      %v852 = vld [vmem:[%s375 + $0x38] sm:$0xff]
      %v853 = vld [vmem:[%s375 + $0x40] sm:$0xff]
      %v854 = vld [vmem:[%s375 + $0x48] sm:$0xff]
      %v855 = vld [vmem:[%s375 + $0x50] sm:$0xff]
      %v856 = vld [vmem:[%s375 + $0x58] sm:$0xff]
      %v857 = vld [vmem:[%s375 + $0x60] sm:$0xff]
      %v858 = vld [vmem:[%s375 + $0x68] sm:$0xff]
      %v859 = vld [vmem:[%s375 + $0x70] sm:$0xff]
      %v860 = vld [vmem:[%s375 + $0x78] sm:$0xff]
      %v861 = vld [vmem:[%s375 + $0x80] sm:$0xff]
      %v862 = vld [vmem:[%s375 + $0x88] sm:$0xff]
      %v863 = vld [vmem:[%s375 + $0x90] sm:$0xff]
      %v864 = vld [vmem:[%s375 + $0x98] sm:$0xff]
      %v865 = vld [vmem:[%s375 + $0xa0] sm:$0xff]
      %v866 = vld [vmem:[%s375 + $0xa8] sm:$0xff]
      %v867 = vld [vmem:[%s375 + $0xb0] sm:$0xff]
      %v868 = vld [vmem:[%s375 + $0xb8] sm:$0xff]
      %v869 = vld [vmem:[%s375 + $0xc0] sm:$0xff]
      %v870 = vld [vmem:[%s375 + $0xc8] sm:$0xff]
      %v871 = vld [vmem:[%s375 + $0xd0] sm:$0xff]
      %v872 = vld [vmem:[%s375 + $0xd8] sm:$0xff]
      %v873 = vld [vmem:[%s375 + $0xe0] sm:$0xff]
      %v874 = vld [vmem:[%s375 + $0xe8] sm:$0xff]
      %v875 = vld [vmem:[%s375 + $0xf0] sm:$0xff]
      %v876 = vld [vmem:[%s375 + $0xf8] sm:$0xff]
      %v877 = vld [vmem:[%s385] sm:$0xff]
      %v878 = vld [vmem:[%s385 + $0x8] sm:$0xff]
      %v879 = vpack.c.bf16 %v846, %v845
      %v880 = vpack.c.bf16 %v848, %v847
      %v881 = vpack.c.bf16 %v850, %v849
      %v882 = vpack.c.bf16 %v852, %v851
      %v883 = vpack.c.bf16 %v854, %v853
      %v884 = vpack.c.bf16 %v856, %v855
      %v885 = vpack.c.bf16 %v858, %v857
      %v886 = vpack.c.bf16 %v860, %v859
      %v887 = vpack.c.bf16 %v862, %v861
      %v888 = vpack.c.bf16 %v864, %v863
      %v889 = vpack.c.bf16 %v866, %v865
      %v890 = vpack.c.bf16 %v868, %v867
      %v891 = vpack.c.bf16 %v870, %v869
      %v892 = vpack.c.bf16 %v872, %v871
      %v893 = vpack.c.bf16 %v874, %v873
      %v894 = vpack.c.bf16 %v876, %v875
      %v895 = vpack.c.bf16 %v877, %v877
      %v896 = vpack.c.bf16 %v878, %v878
      %v897 = vunpack.c.l.bf16 %v879
      %v898 = vunpack.c.h.bf16 %v879
      %v899 = vunpack.c.l.bf16 %v880
      %v900 = vunpack.c.h.bf16 %v880
      %v901 = vunpack.c.l.bf16 %v881
      %v902 = vunpack.c.h.bf16 %v881
      %v903 = vunpack.c.l.bf16 %v882
      %v904 = vunpack.c.h.bf16 %v882
      %v905 = vunpack.c.l.bf16 %v883
      %v906 = vunpack.c.h.bf16 %v883
      %v907 = vunpack.c.l.bf16 %v884
      %v908 = vunpack.c.h.bf16 %v884
      %v909 = vunpack.c.l.bf16 %v885
      %v910 = vunpack.c.h.bf16 %v885
      %v911 = vunpack.c.l.bf16 %v886
      %v912 = vunpack.c.h.bf16 %v886
      %v913 = vunpack.c.l.bf16 %v887
      %v914 = vunpack.c.h.bf16 %v887
      %v915 = vunpack.c.l.bf16 %v888
      %v916 = vunpack.c.h.bf16 %v888
      %v917 = vunpack.c.l.bf16 %v889
      %v918 = vunpack.c.h.bf16 %v889
      %v919 = vunpack.c.l.bf16 %v890
      %v920 = vunpack.c.h.bf16 %v890
      %v921 = vunpack.c.l.bf16 %v891
      %v922 = vunpack.c.h.bf16 %v891
      %v923 = vunpack.c.l.bf16 %v892
      %v924 = vunpack.c.h.bf16 %v892
      %v925 = vunpack.c.l.bf16 %v893
      %v926 = vunpack.c.h.bf16 %v893
      %v927 = vunpack.c.l.bf16 %v894
      %v928 = vunpack.c.h.bf16 %v894
      %v929 = vunpack.c.l.bf16 %v895
      %v930 = vunpack.c.l.bf16 %v896
      %v931 = vmul.f32 %v897, %v897
      %v932 = vmul.f32 %v898, %v898
      %v933 = vmul.f32 %v899, %v899
      %v934 = vmul.f32 %v900, %v900
      %v935 = vmul.f32 %v901, %v901
      %v936 = vmul.f32 %v902, %v902
      %v937 = vmul.f32 %v903, %v903
      %v938 = vmul.f32 %v904, %v904
      %v939 = vmul.f32 %v905, %v905
      %v940 = vmul.f32 %v906, %v906
      %v941 = vmul.f32 %v907, %v907
      %v942 = vmul.f32 %v908, %v908
      %v943 = vmul.f32 %v909, %v909
      %v944 = vmul.f32 %v910, %v910
      %v945 = vmul.f32 %v911, %v911
      %v946 = vmul.f32 %v912, %v912
      %v947 = vmul.f32 %v913, %v913
      %v948 = vmul.f32 %v914, %v914
      %v949 = vmul.f32 %v915, %v915
      %v950 = vmul.f32 %v916, %v916
      %v951 = vmul.f32 %v917, %v917
      %v952 = vmul.f32 %v918, %v918
      %v953 = vmul.f32 %v919, %v919
      %v954 = vmul.f32 %v920, %v920
      %v955 = vmul.f32 %v921, %v921
      %v956 = vmul.f32 %v922, %v922
      %v957 = vmul.f32 %v923, %v923
      %v958 = vmul.f32 %v924, %v924
      %v959 = vmul.f32 %v925, %v925
      %v960 = vmul.f32 %v926, %v926
      %v961 = vmul.f32 %v927, %v927
      %v962 = vmul.f32 %v928, %v928
      %995 = vrot.lane.b32.xlu0 %v931, 127
      %v996 = vpop.permute.xlu0 %995
      %997 = vrot.lane.b32.xlu0 %v932, 127
      %v998 = vpop.permute.xlu0 %997
      %999 = vrot.lane.b32.xlu0 %v933, 127
      %v1000 = vpop.permute.xlu0 %999
      %1001 = vrot.lane.b32.xlu0 %v934, 127
      %v1002 = vpop.permute.xlu0 %1001
      %1003 = vrot.lane.b32.xlu0 %v935, 127
      %v1004 = vpop.permute.xlu0 %1003
      %1005 = vrot.lane.b32.xlu0 %v936, 127
      %v1006 = vpop.permute.xlu0 %1005
      %1007 = vrot.lane.b32.xlu0 %v937, 127
      %v1008 = vpop.permute.xlu0 %1007
      %1009 = vrot.lane.b32.xlu0 %v938, 127
      %v1010 = vpop.permute.xlu0 %1009
      %1011 = vrot.lane.b32.xlu0 %v939, 127
      %v1012 = vpop.permute.xlu0 %1011
      %1013 = vrot.lane.b32.xlu0 %v940, 127
      %v1014 = vpop.permute.xlu0 %1013
      %1015 = vrot.lane.b32.xlu0 %v941, 127
      %v1016 = vpop.permute.xlu0 %1015
      %1017 = vrot.lane.b32.xlu0 %v942, 127
      %v1018 = vpop.permute.xlu0 %1017
      %1019 = vrot.lane.b32.xlu0 %v943, 127
      %v1020 = vpop.permute.xlu0 %1019
      %1021 = vrot.lane.b32.xlu0 %v944, 127
      %v1022 = vpop.permute.xlu0 %1021
      %1023 = vrot.lane.b32.xlu0 %v945, 127
      %v1024 = vpop.permute.xlu0 %1023
      %1025 = vrot.lane.b32.xlu0 %v946, 127
      %v1026 = vpop.permute.xlu0 %1025
      %1027 = vrot.lane.b32.xlu0 %v947, 127
      %v1028 = vpop.permute.xlu0 %1027
      %1029 = vrot.lane.b32.xlu0 %v948, 127
      %v1030 = vpop.permute.xlu0 %1029
      %1031 = vrot.lane.b32.xlu0 %v949, 127
      %v1032 = vpop.permute.xlu0 %1031
      %1033 = vrot.lane.b32.xlu0 %v950, 127
      %v1034 = vpop.permute.xlu0 %1033
      %1035 = vrot.lane.b32.xlu0 %v951, 127
      %v1036 = vpop.permute.xlu0 %1035
      %1037 = vrot.lane.b32.xlu0 %v952, 127
      %v1038 = vpop.permute.xlu0 %1037
      %1039 = vrot.lane.b32.xlu0 %v953, 127
      %v1040 = vpop.permute.xlu0 %1039
      %1041 = vrot.lane.b32.xlu0 %v954, 127
      %v1042 = vpop.permute.xlu0 %1041
      %1043 = vrot.lane.b32.xlu0 %v955, 127
      %v1044 = vpop.permute.xlu0 %1043
      %1045 = vrot.lane.b32.xlu0 %v956, 127
      %v1046 = vpop.permute.xlu0 %1045
      %1047 = vrot.lane.b32.xlu0 %v957, 127
      %v1048 = vpop.permute.xlu0 %1047
      %1049 = vrot.lane.b32.xlu0 %v958, 127
      %v1050 = vpop.permute.xlu0 %1049
      %1051 = vrot.lane.b32.xlu0 %v959, 127
      %v1052 = vpop.permute.xlu0 %1051
      %1053 = vrot.lane.b32.xlu0 %v960, 127
      %v1054 = vpop.permute.xlu0 %1053
      %1055 = vrot.lane.b32.xlu0 %v961, 127
      %v1056 = vpop.permute.xlu0 %1055
      %1057 = vrot.lane.b32.xlu0 %v962, 127
      %v1058 = vpop.permute.xlu0 %1057
      %v1091 = vadd.f32 %v931, %v996
      %v1092 = vadd.f32 %v932, %v998
      %v1093 = vadd.f32 %v933, %v1000
      %v1094 = vadd.f32 %v934, %v1002
      %v1095 = vadd.f32 %v935, %v1004
      %v1096 = vadd.f32 %v936, %v1006
      %v1097 = vadd.f32 %v937, %v1008
      %v1098 = vadd.f32 %v938, %v1010
      %v1099 = vadd.f32 %v939, %v1012
      %v1100 = vadd.f32 %v940, %v1014
      %v1101 = vadd.f32 %v941, %v1016
      %v1102 = vadd.f32 %v942, %v1018
      %v1103 = vadd.f32 %v943, %v1020
      %v1104 = vadd.f32 %v944, %v1022
      %v1105 = vadd.f32 %v945, %v1024
      %v1106 = vadd.f32 %v946, %v1026
      %v1107 = vadd.f32 %v947, %v1028
      %v1108 = vadd.f32 %v948, %v1030
      %v1109 = vadd.f32 %v949, %v1032
      %v1110 = vadd.f32 %v950, %v1034
      %v1111 = vadd.f32 %v951, %v1036
      %v1112 = vadd.f32 %v952, %v1038
      %v1113 = vadd.f32 %v953, %v1040
      %v1114 = vadd.f32 %v954, %v1042
      %v1115 = vadd.f32 %v955, %v1044
      %v1116 = vadd.f32 %v956, %v1046
      %v1117 = vadd.f32 %v957, %v1048
      %v1118 = vadd.f32 %v958, %v1050
      %v1119 = vadd.f32 %v959, %v1052
      %v1120 = vadd.f32 %v960, %v1054
      %v1121 = vadd.f32 %v961, %v1056
      %v1122 = vadd.f32 %v962, %v1058
      %1123 = vrot.lane.b32.xlu0 %v931, 126
      %v1124 = vpop.permute.xlu0 %1123
      %1125 = vrot.lane.b32.xlu0 %v932, 126
      %v1126 = vpop.permute.xlu0 %1125
      %1127 = vrot.lane.b32.xlu0 %v933, 126
      %v1128 = vpop.permute.xlu0 %1127
      %1129 = vrot.lane.b32.xlu0 %v934, 126
      %v1130 = vpop.permute.xlu0 %1129
      %1131 = vrot.lane.b32.xlu0 %v935, 126
      %v1132 = vpop.permute.xlu0 %1131
      %1133 = vrot.lane.b32.xlu0 %v936, 126
      %v1134 = vpop.permute.xlu0 %1133
      %1135 = vrot.lane.b32.xlu0 %v937, 126
      %v1136 = vpop.permute.xlu0 %1135
      %1137 = vrot.lane.b32.xlu0 %v938, 126
      %v1138 = vpop.permute.xlu0 %1137
      %1139 = vrot.lane.b32.xlu0 %v939, 126
      %v1140 = vpop.permute.xlu0 %1139
      %1141 = vrot.lane.b32.xlu0 %v940, 126
      %v1142 = vpop.permute.xlu0 %1141
      %1143 = vrot.lane.b32.xlu0 %v941, 126
      %v1144 = vpop.permute.xlu0 %1143
      %1145 = vrot.lane.b32.xlu0 %v942, 126
      %v1146 = vpop.permute.xlu0 %1145
      %1147 = vrot.lane.b32.xlu0 %v943, 126
      %v1148 = vpop.permute.xlu0 %1147
      %1149 = vrot.lane.b32.xlu0 %v944, 126
      %v1150 = vpop.permute.xlu0 %1149
      %1151 = vrot.lane.b32.xlu0 %v945, 126
      %v1152 = vpop.permute.xlu0 %1151
      %1153 = vrot.lane.b32.xlu0 %v946, 126
      %v1154 = vpop.permute.xlu0 %1153
      %1155 = vrot.lane.b32.xlu0 %v947, 126
      %v1156 = vpop.permute.xlu0 %1155
      %1157 = vrot.lane.b32.xlu0 %v948, 126
      %v1158 = vpop.permute.xlu0 %1157
      %1159 = vrot.lane.b32.xlu0 %v949, 126
      %v1160 = vpop.permute.xlu0 %1159
      %1161 = vrot.lane.b32.xlu0 %v950, 126
      %v1162 = vpop.permute.xlu0 %1161
      %1163 = vrot.lane.b32.xlu0 %v951, 126
      %v1164 = vpop.permute.xlu0 %1163
      %1165 = vrot.lane.b32.xlu0 %v952, 126
      %v1166 = vpop.permute.xlu0 %1165
      %1167 = vrot.lane.b32.xlu0 %v953, 126
      %v1168 = vpop.permute.xlu0 %1167
      %1169 = vrot.lane.b32.xlu0 %v954, 126
      %v1170 = vpop.permute.xlu0 %1169
      %1171 = vrot.lane.b32.xlu0 %v955, 126
      %v1172 = vpop.permute.xlu0 %1171
      %1173 = vrot.lane.b32.xlu0 %v956, 126
      %v1174 = vpop.permute.xlu0 %1173
      %1175 = vrot.lane.b32.xlu0 %v957, 126
      %v1176 = vpop.permute.xlu0 %1175
      %1177 = vrot.lane.b32.xlu0 %v958, 126
      %v1178 = vpop.permute.xlu0 %1177
      %1179 = vrot.lane.b32.xlu0 %v959, 126
      %v1180 = vpop.permute.xlu0 %1179
      %1181 = vrot.lane.b32.xlu0 %v960, 126
      %v1182 = vpop.permute.xlu0 %1181
      %1183 = vrot.lane.b32.xlu0 %v961, 126
      %v1184 = vpop.permute.xlu0 %1183
      %1185 = vrot.lane.b32.xlu0 %v962, 126
      %v1186 = vpop.permute.xlu0 %1185
      %v1219 = vadd.f32 %v1091, %v1124
      %v1220 = vadd.f32 %v1092, %v1126
      %v1221 = vadd.f32 %v1093, %v1128
      %v1222 = vadd.f32 %v1094, %v1130
      %v1223 = vadd.f32 %v1095, %v1132
      %v1224 = vadd.f32 %v1096, %v1134
      %v1225 = vadd.f32 %v1097, %v1136
      %v1226 = vadd.f32 %v1098, %v1138
      %v1227 = vadd.f32 %v1099, %v1140
      %v1228 = vadd.f32 %v1100, %v1142
      %v1229 = vadd.f32 %v1101, %v1144
      %v1230 = vadd.f32 %v1102, %v1146
      %v1231 = vadd.f32 %v1103, %v1148
      %v1232 = vadd.f32 %v1104, %v1150
      %v1233 = vadd.f32 %v1105, %v1152
      %v1234 = vadd.f32 %v1106, %v1154
      %v1235 = vadd.f32 %v1107, %v1156
      %v1236 = vadd.f32 %v1108, %v1158
      %v1237 = vadd.f32 %v1109, %v1160
      %v1238 = vadd.f32 %v1110, %v1162
      %v1239 = vadd.f32 %v1111, %v1164
      %v1240 = vadd.f32 %v1112, %v1166
      %v1241 = vadd.f32 %v1113, %v1168
      %v1242 = vadd.f32 %v1114, %v1170
      %v1243 = vadd.f32 %v1115, %v1172
      %v1244 = vadd.f32 %v1116, %v1174
      %v1245 = vadd.f32 %v1117, %v1176
      %v1246 = vadd.f32 %v1118, %v1178
      %v1247 = vadd.f32 %v1119, %v1180
      %v1248 = vadd.f32 %v1120, %v1182
      %v1249 = vadd.f32 %v1121, %v1184
      %v1250 = vadd.f32 %v1122, %v1186
      %v1251 = vmul.f32 %v929, %v929
      %v1252 = vmul.f32 %v930, %v930
      %v1255 = vrot.slane %v1251, 1
      %v1256 = vrot.slane %v1252, 1
      %v1259 = vadd.f32 %v1251, %v1255
      %v1260 = vadd.f32 %v1252, %v1256
      %v1261 = vrot.slane %v1251, 2
      %v1262 = vrot.slane %v1252, 2
      %v1265 = vadd.f32 %v1259, %v1261
      %v1266 = vadd.f32 %v1260, %v1262
      %v1268 = vsel %vm475, %v879, 0
      %v1271 = vsel %vm475, %v880, 0
      %v1274 = vsel %vm475, %v881, 0
      %v1277 = vsel %vm475, %v882, 0
      %v1280 = vsel %vm475, %v883, 0
      %v1283 = vsel %vm475, %v884, 0
      %v1286 = vsel %vm475, %v885, 0
      %v1289 = vsel %vm475, %v886, 0
      %v1292 = vsel %vm475, %v887, 0
      %v1295 = vsel %vm475, %v888, 0
      %v1298 = vsel %vm475, %v889, 0
      %v1301 = vsel %vm475, %v890, 0
      %v1304 = vsel %vm475, %v891, 0
      %v1307 = vsel %vm475, %v892, 0
      %v1310 = vsel %vm475, %v893, 0
      %v1313 = vsel %vm475, %v894, 0
      %vm1315 = vcmask 1043456
      %v1317 = vsel %vm1315, %v895, 0
      %v1320 = vsel %vm1315, %v896, 0
      %1322 = vmatprep.subr.bf16.mxu0 0
      %1323 = vmatpush1.bf16.msra.mxu0 0
      %1324 = vmatprep.subr.bf16.mxu0 0
      %1325 = vmatpush1.bf16.msra.mxu0 0
      %1326 = vmatprep.subr.bf16.mxu0 0
      %1327 = vmatpush1.bf16.msra.mxu0 0
      %1328 = vmatprep.subr.bf16.mxu0 0
      %1329 = vmatpush1.bf16.msra.mxu0 0
      %1330 = vmatprep.subr.bf16.mxu0 0
      %1331 = vmatpush1.bf16.msra.mxu0 0
      %1332 = vmatprep.subr.bf16.mxu0 0
      %1333 = vmatpush1.bf16.msra.mxu0 0
      %1334 = vmatprep.subr.bf16.mxu0 0
      %1335 = vmatpush1.bf16.msra.mxu0 0
      %1336 = vmatprep.subr.bf16.mxu0 %v1320
      %1337 = vmatpush1.bf16.msra.mxu0 %v1317
      %1338 = vmatprep.subr.bf16.mxu0 0
      %1339 = vmatpush2.bf16.msra.mxu0 0
      %1340 = vmatprep.subr.bf16.mxu0 0
      %1341 = vmatpush2.bf16.msra.mxu0 0
      %1342 = vmatprep.subr.bf16.mxu0 0
      %1343 = vmatpush2.bf16.msra.mxu0 0
      %1344 = vmatprep.subr.bf16.mxu0 0
      %1345 = vmatpush2.bf16.msra.mxu0 0
      %1346 = vmatprep.subr.bf16.mxu0 0
      %1347 = vmatpush2.bf16.msra.mxu0 0
      %1348 = vmatprep.subr.bf16.mxu0 0
      %1349 = vmatpush2.bf16.msra.mxu0 0
      %1350 = vmatprep.subr.bf16.mxu0 0
      %1351 = vmatpush2.bf16.msra.mxu0 0
      %1352 = vmatprep.subr.bf16.mxu0 0
      %1353 = vmatpush2.bf16.msra.mxu0 0
      %1354 = vmatprep.mubr.bf16.mxu0 0
      %1355 = vmatmul.mubr.bf16.gmra.mxu0 %v1268
      %v1356 = vpop.f32.mrf.mxu0
      %v1357 = vadd.f32 0.0, %v1356
      %v1358 = vpop.f32.mrf.mxu0
      %v1359 = vadd.f32 0.0, %v1358
      %v1360 = vpop.f32.mrf.mxu0
      %v1361 = vadd.f32 0.0, %v1360
      %v1362 = vpop.f32.mrf.mxu0
      %v1363 = vadd.f32 0.0, %v1362
      %1364 = vmatprep.mubr.bf16.mxu0 0
      %1365 = vmatmul.mubr.bf16.gmra.mxu0 %v1271
      %v1366 = vpop.f32.mrf.mxu0
      %v1367 = vadd.f32 0.0, %v1366
      %v1368 = vpop.f32.mrf.mxu0
      %v1369 = vadd.f32 0.0, %v1368
      %v1370 = vpop.f32.mrf.mxu0
      %v1371 = vadd.f32 0.0, %v1370
      %v1372 = vpop.f32.mrf.mxu0
      %v1373 = vadd.f32 0.0, %v1372
      %1374 = vmatprep.mubr.bf16.mxu0 0
      %1375 = vmatmul.mubr.bf16.gmra.mxu0 %v1274
      %v1376 = vpop.f32.mrf.mxu0
      %v1377 = vadd.f32 0.0, %v1376
      %v1378 = vpop.f32.mrf.mxu0
      %v1379 = vadd.f32 0.0, %v1378
      %v1380 = vpop.f32.mrf.mxu0
      %v1381 = vadd.f32 0.0, %v1380
      %v1382 = vpop.f32.mrf.mxu0
      %v1383 = vadd.f32 0.0, %v1382
      %1384 = vmatprep.mubr.bf16.mxu0 0
      %1385 = vmatmul.mubr.bf16.gmra.mxu0 %v1277
      %v1386 = vpop.f32.mrf.mxu0
      %v1387 = vadd.f32 0.0, %v1386
      %v1388 = vpop.f32.mrf.mxu0
      %v1389 = vadd.f32 0.0, %v1388
      %v1390 = vpop.f32.mrf.mxu0
      %v1391 = vadd.f32 0.0, %v1390
      %v1392 = vpop.f32.mrf.mxu0
      %v1393 = vadd.f32 0.0, %v1392
      %1394 = vmatprep.mubr.bf16.mxu0 0
      %1395 = vmatmul.mubr.bf16.gmra.mxu0 %v1280
      %v1396 = vpop.f32.mrf.mxu0
      %v1397 = vadd.f32 0.0, %v1396
      %v1398 = vpop.f32.mrf.mxu0
      %v1399 = vadd.f32 0.0, %v1398
      %v1400 = vpop.f32.mrf.mxu0
      %v1401 = vadd.f32 0.0, %v1400
      %v1402 = vpop.f32.mrf.mxu0
      %v1403 = vadd.f32 0.0, %v1402
      %1404 = vmatprep.mubr.bf16.mxu0 0
      %1405 = vmatmul.mubr.bf16.gmra.mxu0 %v1283
      %v1406 = vpop.f32.mrf.mxu0
      %v1407 = vadd.f32 0.0, %v1406
      %v1408 = vpop.f32.mrf.mxu0
      %v1409 = vadd.f32 0.0, %v1408
      %v1410 = vpop.f32.mrf.mxu0
      %v1411 = vadd.f32 0.0, %v1410
      %v1412 = vpop.f32.mrf.mxu0
      %v1413 = vadd.f32 0.0, %v1412
      %1414 = vmatprep.mubr.bf16.mxu0 0
      %1415 = vmatmul.mubr.bf16.gmra.mxu0 %v1286
      %v1416 = vpop.f32.mrf.mxu0
      %v1417 = vadd.f32 0.0, %v1416
      %v1418 = vpop.f32.mrf.mxu0
      %v1419 = vadd.f32 0.0, %v1418
      %v1420 = vpop.f32.mrf.mxu0
      %v1421 = vadd.f32 0.0, %v1420
      %v1422 = vpop.f32.mrf.mxu0
      %v1423 = vadd.f32 0.0, %v1422
      %1424 = vmatprep.mubr.bf16.mxu0 0
      %1425 = vmatmul.mubr.bf16.gmra.mxu0 %v1289
      %v1426 = vpop.f32.mrf.mxu0
      %v1427 = vadd.f32 0.0, %v1426
      %v1428 = vpop.f32.mrf.mxu0
      %v1429 = vadd.f32 0.0, %v1428
      %v1430 = vpop.f32.mrf.mxu0
      %v1431 = vadd.f32 0.0, %v1430
      %v1432 = vpop.f32.mrf.mxu0
      %v1433 = vadd.f32 0.0, %v1432
      %1434 = vmatprep.mubr.bf16.mxu0 0
      %1435 = vmatmul.mubr.bf16.gmra.mxu0 %v1292
      %v1436 = vpop.f32.mrf.mxu0
      %v1437 = vadd.f32 0.0, %v1436
      %v1438 = vpop.f32.mrf.mxu0
      %v1439 = vadd.f32 0.0, %v1438
      %v1440 = vpop.f32.mrf.mxu0
      %v1441 = vadd.f32 0.0, %v1440
      %v1442 = vpop.f32.mrf.mxu0
      %v1443 = vadd.f32 0.0, %v1442
      %1444 = vmatprep.mubr.bf16.mxu0 0
      %1445 = vmatmul.mubr.bf16.gmra.mxu0 %v1295
      %v1446 = vpop.f32.mrf.mxu0
      %v1447 = vadd.f32 0.0, %v1446
      %v1448 = vpop.f32.mrf.mxu0
      %v1449 = vadd.f32 0.0, %v1448
      %v1450 = vpop.f32.mrf.mxu0
      %v1451 = vadd.f32 0.0, %v1450
      %v1452 = vpop.f32.mrf.mxu0
      %v1453 = vadd.f32 0.0, %v1452
      %1454 = vmatprep.mubr.bf16.mxu0 0
      %1455 = vmatmul.mubr.bf16.gmra.mxu0 %v1298
      %v1456 = vpop.f32.mrf.mxu0
      %v1457 = vadd.f32 0.0, %v1456
      %v1458 = vpop.f32.mrf.mxu0
      %v1459 = vadd.f32 0.0, %v1458
      %v1460 = vpop.f32.mrf.mxu0
      %v1461 = vadd.f32 0.0, %v1460
      %v1462 = vpop.f32.mrf.mxu0
      %v1463 = vadd.f32 0.0, %v1462
      %1464 = vmatprep.mubr.bf16.mxu0 0
      %1465 = vmatmul.mubr.bf16.gmra.mxu0 %v1301
      %v1466 = vpop.f32.mrf.mxu0
      %v1467 = vadd.f32 0.0, %v1466
      %v1468 = vpop.f32.mrf.mxu0
      %v1469 = vadd.f32 0.0, %v1468
      %v1470 = vpop.f32.mrf.mxu0
      %v1471 = vadd.f32 0.0, %v1470
      %v1472 = vpop.f32.mrf.mxu0
      %v1473 = vadd.f32 0.0, %v1472
      %1474 = vmatprep.mubr.bf16.mxu0 0
      %1475 = vmatmul.mubr.bf16.gmra.mxu0 %v1304
      %v1476 = vpop.f32.mrf.mxu0
      %v1477 = vadd.f32 0.0, %v1476
      %v1478 = vpop.f32.mrf.mxu0
      %v1479 = vadd.f32 0.0, %v1478
      %v1480 = vpop.f32.mrf.mxu0
      %v1481 = vadd.f32 0.0, %v1480
      %v1482 = vpop.f32.mrf.mxu0
      %v1483 = vadd.f32 0.0, %v1482
      %1484 = vmatprep.mubr.bf16.mxu0 0
      %1485 = vmatmul.mubr.bf16.gmra.mxu0 %v1307
      %v1486 = vpop.f32.mrf.mxu0
      %v1487 = vadd.f32 0.0, %v1486
      %v1488 = vpop.f32.mrf.mxu0
      %v1489 = vadd.f32 0.0, %v1488
      %v1490 = vpop.f32.mrf.mxu0
      %v1491 = vadd.f32 0.0, %v1490
      %v1492 = vpop.f32.mrf.mxu0
      %v1493 = vadd.f32 0.0, %v1492
      %1494 = vmatprep.mubr.bf16.mxu0 0
      %1495 = vmatmul.mubr.bf16.gmra.mxu0 %v1310
      %v1496 = vpop.f32.mrf.mxu0
      %v1497 = vadd.f32 0.0, %v1496
      %v1498 = vpop.f32.mrf.mxu0
      %v1499 = vadd.f32 0.0, %v1498
      %v1500 = vpop.f32.mrf.mxu0
      %v1501 = vadd.f32 0.0, %v1500
      %v1502 = vpop.f32.mrf.mxu0
      %v1503 = vadd.f32 0.0, %v1502
      %1504 = vmatprep.mubr.bf16.mxu0 0
      %1505 = vmatmul.mubr.bf16.gmra.mxu0 %v1313
      %v1506 = vpop.f32.mrf.mxu0
      %v1507 = vadd.f32 0.0, %v1506
      %v1508 = vpop.f32.mrf.mxu0
      %v1509 = vadd.f32 0.0, %v1508
      %v1510 = vpop.f32.mrf.mxu0
      %v1511 = vadd.f32 0.0, %v1510
      %v1512 = vpop.f32.mrf.mxu0
      %v1513 = vadd.f32 0.0, %v1512
      %1514 = vdwg.mxu0
      %1516 = vset.pattern.permute.xlu0 0
      %1517 = vperm.xlu0 %1516, %v1219
      %v1518 = vpop.permute.xlu0 %1517
      %1521 = vset.pattern.permute.xlu0 0
      %1522 = vperm.xlu0 %1521, %v1220
      %v1523 = vpop.permute.xlu0 %1522
      %1526 = vset.pattern.permute.xlu0 0
      %1527 = vperm.xlu0 %1526, %v1221
      %v1528 = vpop.permute.xlu0 %1527
      %1531 = vset.pattern.permute.xlu0 0
      %1532 = vperm.xlu0 %1531, %v1222
      %v1533 = vpop.permute.xlu0 %1532
      %1536 = vset.pattern.permute.xlu0 0
      %1537 = vperm.xlu0 %1536, %v1223
      %v1538 = vpop.permute.xlu0 %1537
      %1541 = vset.pattern.permute.xlu0 0
      %1542 = vperm.xlu0 %1541, %v1224
      %v1543 = vpop.permute.xlu0 %1542
      %1546 = vset.pattern.permute.xlu0 0
      %1547 = vperm.xlu0 %1546, %v1225
      %v1548 = vpop.permute.xlu0 %1547
      %1551 = vset.pattern.permute.xlu0 0
      %1552 = vperm.xlu0 %1551, %v1226
      %v1553 = vpop.permute.xlu0 %1552
      %1556 = vset.pattern.permute.xlu0 0
      %1557 = vperm.xlu0 %1556, %v1227
      %v1558 = vpop.permute.xlu0 %1557
      %1561 = vset.pattern.permute.xlu0 0
      %1562 = vperm.xlu0 %1561, %v1228
      %v1563 = vpop.permute.xlu0 %1562
      %1566 = vset.pattern.permute.xlu0 0
      %1567 = vperm.xlu0 %1566, %v1229
      %v1568 = vpop.permute.xlu0 %1567
      %1571 = vset.pattern.permute.xlu0 0
      %1572 = vperm.xlu0 %1571, %v1230
      %v1573 = vpop.permute.xlu0 %1572
      %1576 = vset.pattern.permute.xlu0 0
      %1577 = vperm.xlu0 %1576, %v1231
      %v1578 = vpop.permute.xlu0 %1577
      %1581 = vset.pattern.permute.xlu0 0
      %1582 = vperm.xlu0 %1581, %v1232
      %v1583 = vpop.permute.xlu0 %1582
      %1586 = vset.pattern.permute.xlu0 0
      %1587 = vperm.xlu0 %1586, %v1233
      %v1588 = vpop.permute.xlu0 %1587
      %1591 = vset.pattern.permute.xlu0 0
      %1592 = vperm.xlu0 %1591, %v1234
      %v1593 = vpop.permute.xlu0 %1592
      %1596 = vset.pattern.permute.xlu0 0
      %1597 = vperm.xlu0 %1596, %v1235
      %v1598 = vpop.permute.xlu0 %1597
      %1601 = vset.pattern.permute.xlu0 0
      %1602 = vperm.xlu0 %1601, %v1236
      %v1603 = vpop.permute.xlu0 %1602
      %1606 = vset.pattern.permute.xlu0 0
      %1607 = vperm.xlu0 %1606, %v1237
      %v1608 = vpop.permute.xlu0 %1607
      %1611 = vset.pattern.permute.xlu0 0
      %1612 = vperm.xlu0 %1611, %v1238
      %v1613 = vpop.permute.xlu0 %1612
      %1616 = vset.pattern.permute.xlu0 0
      %1617 = vperm.xlu0 %1616, %v1239
      %v1618 = vpop.permute.xlu0 %1617
      %1621 = vset.pattern.permute.xlu0 0
      %1622 = vperm.xlu0 %1621, %v1240
      %v1623 = vpop.permute.xlu0 %1622
      %1626 = vset.pattern.permute.xlu0 0
      %1627 = vperm.xlu0 %1626, %v1241
      %v1628 = vpop.permute.xlu0 %1627
      %1631 = vset.pattern.permute.xlu0 0
      %1632 = vperm.xlu0 %1631, %v1242
      %v1633 = vpop.permute.xlu0 %1632
      %1636 = vset.pattern.permute.xlu0 0
      %1637 = vperm.xlu0 %1636, %v1243
      %v1638 = vpop.permute.xlu0 %1637
      %1641 = vset.pattern.permute.xlu0 0
      %1642 = vperm.xlu0 %1641, %v1244
      %v1643 = vpop.permute.xlu0 %1642
      %1646 = vset.pattern.permute.xlu0 0
      %1647 = vperm.xlu0 %1646, %v1245
      %v1648 = vpop.permute.xlu0 %1647
      %1651 = vset.pattern.permute.xlu0 0
      %1652 = vperm.xlu0 %1651, %v1246
      %v1653 = vpop.permute.xlu0 %1652
      %1656 = vset.pattern.permute.xlu0 0
      %1657 = vperm.xlu0 %1656, %v1247
      %v1658 = vpop.permute.xlu0 %1657
      %1661 = vset.pattern.permute.xlu0 0
      %1662 = vperm.xlu0 %1661, %v1248
      %v1663 = vpop.permute.xlu0 %1662
      %1666 = vset.pattern.permute.xlu0 0
      %1667 = vperm.xlu0 %1666, %v1249
      %v1668 = vpop.permute.xlu0 %1667
      %1671 = vset.pattern.permute.xlu0 0
      %1672 = vperm.xlu0 %1671, %v1250
      %v1673 = vpop.permute.xlu0 %1672
      %v1675 = vlaneseq
      %v1676 = vshrl.u32 %v1675, 7
      %v1677 = vsub.s32 0, %v1676
      %v1678 = vrot.slane %v1265, %v1677
      %v1679 = vlaneseq
      %v1680 = vshrl.u32 %v1679, 7
      %v1681 = vsub.s32 0, %v1680
      %v1682 = vrot.slane %v1266, %v1681
      %v1683 = vadd.f32 %v1518, %v1678
      %v1684 = vadd.f32 %v1518, %v1682
      %v1685 = vadd.f32 %v1523, %v1678
      %v1686 = vadd.f32 %v1523, %v1682
      %v1687 = vadd.f32 %v1528, %v1678
      %v1688 = vadd.f32 %v1528, %v1682
      %v1689 = vadd.f32 %v1533, %v1678
      %v1690 = vadd.f32 %v1533, %v1682
      %v1691 = vadd.f32 %v1538, %v1678
      %v1692 = vadd.f32 %v1538, %v1682
      %v1693 = vadd.f32 %v1543, %v1678
      %v1694 = vadd.f32 %v1543, %v1682
      %v1695 = vadd.f32 %v1548, %v1678
      %v1696 = vadd.f32 %v1548, %v1682
      %v1697 = vadd.f32 %v1553, %v1678
      %v1698 = vadd.f32 %v1553, %v1682
      %v1699 = vadd.f32 %v1558, %v1678
      %v1700 = vadd.f32 %v1558, %v1682
      %v1701 = vadd.f32 %v1563, %v1678
      %v1702 = vadd.f32 %v1563, %v1682
      %v1703 = vadd.f32 %v1568, %v1678
      %v1704 = vadd.f32 %v1568, %v1682
      %v1705 = vadd.f32 %v1573, %v1678
      %v1706 = vadd.f32 %v1573, %v1682
      %v1707 = vadd.f32 %v1578, %v1678
      %v1708 = vadd.f32 %v1578, %v1682
      %v1709 = vadd.f32 %v1583, %v1678
      %v1710 = vadd.f32 %v1583, %v1682
      %v1711 = vadd.f32 %v1588, %v1678
      %v1712 = vadd.f32 %v1588, %v1682
      %v1713 = vadd.f32 %v1593, %v1678
      %v1714 = vadd.f32 %v1593, %v1682
      %v1715 = vadd.f32 %v1598, %v1678
      %v1716 = vadd.f32 %v1598, %v1682
      %v1717 = vadd.f32 %v1603, %v1678
      %v1718 = vadd.f32 %v1603, %v1682
      %v1719 = vadd.f32 %v1608, %v1678
      %v1720 = vadd.f32 %v1608, %v1682
      %v1721 = vadd.f32 %v1613, %v1678
      %v1722 = vadd.f32 %v1613, %v1682
      %v1723 = vadd.f32 %v1618, %v1678
      %v1724 = vadd.f32 %v1618, %v1682
      %v1725 = vadd.f32 %v1623, %v1678
      %v1726 = vadd.f32 %v1623, %v1682
      %v1727 = vadd.f32 %v1628, %v1678
      %v1728 = vadd.f32 %v1628, %v1682
      %v1729 = vadd.f32 %v1633, %v1678
      %v1730 = vadd.f32 %v1633, %v1682
      %v1731 = vadd.f32 %v1638, %v1678
      %v1732 = vadd.f32 %v1638, %v1682
      %v1733 = vadd.f32 %v1643, %v1678
      %v1734 = vadd.f32 %v1643, %v1682
      %v1735 = vadd.f32 %v1648, %v1678
      %v1736 = vadd.f32 %v1648, %v1682
      %v1737 = vadd.f32 %v1653, %v1678
      %v1738 = vadd.f32 %v1653, %v1682
      %v1739 = vadd.f32 %v1658, %v1678
      %v1740 = vadd.f32 %v1658, %v1682
      %v1741 = vadd.f32 %v1663, %v1678
      %v1742 = vadd.f32 %v1663, %v1682
      %v1743 = vadd.f32 %v1668, %v1678
      %v1744 = vadd.f32 %v1668, %v1682
      %v1745 = vadd.f32 %v1673, %v1678
      %v1746 = vadd.f32 %v1673, %v1682
      %v1747 = vmul.f32 %v1357, 2.0
      %v1748 = vmul.f32 %v1359, 2.0
      %v1749 = vmul.f32 %v1361, 2.0
      %v1750 = vmul.f32 %v1363, 2.0
      %v1751 = vmul.f32 %v1367, 2.0
      %v1752 = vmul.f32 %v1369, 2.0
      %v1753 = vmul.f32 %v1371, 2.0
      %v1754 = vmul.f32 %v1373, 2.0
      %v1755 = vmul.f32 %v1377, 2.0
      %v1756 = vmul.f32 %v1379, 2.0
      %v1757 = vmul.f32 %v1381, 2.0
      %v1758 = vmul.f32 %v1383, 2.0
      %v1759 = vmul.f32 %v1387, 2.0
      %v1760 = vmul.f32 %v1389, 2.0
      %v1761 = vmul.f32 %v1391, 2.0
      %v1762 = vmul.f32 %v1393, 2.0
      %v1763 = vmul.f32 %v1397, 2.0
      %v1764 = vmul.f32 %v1399, 2.0
      %v1765 = vmul.f32 %v1401, 2.0
      %v1766 = vmul.f32 %v1403, 2.0
      %v1767 = vmul.f32 %v1407, 2.0
      %v1768 = vmul.f32 %v1409, 2.0
      %v1769 = vmul.f32 %v1411, 2.0
      %v1770 = vmul.f32 %v1413, 2.0
      %v1771 = vmul.f32 %v1417, 2.0
      %v1772 = vmul.f32 %v1419, 2.0
      %v1773 = vmul.f32 %v1421, 2.0
      %v1774 = vmul.f32 %v1423, 2.0
      %v1775 = vmul.f32 %v1427, 2.0
      %v1776 = vmul.f32 %v1429, 2.0
      %v1777 = vmul.f32 %v1431, 2.0
      %v1778 = vmul.f32 %v1433, 2.0
      %v1779 = vmul.f32 %v1437, 2.0
      %v1780 = vmul.f32 %v1439, 2.0
      %v1781 = vmul.f32 %v1441, 2.0
      %v1782 = vmul.f32 %v1443, 2.0
      %v1783 = vmul.f32 %v1447, 2.0
      %v1784 = vmul.f32 %v1449, 2.0
      %v1785 = vmul.f32 %v1451, 2.0
      %v1786 = vmul.f32 %v1453, 2.0
      %v1787 = vmul.f32 %v1457, 2.0
      %v1788 = vmul.f32 %v1459, 2.0
      %v1789 = vmul.f32 %v1461, 2.0
      %v1790 = vmul.f32 %v1463, 2.0
      %v1791 = vmul.f32 %v1467, 2.0
      %v1792 = vmul.f32 %v1469, 2.0
      %v1793 = vmul.f32 %v1471, 2.0
      %v1794 = vmul.f32 %v1473, 2.0
      %v1795 = vmul.f32 %v1477, 2.0
      %v1796 = vmul.f32 %v1479, 2.0
      %v1797 = vmul.f32 %v1481, 2.0
      %v1798 = vmul.f32 %v1483, 2.0
      %v1799 = vmul.f32 %v1487, 2.0
      %v1800 = vmul.f32 %v1489, 2.0
      %v1801 = vmul.f32 %v1491, 2.0
      %v1802 = vmul.f32 %v1493, 2.0
      %v1803 = vmul.f32 %v1497, 2.0
      %v1804 = vmul.f32 %v1499, 2.0
      %v1805 = vmul.f32 %v1501, 2.0
      %v1806 = vmul.f32 %v1503, 2.0
      %v1807 = vmul.f32 %v1507, 2.0
      %v1808 = vmul.f32 %v1509, 2.0
      %v1809 = vmul.f32 %v1511, 2.0
      %v1810 = vmul.f32 %v1513, 2.0
      %v1811 = vsub.f32 %v1683, %v1747
      %v1812 = vsub.f32 %v1684, %v1748
      %v1813 = vsub.f32 %v1685, %v1749
      %v1814 = vsub.f32 %v1686, %v1750
      %v1815 = vsub.f32 %v1687, %v1751
      %v1816 = vsub.f32 %v1688, %v1752
      %v1817 = vsub.f32 %v1689, %v1753
      %v1818 = vsub.f32 %v1690, %v1754
      %v1819 = vsub.f32 %v1691, %v1755
      %v1820 = vsub.f32 %v1692, %v1756
      %v1821 = vsub.f32 %v1693, %v1757
      %v1822 = vsub.f32 %v1694, %v1758
      %v1823 = vsub.f32 %v1695, %v1759
      %v1824 = vsub.f32 %v1696, %v1760
      %v1825 = vsub.f32 %v1697, %v1761
      %v1826 = vsub.f32 %v1698, %v1762
      %v1827 = vsub.f32 %v1699, %v1763
      %v1828 = vsub.f32 %v1700, %v1764
      %v1829 = vsub.f32 %v1701, %v1765
      %v1830 = vsub.f32 %v1702, %v1766
      %v1831 = vsub.f32 %v1703, %v1767
      %v1832 = vsub.f32 %v1704, %v1768
      %v1833 = vsub.f32 %v1705, %v1769
      %v1834 = vsub.f32 %v1706, %v1770
      %v1835 = vsub.f32 %v1707, %v1771
      %v1836 = vsub.f32 %v1708, %v1772
      %v1837 = vsub.f32 %v1709, %v1773
      %v1838 = vsub.f32 %v1710, %v1774
      %v1839 = vsub.f32 %v1711, %v1775
      %v1840 = vsub.f32 %v1712, %v1776
      %v1841 = vsub.f32 %v1713, %v1777
      %v1842 = vsub.f32 %v1714, %v1778
      %v1843 = vsub.f32 %v1715, %v1779
      %v1844 = vsub.f32 %v1716, %v1780
      %v1845 = vsub.f32 %v1717, %v1781
      %v1846 = vsub.f32 %v1718, %v1782
      %v1847 = vsub.f32 %v1719, %v1783
      %v1848 = vsub.f32 %v1720, %v1784
      %v1849 = vsub.f32 %v1721, %v1785
      %v1850 = vsub.f32 %v1722, %v1786
      %v1851 = vsub.f32 %v1723, %v1787
      %v1852 = vsub.f32 %v1724, %v1788
      %v1853 = vsub.f32 %v1725, %v1789
      %v1854 = vsub.f32 %v1726, %v1790
      %v1855 = vsub.f32 %v1727, %v1791
      %v1856 = vsub.f32 %v1728, %v1792
      %v1857 = vsub.f32 %v1729, %v1793
      %v1858 = vsub.f32 %v1730, %v1794
      %v1859 = vsub.f32 %v1731, %v1795
      %v1860 = vsub.f32 %v1732, %v1796
      %v1861 = vsub.f32 %v1733, %v1797
      %v1862 = vsub.f32 %v1734, %v1798
      %v1863 = vsub.f32 %v1735, %v1799
      %v1864 = vsub.f32 %v1736, %v1800
      %v1865 = vsub.f32 %v1737, %v1801
      %v1866 = vsub.f32 %v1738, %v1802
      %v1867 = vsub.f32 %v1739, %v1803
      %v1868 = vsub.f32 %v1740, %v1804
      %v1869 = vsub.f32 %v1741, %v1805
      %v1870 = vsub.f32 %v1742, %v1806
      %v1871 = vsub.f32 %v1743, %v1807
      %v1872 = vsub.f32 %v1744, %v1808
      %v1873 = vsub.f32 %v1745, %v1809
      %v1874 = vsub.f32 %v1746, %v1810
      %v1875 = vmax.f32 %v1811, 0.0
      %v1876 = vmax.f32 %v1812, 0.0
      %v1877 = vmax.f32 %v1813, 0.0
      %v1878 = vmax.f32 %v1814, 0.0
      %v1879 = vmax.f32 %v1815, 0.0
      %v1880 = vmax.f32 %v1816, 0.0
      %v1881 = vmax.f32 %v1817, 0.0
      %v1882 = vmax.f32 %v1818, 0.0
      %v1883 = vmax.f32 %v1819, 0.0
      %v1884 = vmax.f32 %v1820, 0.0
      %v1885 = vmax.f32 %v1821, 0.0
      %v1886 = vmax.f32 %v1822, 0.0
      %v1887 = vmax.f32 %v1823, 0.0
      %v1888 = vmax.f32 %v1824, 0.0
      %v1889 = vmax.f32 %v1825, 0.0
      %v1890 = vmax.f32 %v1826, 0.0
      %v1891 = vmax.f32 %v1827, 0.0
      %v1892 = vmax.f32 %v1828, 0.0
      %v1893 = vmax.f32 %v1829, 0.0
      %v1894 = vmax.f32 %v1830, 0.0
      %v1895 = vmax.f32 %v1831, 0.0
      %v1896 = vmax.f32 %v1832, 0.0
      %v1897 = vmax.f32 %v1833, 0.0
      %v1898 = vmax.f32 %v1834, 0.0
      %v1899 = vmax.f32 %v1835, 0.0
      %v1900 = vmax.f32 %v1836, 0.0
      %v1901 = vmax.f32 %v1837, 0.0
      %v1902 = vmax.f32 %v1838, 0.0
      %v1903 = vmax.f32 %v1839, 0.0
      %v1904 = vmax.f32 %v1840, 0.0
      %v1905 = vmax.f32 %v1841, 0.0
      %v1906 = vmax.f32 %v1842, 0.0
      %v1907 = vmax.f32 %v1843, 0.0
      %v1908 = vmax.f32 %v1844, 0.0
      %v1909 = vmax.f32 %v1845, 0.0
      %v1910 = vmax.f32 %v1846, 0.0
      %v1911 = vmax.f32 %v1847, 0.0
      %v1912 = vmax.f32 %v1848, 0.0
      %v1913 = vmax.f32 %v1849, 0.0
      %v1914 = vmax.f32 %v1850, 0.0
      %v1915 = vmax.f32 %v1851, 0.0
      %v1916 = vmax.f32 %v1852, 0.0
      %v1917 = vmax.f32 %v1853, 0.0
      %v1918 = vmax.f32 %v1854, 0.0
      %v1919 = vmax.f32 %v1855, 0.0
      %v1920 = vmax.f32 %v1856, 0.0
      %v1921 = vmax.f32 %v1857, 0.0
      %v1922 = vmax.f32 %v1858, 0.0
      %v1923 = vmax.f32 %v1859, 0.0
      %v1924 = vmax.f32 %v1860, 0.0
      %v1925 = vmax.f32 %v1861, 0.0
      %v1926 = vmax.f32 %v1862, 0.0
      %v1927 = vmax.f32 %v1863, 0.0
      %v1928 = vmax.f32 %v1864, 0.0
      %v1929 = vmax.f32 %v1865, 0.0
      %v1930 = vmax.f32 %v1866, 0.0
      %v1931 = vmax.f32 %v1867, 0.0
      %v1932 = vmax.f32 %v1868, 0.0
      %v1933 = vmax.f32 %v1869, 0.0
      %v1934 = vmax.f32 %v1870, 0.0
      %v1935 = vmax.f32 %v1871, 0.0
      %v1936 = vmax.f32 %v1872, 0.0
      %v1937 = vmax.f32 %v1873, 0.0
      %v1938 = vmax.f32 %v1874, 0.0
      %v1939 = vmul.f32 %v1875, -2048.0
      %v1940 = vmul.f32 %v1876, -2048.0
      %v1941 = vmul.f32 %v1877, -2048.0
      %v1942 = vmul.f32 %v1878, -2048.0
      %v1943 = vmul.f32 %v1879, -2048.0
      %v1944 = vmul.f32 %v1880, -2048.0
      %v1945 = vmul.f32 %v1881, -2048.0
      %v1946 = vmul.f32 %v1882, -2048.0
      %v1947 = vmul.f32 %v1883, -2048.0
      %v1948 = vmul.f32 %v1884, -2048.0
      %v1949 = vmul.f32 %v1885, -2048.0
      %v1950 = vmul.f32 %v1886, -2048.0
      %v1951 = vmul.f32 %v1887, -2048.0
      %v1952 = vmul.f32 %v1888, -2048.0
      %v1953 = vmul.f32 %v1889, -2048.0
      %v1954 = vmul.f32 %v1890, -2048.0
      %v1955 = vmul.f32 %v1891, -2048.0
      %v1956 = vmul.f32 %v1892, -2048.0
      %v1957 = vmul.f32 %v1893, -2048.0
      %v1958 = vmul.f32 %v1894, -2048.0
      %v1959 = vmul.f32 %v1895, -2048.0
      %v1960 = vmul.f32 %v1896, -2048.0
      %v1961 = vmul.f32 %v1897, -2048.0
      %v1962 = vmul.f32 %v1898, -2048.0
      %v1963 = vmul.f32 %v1899, -2048.0
      %v1964 = vmul.f32 %v1900, -2048.0
      %v1965 = vmul.f32 %v1901, -2048.0
      %v1966 = vmul.f32 %v1902, -2048.0
      %v1967 = vmul.f32 %v1903, -2048.0
      %v1968 = vmul.f32 %v1904, -2048.0
      %v1969 = vmul.f32 %v1905, -2048.0
      %v1970 = vmul.f32 %v1906, -2048.0
      %v1971 = vmul.f32 %v1907, -2048.0
      %v1972 = vmul.f32 %v1908, -2048.0
      %v1973 = vmul.f32 %v1909, -2048.0
      %v1974 = vmul.f32 %v1910, -2048.0
      %v1975 = vmul.f32 %v1911, -2048.0
      %v1976 = vmul.f32 %v1912, -2048.0
      %v1977 = vmul.f32 %v1913, -2048.0
      %v1978 = vmul.f32 %v1914, -2048.0
      %v1979 = vmul.f32 %v1915, -2048.0
      %v1980 = vmul.f32 %v1916, -2048.0
      %v1981 = vmul.f32 %v1917, -2048.0
      %v1982 = vmul.f32 %v1918, -2048.0
      %v1983 = vmul.f32 %v1919, -2048.0
      %v1984 = vmul.f32 %v1920, -2048.0
      %v1985 = vmul.f32 %v1921, -2048.0
      %v1986 = vmul.f32 %v1922, -2048.0
      %v1987 = vmul.f32 %v1923, -2048.0
      %v1988 = vmul.f32 %v1924, -2048.0
      %v1989 = vmul.f32 %v1925, -2048.0
      %v1990 = vmul.f32 %v1926, -2048.0
      %v1991 = vmul.f32 %v1927, -2048.0
      %v1992 = vmul.f32 %v1928, -2048.0
      %v1993 = vmul.f32 %v1929, -2048.0
      %v1994 = vmul.f32 %v1930, -2048.0
      %v1995 = vmul.f32 %v1931, -2048.0
      %v1996 = vmul.f32 %v1932, -2048.0
      %v1997 = vmul.f32 %v1933, -2048.0
      %v1998 = vmul.f32 %v1934, -2048.0
      %v1999 = vmul.f32 %v1935, -2048.0
      %v2000 = vmul.f32 %v1936, -2048.0
      %v2001 = vmul.f32 %v1937, -2048.0
      %v2002 = vmul.f32 %v1938, -2048.0
      %v2003 = vmul.f32 %v1939, 1.442695
      %v2004 = vpow.pop %v2003
      %v2005 = vmul.f32 %v1940, 1.442695
      %v2006 = vpow.pop %v2005
      %v2007 = vmul.f32 %v1941, 1.442695
      %v2008 = vpow.pop %v2007
      %v2009 = vmul.f32 %v1942, 1.442695
      %v2010 = vpow.pop %v2009
      %v2011 = vmul.f32 %v1943, 1.442695
      %v2012 = vpow.pop %v2011
      %v2013 = vmul.f32 %v1944, 1.442695
      %v2014 = vpow.pop %v2013
      %v2015 = vmul.f32 %v1945, 1.442695
      %v2016 = vpow.pop %v2015
      %v2017 = vmul.f32 %v1946, 1.442695
      %v2018 = vpow.pop %v2017
      %v2019 = vmul.f32 %v1947, 1.442695
      %v2020 = vpow.pop %v2019
      %v2021 = vmul.f32 %v1948, 1.442695
      %v2022 = vpow.pop %v2021
      %v2023 = vmul.f32 %v1949, 1.442695
      %v2024 = vpow.pop %v2023
      %v2025 = vmul.f32 %v1950, 1.442695
      %v2026 = vpow.pop %v2025
      %v2027 = vmul.f32 %v1951, 1.442695
      %v2028 = vpow.pop %v2027
      %v2029 = vmul.f32 %v1952, 1.442695
      %v2030 = vpow.pop %v2029
      %v2031 = vmul.f32 %v1953, 1.442695
      %v2032 = vpow.pop %v2031
      %v2033 = vmul.f32 %v1954, 1.442695
      %v2034 = vpow.pop %v2033
      %v2035 = vmul.f32 %v1955, 1.442695
      %v2036 = vpow.pop %v2035
      %v2037 = vmul.f32 %v1956, 1.442695
      %v2038 = vpow.pop %v2037
      %v2039 = vmul.f32 %v1957, 1.442695
      %v2040 = vpow.pop %v2039
      %v2041 = vmul.f32 %v1958, 1.442695
      %v2042 = vpow.pop %v2041
      %v2043 = vmul.f32 %v1959, 1.442695
      %v2044 = vpow.pop %v2043
      %v2045 = vmul.f32 %v1960, 1.442695
      %v2046 = vpow.pop %v2045
      %v2047 = vmul.f32 %v1961, 1.442695
      %v2048 = vpow.pop %v2047
      %v2049 = vmul.f32 %v1962, 1.442695
      %v2050 = vpow.pop %v2049
      %v2051 = vmul.f32 %v1963, 1.442695
      %v2052 = vpow.pop %v2051
      %v2053 = vmul.f32 %v1964, 1.442695
      %v2054 = vpow.pop %v2053
      %v2055 = vmul.f32 %v1965, 1.442695
      %v2056 = vpow.pop %v2055
      %v2057 = vmul.f32 %v1966, 1.442695
      %v2058 = vpow.pop %v2057
      %v2059 = vmul.f32 %v1967, 1.442695
      %v2060 = vpow.pop %v2059
      %v2061 = vmul.f32 %v1968, 1.442695
      %v2062 = vpow.pop %v2061
      %v2063 = vmul.f32 %v1969, 1.442695
      %v2064 = vpow.pop %v2063
      %v2065 = vmul.f32 %v1970, 1.442695
      %v2066 = vpow.pop %v2065
      %v2067 = vmul.f32 %v1971, 1.442695
      %v2068 = vpow.pop %v2067
      %v2069 = vmul.f32 %v1972, 1.442695
      %v2070 = vpow.pop %v2069
      %v2071 = vmul.f32 %v1973, 1.442695
      %v2072 = vpow.pop %v2071
      %v2073 = vmul.f32 %v1974, 1.442695
      %v2074 = vpow.pop %v2073
      %v2075 = vmul.f32 %v1975, 1.442695
      %v2076 = vpow.pop %v2075
      %v2077 = vmul.f32 %v1976, 1.442695
      %v2078 = vpow.pop %v2077
      %v2079 = vmul.f32 %v1977, 1.442695
      %v2080 = vpow.pop %v2079
      %v2081 = vmul.f32 %v1978, 1.442695
      %v2082 = vpow.pop %v2081
      %v2083 = vmul.f32 %v1979, 1.442695
      %v2084 = vpow.pop %v2083
      %v2085 = vmul.f32 %v1980, 1.442695
      %v2086 = vpow.pop %v2085
      %v2087 = vmul.f32 %v1981, 1.442695
      %v2088 = vpow.pop %v2087
      %v2089 = vmul.f32 %v1982, 1.442695
      %v2090 = vpow.pop %v2089
      %v2091 = vmul.f32 %v1983, 1.442695
      %v2092 = vpow.pop %v2091
      %v2093 = vmul.f32 %v1984, 1.442695
      %v2094 = vpow.pop %v2093
      %v2095 = vmul.f32 %v1985, 1.442695
      %v2096 = vpow.pop %v2095
      %v2097 = vmul.f32 %v1986, 1.442695
      %v2098 = vpow.pop %v2097
      %v2099 = vmul.f32 %v1987, 1.442695
      %v2100 = vpow.pop %v2099
      %v2101 = vmul.f32 %v1988, 1.442695
      %v2102 = vpow.pop %v2101
      %v2103 = vmul.f32 %v1989, 1.442695
      %v2104 = vpow.pop %v2103
      %v2105 = vmul.f32 %v1990, 1.442695
      %v2106 = vpow.pop %v2105
      %v2107 = vmul.f32 %v1991, 1.442695
      %v2108 = vpow.pop %v2107
      %v2109 = vmul.f32 %v1992, 1.442695
      %v2110 = vpow.pop %v2109
      %v2111 = vmul.f32 %v1993, 1.442695
      %v2112 = vpow.pop %v2111
      %v2113 = vmul.f32 %v1994, 1.442695
      %v2114 = vpow.pop %v2113
      %v2115 = vmul.f32 %v1995, 1.442695
      %v2116 = vpow.pop %v2115
      %v2117 = vmul.f32 %v1996, 1.442695
      %v2118 = vpow.pop %v2117
      %v2119 = vmul.f32 %v1997, 1.442695
      %v2120 = vpow.pop %v2119
      %v2121 = vmul.f32 %v1998, 1.442695
      %v2122 = vpow.pop %v2121
      %v2123 = vmul.f32 %v1999, 1.442695
      %v2124 = vpow.pop %v2123
      %v2125 = vmul.f32 %v2000, 1.442695
      %v2126 = vpow.pop %v2125
      %v2127 = vmul.f32 %v2001, 1.442695
      %v2128 = vpow.pop %v2127
      %v2129 = vmul.f32 %v2002, 1.442695
      %v2130 = vpow.pop %v2129
      %v2131 = vpack.c.bf16 %v2008, %v2004
      %v2132 = vpack.c.bf16 %v2010, %v2006
      %v2133 = vpack.c.bf16 %v2016, %v2012
      %v2134 = vpack.c.bf16 %v2018, %v2014
      %v2135 = vpack.c.bf16 %v2024, %v2020
      %v2136 = vpack.c.bf16 %v2026, %v2022
      %v2137 = vpack.c.bf16 %v2032, %v2028
      %v2138 = vpack.c.bf16 %v2034, %v2030
      %v2139 = vpack.c.bf16 %v2040, %v2036
      %v2140 = vpack.c.bf16 %v2042, %v2038
      %v2141 = vpack.c.bf16 %v2048, %v2044
      %v2142 = vpack.c.bf16 %v2050, %v2046
      %v2143 = vpack.c.bf16 %v2056, %v2052
      %v2144 = vpack.c.bf16 %v2058, %v2054
      %v2145 = vpack.c.bf16 %v2064, %v2060
      %v2146 = vpack.c.bf16 %v2066, %v2062
      %v2147 = vpack.c.bf16 %v2072, %v2068
      %v2148 = vpack.c.bf16 %v2074, %v2070
      %v2149 = vpack.c.bf16 %v2080, %v2076
      %v2150 = vpack.c.bf16 %v2082, %v2078
      %v2151 = vpack.c.bf16 %v2088, %v2084
      %v2152 = vpack.c.bf16 %v2090, %v2086
      %v2153 = vpack.c.bf16 %v2096, %v2092
      %v2154 = vpack.c.bf16 %v2098, %v2094
      %v2155 = vpack.c.bf16 %v2104, %v2100
      %v2156 = vpack.c.bf16 %v2106, %v2102
      %v2157 = vpack.c.bf16 %v2112, %v2108
      %v2158 = vpack.c.bf16 %v2114, %v2110
      %v2159 = vpack.c.bf16 %v2120, %v2116
      %v2160 = vpack.c.bf16 %v2122, %v2118
      %v2161 = vpack.c.bf16 %v2128, %v2124
      %v2162 = vpack.c.bf16 %v2130, %v2126
      %v2163 = vld [vmem:[#allocation2] sm:$0xff]
      %v2164 = vld [vmem:[#allocation2 + $0x8] sm:$0xff]
      %v2165 = vld [vmem:[#allocation2 + $0x10] sm:$0xff]
      %v2166 = vld [vmem:[#allocation2 + $0x18] sm:$0xff]
      %v2167 = vld [vmem:[#allocation2 + $0x20] sm:$0xff]
      %v2168 = vld [vmem:[#allocation2 + $0x28] sm:$0xff]
      %v2169 = vld [vmem:[#allocation2 + $0x30] sm:$0xff]
      %v2170 = vld [vmem:[#allocation2 + $0x38] sm:$0xff]
      %v2171 = vld [vmem:[#allocation2 + $0x40] sm:$0xff]
      %v2172 = vld [vmem:[#allocation2 + $0x48] sm:$0xff]
      %v2173 = vld [vmem:[#allocation2 + $0x50] sm:$0xff]
      %v2174 = vld [vmem:[#allocation2 + $0x58] sm:$0xff]
      %v2175 = vld [vmem:[#allocation2 + $0x60] sm:$0xff]
      %v2176 = vld [vmem:[#allocation2 + $0x68] sm:$0xff]
      %v2177 = vld [vmem:[#allocation2 + $0x70] sm:$0xff]
      %v2178 = vld [vmem:[#allocation2 + $0x78] sm:$0xff]
      %v2179 = vld [vmem:[#allocation2 + $0x80] sm:$0xff]
      %v2180 = vld [vmem:[#allocation2 + $0x88] sm:$0xff]
      %v2181 = vld [vmem:[#allocation2 + $0x90] sm:$0xff]
      %v2182 = vld [vmem:[#allocation2 + $0x98] sm:$0xff]
      %v2183 = vld [vmem:[#allocation2 + $0xa0] sm:$0xff]
      %v2184 = vld [vmem:[#allocation2 + $0xa8] sm:$0xff]
      %v2185 = vld [vmem:[#allocation2 + $0xb0] sm:$0xff]
      %v2186 = vld [vmem:[#allocation2 + $0xb8] sm:$0xff]
      %v2187 = vld [vmem:[#allocation2 + $0xc0] sm:$0xff]
      %v2188 = vld [vmem:[#allocation2 + $0xc8] sm:$0xff]
      %v2189 = vld [vmem:[#allocation2 + $0xd0] sm:$0xff]
      %v2190 = vld [vmem:[#allocation2 + $0xd8] sm:$0xff]
      %v2191 = vld [vmem:[#allocation2 + $0xe0] sm:$0xff]
      %v2192 = vld [vmem:[#allocation2 + $0xe8] sm:$0xff]
      %v2193 = vld [vmem:[#allocation2 + $0xf0] sm:$0xff]
      %v2194 = vld [vmem:[#allocation2 + $0xf8] sm:$0xff]
      %2195 = vmatprep.subr.bf16.mxu0 0
      %2196 = vmatpush1.bf16.msra.mxu0 %v836
      %2197 = vmatprep.subr.bf16.mxu0 0
      %2198 = vmatpush1.bf16.msra.mxu0 %v835
      %2199 = vmatprep.subr.bf16.mxu0 0
      %2200 = vmatpush1.bf16.msra.mxu0 %v834
      %2201 = vmatprep.subr.bf16.mxu0 0
      %2202 = vmatpush1.bf16.msra.mxu0 %v833
      %2203 = vmatprep.subr.bf16.mxu0 0
      %2204 = vmatpush1.bf16.msra.mxu0 %v832
      %2205 = vmatprep.subr.bf16.mxu0 0
      %2206 = vmatpush1.bf16.msra.mxu0 %v831
      %2207 = vmatprep.subr.bf16.mxu0 0
      %2208 = vmatpush1.bf16.msra.mxu0 %v830
      %2209 = vmatprep.subr.bf16.mxu0 0
      %2210 = vmatpush1.bf16.msra.mxu0 %v829
      %2211 = vmatprep.subr.bf16.mxu0 0
      %2212 = vmatpush2.bf16.msra.mxu0 %v844
      %2213 = vmatprep.subr.bf16.mxu0 0
      %2214 = vmatpush2.bf16.msra.mxu0 %v843
      %2215 = vmatprep.subr.bf16.mxu0 0
      %2216 = vmatpush2.bf16.msra.mxu0 %v842
      %2217 = vmatprep.subr.bf16.mxu0 0
      %2218 = vmatpush2.bf16.msra.mxu0 %v841
      %2219 = vmatprep.subr.bf16.mxu0 0
      %2220 = vmatpush2.bf16.msra.mxu0 %v840
      %2221 = vmatprep.subr.bf16.mxu0 0
      %2222 = vmatpush2.bf16.msra.mxu0 %v839
      %2223 = vmatprep.subr.bf16.mxu0 0
      %2224 = vmatpush2.bf16.msra.mxu0 %v838
      %2225 = vmatprep.subr.bf16.mxu0 0
      %2226 = vmatpush2.bf16.msra.mxu0 %v837
      %2227 = vmatprep.mubr.bf16.mxu0 %v2132
      %2228 = vmatmul.mubr.bf16.gmra.mxu0 %v2131
      %v2229 = vpop.f32.mrf.mxu0
      %v2230 = vadd.f32 0.0, %v2229
      %v2231 = vpop.f32.mrf.mxu0
      %v2232 = vpop.f32.mrf.mxu0
      %v2233 = vadd.f32 0.0, %v2232
      %v2234 = vpop.f32.mrf.mxu0
      %2235 = vmatprep.mubr.bf16.mxu0 %v2134
      %2236 = vmatmul.mubr.bf16.gmra.mxu0 %v2133
      %v2237 = vpop.f32.mrf.mxu0
      %v2238 = vadd.f32 0.0, %v2237
      %v2239 = vpop.f32.mrf.mxu0
      %v2240 = vpop.f32.mrf.mxu0
      %v2241 = vadd.f32 0.0, %v2240
      %v2242 = vpop.f32.mrf.mxu0
      %2243 = vmatprep.mubr.bf16.mxu0 %v2136
      %2244 = vmatmul.mubr.bf16.gmra.mxu0 %v2135
      %v2245 = vpop.f32.mrf.mxu0
      %v2246 = vadd.f32 0.0, %v2245
      %v2247 = vpop.f32.mrf.mxu0
      %v2248 = vpop.f32.mrf.mxu0
      %v2249 = vadd.f32 0.0, %v2248
      %v2250 = vpop.f32.mrf.mxu0
      %2251 = vmatprep.mubr.bf16.mxu0 %v2138
      %2252 = vmatmul.mubr.bf16.gmra.mxu0 %v2137
      %v2253 = vpop.f32.mrf.mxu0
      %v2254 = vadd.f32 0.0, %v2253
      %v2255 = vpop.f32.mrf.mxu0
      %v2256 = vpop.f32.mrf.mxu0
      %v2257 = vadd.f32 0.0, %v2256
      %v2258 = vpop.f32.mrf.mxu0
      %2259 = vmatprep.mubr.bf16.mxu0 %v2140
      %2260 = vmatmul.mubr.bf16.gmra.mxu0 %v2139
      %v2261 = vpop.f32.mrf.mxu0
      %v2262 = vadd.f32 0.0, %v2261
      %v2263 = vpop.f32.mrf.mxu0
      %v2264 = vpop.f32.mrf.mxu0
      %v2265 = vadd.f32 0.0, %v2264
      %v2266 = vpop.f32.mrf.mxu0
      %2267 = vmatprep.mubr.bf16.mxu0 %v2142
      %2268 = vmatmul.mubr.bf16.gmra.mxu0 %v2141
      %v2269 = vpop.f32.mrf.mxu0
      %v2270 = vadd.f32 0.0, %v2269
      %v2271 = vpop.f32.mrf.mxu0
      %v2272 = vpop.f32.mrf.mxu0
      %v2273 = vadd.f32 0.0, %v2272
      %v2274 = vpop.f32.mrf.mxu0
      %2275 = vmatprep.mubr.bf16.mxu0 %v2144
      %2276 = vmatmul.mubr.bf16.gmra.mxu0 %v2143
      %v2277 = vpop.f32.mrf.mxu0
      %v2278 = vadd.f32 0.0, %v2277
      %v2279 = vpop.f32.mrf.mxu0
      %v2280 = vpop.f32.mrf.mxu0
      %v2281 = vadd.f32 0.0, %v2280
      %v2282 = vpop.f32.mrf.mxu0
      %2283 = vmatprep.mubr.bf16.mxu0 %v2146
      %2284 = vmatmul.mubr.bf16.gmra.mxu0 %v2145
      %v2285 = vpop.f32.mrf.mxu0
      %v2286 = vadd.f32 0.0, %v2285
      %v2287 = vpop.f32.mrf.mxu0
      %v2288 = vpop.f32.mrf.mxu0
      %v2289 = vadd.f32 0.0, %v2288
      %v2290 = vpop.f32.mrf.mxu0
      %2291 = vmatprep.mubr.bf16.mxu0 %v2148
      %2292 = vmatmul.mubr.bf16.gmra.mxu0 %v2147
      %v2293 = vpop.f32.mrf.mxu0
      %v2294 = vadd.f32 0.0, %v2293
      %v2295 = vpop.f32.mrf.mxu0
      %v2296 = vpop.f32.mrf.mxu0
      %v2297 = vadd.f32 0.0, %v2296
      %v2298 = vpop.f32.mrf.mxu0
      %2299 = vmatprep.mubr.bf16.mxu0 %v2150
      %2300 = vmatmul.mubr.bf16.gmra.mxu0 %v2149
      %v2301 = vpop.f32.mrf.mxu0
      %v2302 = vadd.f32 0.0, %v2301
      %v2303 = vpop.f32.mrf.mxu0
      %v2304 = vpop.f32.mrf.mxu0
      %v2305 = vadd.f32 0.0, %v2304
      %v2306 = vpop.f32.mrf.mxu0
      %2307 = vmatprep.mubr.bf16.mxu0 %v2152
      %2308 = vmatmul.mubr.bf16.gmra.mxu0 %v2151
      %v2309 = vpop.f32.mrf.mxu0
      %v2310 = vadd.f32 0.0, %v2309
      %v2311 = vpop.f32.mrf.mxu0
      %v2312 = vpop.f32.mrf.mxu0
      %v2313 = vadd.f32 0.0, %v2312
      %v2314 = vpop.f32.mrf.mxu0
      %2315 = vmatprep.mubr.bf16.mxu0 %v2154
      %2316 = vmatmul.mubr.bf16.gmra.mxu0 %v2153
      %v2317 = vpop.f32.mrf.mxu0
      %v2318 = vadd.f32 0.0, %v2317
      %v2319 = vpop.f32.mrf.mxu0
      %v2320 = vpop.f32.mrf.mxu0
      %v2321 = vadd.f32 0.0, %v2320
      %v2322 = vpop.f32.mrf.mxu0
      %2323 = vmatprep.mubr.bf16.mxu0 %v2156
      %2324 = vmatmul.mubr.bf16.gmra.mxu0 %v2155
      %v2325 = vpop.f32.mrf.mxu0
      %v2326 = vadd.f32 0.0, %v2325
      %v2327 = vpop.f32.mrf.mxu0
      %v2328 = vpop.f32.mrf.mxu0
      %v2329 = vadd.f32 0.0, %v2328
      %v2330 = vpop.f32.mrf.mxu0
      %2331 = vmatprep.mubr.bf16.mxu0 %v2158
      %2332 = vmatmul.mubr.bf16.gmra.mxu0 %v2157
      %v2333 = vpop.f32.mrf.mxu0
      %v2334 = vadd.f32 0.0, %v2333
      %v2335 = vpop.f32.mrf.mxu0
      %v2336 = vpop.f32.mrf.mxu0
      %v2337 = vadd.f32 0.0, %v2336
      %v2338 = vpop.f32.mrf.mxu0
      %2339 = vmatprep.mubr.bf16.mxu0 %v2160
      %2340 = vmatmul.mubr.bf16.gmra.mxu0 %v2159
      %v2341 = vpop.f32.mrf.mxu0
      %v2342 = vadd.f32 0.0, %v2341
      %v2343 = vpop.f32.mrf.mxu0
      %v2344 = vpop.f32.mrf.mxu0
      %v2345 = vadd.f32 0.0, %v2344
      %v2346 = vpop.f32.mrf.mxu0
      %2347 = vmatprep.mubr.bf16.mxu0 %v2162
      %2348 = vmatmul.mubr.bf16.gmra.mxu0 %v2161
      %v2349 = vpop.f32.mrf.mxu0
      %v2350 = vadd.f32 0.0, %v2349
      %v2351 = vpop.f32.mrf.mxu0
      %v2352 = vpop.f32.mrf.mxu0
      %v2353 = vadd.f32 0.0, %v2352
      %v2354 = vpop.f32.mrf.mxu0
      %2355 = vdwg.mxu0
      %v2356 = vadd.f32 %v2163, %v2230
      %v2357 = vadd.f32 %v2164, %v2233
      %v2358 = vadd.f32 %v2165, %v2238
      %v2359 = vadd.f32 %v2166, %v2241
      %v2360 = vadd.f32 %v2167, %v2246
      %v2361 = vadd.f32 %v2168, %v2249
      %v2362 = vadd.f32 %v2169, %v2254
      %v2363 = vadd.f32 %v2170, %v2257
      %v2364 = vadd.f32 %v2171, %v2262
      %v2365 = vadd.f32 %v2172, %v2265
      %v2366 = vadd.f32 %v2173, %v2270
      %v2367 = vadd.f32 %v2174, %v2273
      %v2368 = vadd.f32 %v2175, %v2278
      %v2369 = vadd.f32 %v2176, %v2281
      %v2370 = vadd.f32 %v2177, %v2286
      %v2371 = vadd.f32 %v2178, %v2289
      %v2372 = vadd.f32 %v2179, %v2294
      %v2373 = vadd.f32 %v2180, %v2297
      %v2374 = vadd.f32 %v2181, %v2302
      %v2375 = vadd.f32 %v2182, %v2305
      %v2376 = vadd.f32 %v2183, %v2310
      %v2377 = vadd.f32 %v2184, %v2313
      %v2378 = vadd.f32 %v2185, %v2318
      %v2379 = vadd.f32 %v2186, %v2321
      %v2380 = vadd.f32 %v2187, %v2326
      %v2381 = vadd.f32 %v2188, %v2329
      %v2382 = vadd.f32 %v2189, %v2334
      %v2383 = vadd.f32 %v2190, %v2337
      %v2384 = vadd.f32 %v2191, %v2342
      %v2385 = vadd.f32 %v2192, %v2345
      %v2386 = vadd.f32 %v2193, %v2350
      %v2387 = vadd.f32 %v2194, %v2353
      %vm2388 = vcmask 269312
      %2389 = vst.msk [vmem:[#allocation2] sm:$0xff] %vm2388, %v2356
      %2390 = vst.msk [vmem:[#allocation2 + $0x8] sm:$0xff] %vm2388, %v2357
      %2391 = vst.msk [vmem:[#allocation2 + $0x10] sm:$0xff] %vm2388, %v2358
      %2392 = vst.msk [vmem:[#allocation2 + $0x18] sm:$0xff] %vm2388, %v2359
      %2393 = vst.msk [vmem:[#allocation2 + $0x20] sm:$0xff] %vm2388, %v2360
      %2394 = vst.msk [vmem:[#allocation2 + $0x28] sm:$0xff] %vm2388, %v2361
      %2395 = vst.msk [vmem:[#allocation2 + $0x30] sm:$0xff] %vm2388, %v2362
      %2396 = vst.msk [vmem:[#allocation2 + $0x38] sm:$0xff] %vm2388, %v2363
      %2397 = vst.msk [vmem:[#allocation2 + $0x40] sm:$0xff] %vm2388, %v2364
      %2398 = vst.msk [vmem:[#allocation2 + $0x48] sm:$0xff] %vm2388, %v2365
      %2399 = vst.msk [vmem:[#allocation2 + $0x50] sm:$0xff] %vm2388, %v2366
      %2400 = vst.msk [vmem:[#allocation2 + $0x58] sm:$0xff] %vm2388, %v2367
      %2401 = vst.msk [vmem:[#allocation2 + $0x60] sm:$0xff] %vm2388, %v2368
      %2402 = vst.msk [vmem:[#allocation2 + $0x68] sm:$0xff] %vm2388, %v2369
      %2403 = vst.msk [vmem:[#allocation2 + $0x70] sm:$0xff] %vm2388, %v2370
      %2404 = vst.msk [vmem:[#allocation2 + $0x78] sm:$0xff] %vm2388, %v2371
      %2405 = vst.msk [vmem:[#allocation2 + $0x80] sm:$0xff] %vm2388, %v2372
      %2406 = vst.msk [vmem:[#allocation2 + $0x88] sm:$0xff] %vm2388, %v2373
      %2407 = vst.msk [vmem:[#allocation2 + $0x90] sm:$0xff] %vm2388, %v2374
      %2408 = vst.msk [vmem:[#allocation2 + $0x98] sm:$0xff] %vm2388, %v2375
      %2409 = vst.msk [vmem:[#allocation2 + $0xa0] sm:$0xff] %vm2388, %v2376
      %2410 = vst.msk [vmem:[#allocation2 + $0xa8] sm:$0xff] %vm2388, %v2377
      %2411 = vst.msk [vmem:[#allocation2 + $0xb0] sm:$0xff] %vm2388, %v2378
      %2412 = vst.msk [vmem:[#allocation2 + $0xb8] sm:$0xff] %vm2388, %v2379
      %2413 = vst.msk [vmem:[#allocation2 + $0xc0] sm:$0xff] %vm2388, %v2380
      %2414 = vst.msk [vmem:[#allocation2 + $0xc8] sm:$0xff] %vm2388, %v2381
      %2415 = vst.msk [vmem:[#allocation2 + $0xd0] sm:$0xff] %vm2388, %v2382
      %2416 = vst.msk [vmem:[#allocation2 + $0xd8] sm:$0xff] %vm2388, %v2383
      %2417 = vst.msk [vmem:[#allocation2 + $0xe0] sm:$0xff] %vm2388, %v2384
      %2418 = vst.msk [vmem:[#allocation2 + $0xe8] sm:$0xff] %vm2388, %v2385
      %2419 = vst.msk [vmem:[#allocation2 + $0xf0] sm:$0xff] %vm2388, %v2386
      %2420 = vst.msk [vmem:[#allocation2 + $0xf8] sm:$0xff] %vm2388, %v2387
      // Predicated region
      $region53: #{tpu_custom_call.1} parent=47 // pred_check
        %p2421 = pneg %p398
      $region54: #{tpu_custom_call.1} parent=47 // pred_check_branch
        %2423 = sbr.rel (%p2421) target = $region56
      $region55: #{tpu_custom_call.1} parent=47 // pred_region
        %v2424 = vld [vmem:[#allocation2] sm:$0xff]
        %v2425 = vld [vmem:[#allocation2 + $0x8] sm:$0xff]
        %v2426 = vld [vmem:[#allocation2 + $0x10] sm:$0xff]
        %v2427 = vld [vmem:[#allocation2 + $0x18] sm:$0xff]
        %v2428 = vld [vmem:[#allocation2 + $0x20] sm:$0xff]
        %v2429 = vld [vmem:[#allocation2 + $0x28] sm:$0xff]
        %v2430 = vld [vmem:[#allocation2 + $0x30] sm:$0xff]
        %v2431 = vld [vmem:[#allocation2 + $0x38] sm:$0xff]
        %v2432 = vld [vmem:[#allocation2 + $0x40] sm:$0xff]
        %v2433 = vld [vmem:[#allocation2 + $0x48] sm:$0xff]
        %v2434 = vld [vmem:[#allocation2 + $0x50] sm:$0xff]
        %v2435 = vld [vmem:[#allocation2 + $0x58] sm:$0xff]
        %v2436 = vld [vmem:[#allocation2 + $0x60] sm:$0xff]
        %v2437 = vld [vmem:[#allocation2 + $0x68] sm:$0xff]
        %v2438 = vld [vmem:[#allocation2 + $0x70] sm:$0xff]
        %v2439 = vld [vmem:[#allocation2 + $0x78] sm:$0xff]
        %v2440 = vld [vmem:[#allocation2 + $0x80] sm:$0xff]
        %v2441 = vld [vmem:[#allocation2 + $0x88] sm:$0xff]
        %v2442 = vld [vmem:[#allocation2 + $0x90] sm:$0xff]
        %v2443 = vld [vmem:[#allocation2 + $0x98] sm:$0xff]
        %v2444 = vld [vmem:[#allocation2 + $0xa0] sm:$0xff]
        %v2445 = vld [vmem:[#allocation2 + $0xa8] sm:$0xff]
        %v2446 = vld [vmem:[#allocation2 + $0xb0] sm:$0xff]
        %v2447 = vld [vmem:[#allocation2 + $0xb8] sm:$0xff]
        %v2448 = vld [vmem:[#allocation2 + $0xc0] sm:$0xff]
        %v2449 = vld [vmem:[#allocation2 + $0xc8] sm:$0xff]
        %v2450 = vld [vmem:[#allocation2 + $0xd0] sm:$0xff]
        %v2451 = vld [vmem:[#allocation2 + $0xd8] sm:$0xff]
        %v2452 = vld [vmem:[#allocation2 + $0xe0] sm:$0xff]
        %v2453 = vld [vmem:[#allocation2 + $0xe8] sm:$0xff]
        %v2454 = vld [vmem:[#allocation2 + $0xf0] sm:$0xff]
        %v2455 = vld [vmem:[#allocation2 + $0xf8] sm:$0xff]
        %v2456 = vrcp.pop %v2424
        %v2457 = vrcp.pop %v2425
        %v2458 = vrcp.pop %v2426
        %v2459 = vrcp.pop %v2427
        %v2460 = vrcp.pop %v2428
        %v2461 = vrcp.pop %v2429
        %v2462 = vrcp.pop %v2430
        %v2463 = vrcp.pop %v2431
        %v2464 = vrcp.pop %v2432
        %v2465 = vrcp.pop %v2433
        %v2466 = vrcp.pop %v2434
        %v2467 = vrcp.pop %v2435
        %v2468 = vrcp.pop %v2436
        %v2469 = vrcp.pop %v2437
        %v2470 = vrcp.pop %v2438
        %v2471 = vrcp.pop %v2439
        %v2472 = vrcp.pop %v2440
        %v2473 = vrcp.pop %v2441
        %v2474 = vrcp.pop %v2442
        %v2475 = vrcp.pop %v2443
        %v2476 = vrcp.pop %v2444
        %v2477 = vrcp.pop %v2445
        %v2478 = vrcp.pop %v2446
        %v2479 = vrcp.pop %v2447
        %v2480 = vrcp.pop %v2448
        %v2481 = vrcp.pop %v2449
        %v2482 = vrcp.pop %v2450
        %v2483 = vrcp.pop %v2451
        %v2484 = vrcp.pop %v2452
        %v2485 = vrcp.pop %v2453
        %v2486 = vrcp.pop %v2454
        %v2487 = vrcp.pop %v2455
        %2489 = vset.pattern.permute.xlu0 32
        %2490 = vperm.xlu0 %2489, %v2456
        %v2491 = vpop.permute.xlu0 %2490
        %2494 = vset.pattern.permute.xlu0 32
        %2495 = vperm.xlu0 %2494, %v2457
        %v2496 = vpop.permute.xlu0 %2495
        %2499 = vset.pattern.permute.xlu0 32
        %2500 = vperm.xlu0 %2499, %v2458
        %v2501 = vpop.permute.xlu0 %2500
        %2504 = vset.pattern.permute.xlu0 32
        %2505 = vperm.xlu0 %2504, %v2459
        %v2506 = vpop.permute.xlu0 %2505
        %2509 = vset.pattern.permute.xlu0 32
        %2510 = vperm.xlu0 %2509, %v2460
        %v2511 = vpop.permute.xlu0 %2510
        %2514 = vset.pattern.permute.xlu0 32
        %2515 = vperm.xlu0 %2514, %v2461
        %v2516 = vpop.permute.xlu0 %2515
        %2519 = vset.pattern.permute.xlu0 32
        %2520 = vperm.xlu0 %2519, %v2462
        %v2521 = vpop.permute.xlu0 %2520
        %2524 = vset.pattern.permute.xlu0 32
        %2525 = vperm.xlu0 %2524, %v2463
        %v2526 = vpop.permute.xlu0 %2525
        %2529 = vset.pattern.permute.xlu0 32
        %2530 = vperm.xlu0 %2529, %v2464
        %v2531 = vpop.permute.xlu0 %2530
        %2534 = vset.pattern.permute.xlu0 32
        %2535 = vperm.xlu0 %2534, %v2465
        %v2536 = vpop.permute.xlu0 %2535
        %2539 = vset.pattern.permute.xlu0 32
        %2540 = vperm.xlu0 %2539, %v2466
        %v2541 = vpop.permute.xlu0 %2540
        %2544 = vset.pattern.permute.xlu0 32
        %2545 = vperm.xlu0 %2544, %v2467
        %v2546 = vpop.permute.xlu0 %2545
        %2549 = vset.pattern.permute.xlu0 32
        %2550 = vperm.xlu0 %2549, %v2468
        %v2551 = vpop.permute.xlu0 %2550
        %2554 = vset.pattern.permute.xlu0 32
        %2555 = vperm.xlu0 %2554, %v2469
        %v2556 = vpop.permute.xlu0 %2555
        %2559 = vset.pattern.permute.xlu0 32
        %2560 = vperm.xlu0 %2559, %v2470
        %v2561 = vpop.permute.xlu0 %2560
        %2564 = vset.pattern.permute.xlu0 32
        %2565 = vperm.xlu0 %2564, %v2471
        %v2566 = vpop.permute.xlu0 %2565
        %2569 = vset.pattern.permute.xlu0 32
        %2570 = vperm.xlu0 %2569, %v2472
        %v2571 = vpop.permute.xlu0 %2570
        %2574 = vset.pattern.permute.xlu0 32
        %2575 = vperm.xlu0 %2574, %v2473
        %v2576 = vpop.permute.xlu0 %2575
        %2579 = vset.pattern.permute.xlu0 32
        %2580 = vperm.xlu0 %2579, %v2474
        %v2581 = vpop.permute.xlu0 %2580
        %2584 = vset.pattern.permute.xlu0 32
        %2585 = vperm.xlu0 %2584, %v2475
        %v2586 = vpop.permute.xlu0 %2585
        %2589 = vset.pattern.permute.xlu0 32
        %2590 = vperm.xlu0 %2589, %v2476
        %v2591 = vpop.permute.xlu0 %2590
        %2594 = vset.pattern.permute.xlu0 32
        %2595 = vperm.xlu0 %2594, %v2477
        %v2596 = vpop.permute.xlu0 %2595
        %2599 = vset.pattern.permute.xlu0 32
        %2600 = vperm.xlu0 %2599, %v2478
        %v2601 = vpop.permute.xlu0 %2600
        %2604 = vset.pattern.permute.xlu0 32
        %2605 = vperm.xlu0 %2604, %v2479
        %v2606 = vpop.permute.xlu0 %2605
        %2609 = vset.pattern.permute.xlu0 32
        %2610 = vperm.xlu0 %2609, %v2480
        %v2611 = vpop.permute.xlu0 %2610
        %2614 = vset.pattern.permute.xlu0 32
        %2615 = vperm.xlu0 %2614, %v2481
        %v2616 = vpop.permute.xlu0 %2615
        %2619 = vset.pattern.permute.xlu0 32
        %2620 = vperm.xlu0 %2619, %v2482
        %v2621 = vpop.permute.xlu0 %2620
        %2624 = vset.pattern.permute.xlu0 32
        %2625 = vperm.xlu0 %2624, %v2483
        %v2626 = vpop.permute.xlu0 %2625
        %2629 = vset.pattern.permute.xlu0 32
        %2630 = vperm.xlu0 %2629, %v2484
        %v2631 = vpop.permute.xlu0 %2630
        %2634 = vset.pattern.permute.xlu0 32
        %2635 = vperm.xlu0 %2634, %v2485
        %v2636 = vpop.permute.xlu0 %2635
        %2639 = vset.pattern.permute.xlu0 32
        %2640 = vperm.xlu0 %2639, %v2486
        %v2641 = vpop.permute.xlu0 %2640
        %2644 = vset.pattern.permute.xlu0 32
        %2645 = vperm.xlu0 %2644, %v2487
        %v2646 = vpop.permute.xlu0 %2645
        %v2648 = vmul.f32 %v2424, %v2491
        %v2649 = vmul.f32 %v2425, %v2496
        %v2650 = vmul.f32 %v2426, %v2501
        %v2651 = vmul.f32 %v2427, %v2506
        %v2652 = vmul.f32 %v2428, %v2511
        %v2653 = vmul.f32 %v2429, %v2516
        %v2654 = vmul.f32 %v2430, %v2521
        %v2655 = vmul.f32 %v2431, %v2526
        %v2656 = vmul.f32 %v2432, %v2531
        %v2657 = vmul.f32 %v2433, %v2536
        %v2658 = vmul.f32 %v2434, %v2541
        %v2659 = vmul.f32 %v2435, %v2546
        %v2660 = vmul.f32 %v2436, %v2551
        %v2661 = vmul.f32 %v2437, %v2556
        %v2662 = vmul.f32 %v2438, %v2561
        %v2663 = vmul.f32 %v2439, %v2566
        %v2664 = vmul.f32 %v2440, %v2571
        %v2665 = vmul.f32 %v2441, %v2576
        %v2666 = vmul.f32 %v2442, %v2581
        %v2667 = vmul.f32 %v2443, %v2586
        %v2668 = vmul.f32 %v2444, %v2591
        %v2669 = vmul.f32 %v2445, %v2596
        %v2670 = vmul.f32 %v2446, %v2601
        %v2671 = vmul.f32 %v2447, %v2606
        %v2672 = vmul.f32 %v2448, %v2611
        %v2673 = vmul.f32 %v2449, %v2616
        %v2674 = vmul.f32 %v2450, %v2621
        %v2675 = vmul.f32 %v2451, %v2626
        %v2676 = vmul.f32 %v2452, %v2631
        %v2677 = vmul.f32 %v2453, %v2636
        %v2678 = vmul.f32 %v2454, %v2641
        %v2679 = vmul.f32 %v2455, %v2646
        %v2680 = vpack.c.bf16 %v2649, %v2648
        %v2681 = vpack.c.bf16 %v2651, %v2650
        %v2682 = vpack.c.bf16 %v2653, %v2652
        %v2683 = vpack.c.bf16 %v2655, %v2654
        %v2684 = vpack.c.bf16 %v2657, %v2656
        %v2685 = vpack.c.bf16 %v2659, %v2658
        %v2686 = vpack.c.bf16 %v2661, %v2660
        %v2687 = vpack.c.bf16 %v2663, %v2662
        %v2688 = vpack.c.bf16 %v2665, %v2664
        %v2689 = vpack.c.bf16 %v2667, %v2666
        %v2690 = vpack.c.bf16 %v2669, %v2668
        %v2691 = vpack.c.bf16 %v2671, %v2670
        %v2692 = vpack.c.bf16 %v2673, %v2672
        %v2693 = vpack.c.bf16 %v2675, %v2674
        %v2694 = vpack.c.bf16 %v2677, %v2676
        %v2695 = vpack.c.bf16 %v2679, %v2678
        %v2696 = vld [vmem:[%s5] sm:$0xf]
        %v2697 = vld [vmem:[%s5 + $0x4] sm:$0xf]
        %v2698 = vld [vmem:[%s5 + $0x8] sm:$0xf]
        %v2699 = vld [vmem:[%s5 + $0xc] sm:$0xf]
        %v2700 = vld [vmem:[%s6] sm:$0x1]
        %v2702 = vlaneseq
        %v2703 = vshrl.u32 %v2702, 7
        %v2704 = vsub.s32 0, %v2703
        %v2705 = vrot.slane %v2700, %v2704
        %v2711 = vunpack.c.l.b16 %v2696
        %v2712 = vunpack.c.l.b16 %v2697
        %v2713 = vunpack.c.l.b16 %v2698
        %v2714 = vunpack.c.l.b16 %v2699
        %v2715 = vpack.c.b16 %v2712, %v2711
        %v2716 = vpack.c.b16 %v2714, %v2713
        %vm2719 = vcmask 261120
        %v2721 = vsel %vm2719, %v2680, 0
        %v2724 = vsel %vm2719, %v2681, 0
        %v2727 = vsel %vm2719, %v2682, 0
        %v2730 = vsel %vm2719, %v2683, 0
        %v2733 = vsel %vm2719, %v2684, 0
        %v2736 = vsel %vm2719, %v2685, 0
        %v2739 = vsel %vm2719, %v2686, 0
        %v2742 = vsel %vm2719, %v2687, 0
        %v2745 = vsel %vm2719, %v2688, 0
        %v2748 = vsel %vm2719, %v2689, 0
        %v2751 = vsel %vm2719, %v2690, 0
        %v2754 = vsel %vm2719, %v2691, 0
        %v2757 = vsel %vm2719, %v2692, 0
        %v2760 = vsel %vm2719, %v2693, 0
        %v2763 = vsel %vm2719, %v2694, 0
        %v2766 = vsel %vm2719, %v2695, 0
        %2768 = vmatprep.subr.bf16.mxu0 0
        %2769 = vmatpush1.bf16.msra.mxu0 0
        %2770 = vmatprep.subr.bf16.mxu0 0
        %2771 = vmatpush1.bf16.msra.mxu0 0
        %2772 = vmatprep.subr.bf16.mxu0 0
        %2773 = vmatpush1.bf16.msra.mxu0 0
        %2774 = vmatprep.subr.bf16.mxu0 0
        %2775 = vmatpush1.bf16.msra.mxu0 0
        %2776 = vmatprep.subr.bf16.mxu0 0
        %2777 = vmatpush1.bf16.msra.mxu0 0
        %2778 = vmatprep.subr.bf16.mxu0 0
        %2779 = vmatpush1.bf16.msra.mxu0 0
        %2780 = vmatprep.subr.bf16.mxu0 0
        %2781 = vmatpush1.bf16.msra.mxu0 %v2716
        %2782 = vmatprep.subr.bf16.mxu0 0
        %2783 = vmatpush1.bf16.msra.mxu0 %v2715
        %2784 = vmatprep.subr.bf16.mxu0 0
        %2785 = vmatpush2.bf16.msra.mxu0 0
        %2786 = vmatprep.subr.bf16.mxu0 0
        %2787 = vmatpush2.bf16.msra.mxu0 0
        %2788 = vmatprep.subr.bf16.mxu0 0
        %2789 = vmatpush2.bf16.msra.mxu0 0
        %2790 = vmatprep.subr.bf16.mxu0 0
        %2791 = vmatpush2.bf16.msra.mxu0 0
        %2792 = vmatprep.subr.bf16.mxu0 0
        %2793 = vmatpush2.bf16.msra.mxu0 0
        %2794 = vmatprep.subr.bf16.mxu0 0
        %2795 = vmatpush2.bf16.msra.mxu0 0
        %2796 = vmatprep.subr.bf16.mxu0 0
        %2797 = vmatpush2.bf16.msra.mxu0 0
        %2798 = vmatprep.subr.bf16.mxu0 0
        %2799 = vmatpush2.bf16.msra.mxu0 0
        %2800 = vmatprep.mubr.bf16.mxu0 0
        %2801 = vmatmul.mubr.bf16.gmra.mxu0 %v2721
        %v2802 = vpop.f32.mrf.mxu0
        %v2803 = vadd.f32 %v2705, %v2802
        %v2804 = vpop.f32.mrf.mxu0
        %v2805 = vpop.f32.mrf.mxu0
        %v2806 = vadd.f32 %v2705, %v2805
        %v2807 = vpop.f32.mrf.mxu0
        %2808 = vmatprep.mubr.bf16.mxu0 0
        %2809 = vmatmul.mubr.bf16.gmra.mxu0 %v2724
        %v2810 = vpop.f32.mrf.mxu0
        %v2811 = vadd.f32 %v2705, %v2810
        %v2812 = vpop.f32.mrf.mxu0
        %v2813 = vpop.f32.mrf.mxu0
        %v2814 = vadd.f32 %v2705, %v2813
        %v2815 = vpop.f32.mrf.mxu0
        %2816 = vmatprep.mubr.bf16.mxu0 0
        %2817 = vmatmul.mubr.bf16.gmra.mxu0 %v2727
        %v2818 = vpop.f32.mrf.mxu0
        %v2819 = vadd.f32 %v2705, %v2818
        %v2820 = vpop.f32.mrf.mxu0
        %v2821 = vpop.f32.mrf.mxu0
        %v2822 = vadd.f32 %v2705, %v2821
        %v2823 = vpop.f32.mrf.mxu0
        %2824 = vmatprep.mubr.bf16.mxu0 0
        %2825 = vmatmul.mubr.bf16.gmra.mxu0 %v2730
        %v2826 = vpop.f32.mrf.mxu0
        %v2827 = vadd.f32 %v2705, %v2826
        %v2828 = vpop.f32.mrf.mxu0
        %v2829 = vpop.f32.mrf.mxu0
        %v2830 = vadd.f32 %v2705, %v2829
        %v2831 = vpop.f32.mrf.mxu0
        %2832 = vmatprep.mubr.bf16.mxu0 0
        %2833 = vmatmul.mubr.bf16.gmra.mxu0 %v2733
        %v2834 = vpop.f32.mrf.mxu0
        %v2835 = vadd.f32 %v2705, %v2834
        %v2836 = vpop.f32.mrf.mxu0
        %v2837 = vpop.f32.mrf.mxu0
        %v2838 = vadd.f32 %v2705, %v2837
        %v2839 = vpop.f32.mrf.mxu0
        %2840 = vmatprep.mubr.bf16.mxu0 0
        %2841 = vmatmul.mubr.bf16.gmra.mxu0 %v2736
        %v2842 = vpop.f32.mrf.mxu0
        %v2843 = vadd.f32 %v2705, %v2842
        %v2844 = vpop.f32.mrf.mxu0
        %v2845 = vpop.f32.mrf.mxu0
        %v2846 = vadd.f32 %v2705, %v2845
        %v2847 = vpop.f32.mrf.mxu0
        %2848 = vmatprep.mubr.bf16.mxu0 0
        %2849 = vmatmul.mubr.bf16.gmra.mxu0 %v2739
        %v2850 = vpop.f32.mrf.mxu0
        %v2851 = vadd.f32 %v2705, %v2850
        %v2852 = vpop.f32.mrf.mxu0
        %v2853 = vpop.f32.mrf.mxu0
        %v2854 = vadd.f32 %v2705, %v2853
        %v2855 = vpop.f32.mrf.mxu0
        %2856 = vmatprep.mubr.bf16.mxu0 0
        %2857 = vmatmul.mubr.bf16.gmra.mxu0 %v2742
        %v2858 = vpop.f32.mrf.mxu0
        %v2859 = vadd.f32 %v2705, %v2858
        %v2860 = vpop.f32.mrf.mxu0
        %v2861 = vpop.f32.mrf.mxu0
        %v2862 = vadd.f32 %v2705, %v2861
        %v2863 = vpop.f32.mrf.mxu0
        %2864 = vmatprep.mubr.bf16.mxu0 0
        %2865 = vmatmul.mubr.bf16.gmra.mxu0 %v2745
        %v2866 = vpop.f32.mrf.mxu0
        %v2867 = vadd.f32 %v2705, %v2866
        %v2868 = vpop.f32.mrf.mxu0
        %v2869 = vpop.f32.mrf.mxu0
        %v2870 = vadd.f32 %v2705, %v2869
        %v2871 = vpop.f32.mrf.mxu0
        %2872 = vmatprep.mubr.bf16.mxu0 0
        %2873 = vmatmul.mubr.bf16.gmra.mxu0 %v2748
        %v2874 = vpop.f32.mrf.mxu0
        %v2875 = vadd.f32 %v2705, %v2874
        %v2876 = vpop.f32.mrf.mxu0
        %v2877 = vpop.f32.mrf.mxu0
        %v2878 = vadd.f32 %v2705, %v2877
        %v2879 = vpop.f32.mrf.mxu0
        %2880 = vmatprep.mubr.bf16.mxu0 0
        %2881 = vmatmul.mubr.bf16.gmra.mxu0 %v2751
        %v2882 = vpop.f32.mrf.mxu0
        %v2883 = vadd.f32 %v2705, %v2882
        %v2884 = vpop.f32.mrf.mxu0
        %v2885 = vpop.f32.mrf.mxu0
        %v2886 = vadd.f32 %v2705, %v2885
        %v2887 = vpop.f32.mrf.mxu0
        %2888 = vmatprep.mubr.bf16.mxu0 0
        %2889 = vmatmul.mubr.bf16.gmra.mxu0 %v2754
        %v2890 = vpop.f32.mrf.mxu0
        %v2891 = vadd.f32 %v2705, %v2890
        %v2892 = vpop.f32.mrf.mxu0
        %v2893 = vpop.f32.mrf.mxu0
        %v2894 = vadd.f32 %v2705, %v2893
        %v2895 = vpop.f32.mrf.mxu0
        %2896 = vmatprep.mubr.bf16.mxu0 0
        %2897 = vmatmul.mubr.bf16.gmra.mxu0 %v2757
        %v2898 = vpop.f32.mrf.mxu0
        %v2899 = vadd.f32 %v2705, %v2898
        %v2900 = vpop.f32.mrf.mxu0
        %v2901 = vpop.f32.mrf.mxu0
        %v2902 = vadd.f32 %v2705, %v2901
        %v2903 = vpop.f32.mrf.mxu0
        %2904 = vmatprep.mubr.bf16.mxu0 0
        %2905 = vmatmul.mubr.bf16.gmra.mxu0 %v2760
        %v2906 = vpop.f32.mrf.mxu0
        %v2907 = vadd.f32 %v2705, %v2906
        %v2908 = vpop.f32.mrf.mxu0
        %v2909 = vpop.f32.mrf.mxu0
        %v2910 = vadd.f32 %v2705, %v2909
        %v2911 = vpop.f32.mrf.mxu0
        %2912 = vmatprep.mubr.bf16.mxu0 0
        %2913 = vmatmul.mubr.bf16.gmra.mxu0 %v2763
        %v2914 = vpop.f32.mrf.mxu0
        %v2915 = vadd.f32 %v2705, %v2914
        %v2916 = vpop.f32.mrf.mxu0
        %v2917 = vpop.f32.mrf.mxu0
        %v2918 = vadd.f32 %v2705, %v2917
        %v2919 = vpop.f32.mrf.mxu0
        %2920 = vmatprep.mubr.bf16.mxu0 0
        %2921 = vmatmul.mubr.bf16.gmra.mxu0 %v2766
        %v2922 = vpop.f32.mrf.mxu0
        %v2923 = vadd.f32 %v2705, %v2922
        %v2924 = vpop.f32.mrf.mxu0
        %v2925 = vpop.f32.mrf.mxu0
        %v2926 = vadd.f32 %v2705, %v2925
        %v2927 = vpop.f32.mrf.mxu0
        %2928 = vdwg.mxu0
        %v2929 = vmax.f32 %v2803, 0.0
        %v2930 = vmax.f32 %v2806, 0.0
        %v2931 = vmax.f32 %v2811, 0.0
        %v2932 = vmax.f32 %v2814, 0.0
        %v2933 = vmax.f32 %v2819, 0.0
        %v2934 = vmax.f32 %v2822, 0.0
        %v2935 = vmax.f32 %v2827, 0.0
        %v2936 = vmax.f32 %v2830, 0.0
        %v2937 = vmax.f32 %v2835, 0.0
        %v2938 = vmax.f32 %v2838, 0.0
        %v2939 = vmax.f32 %v2843, 0.0
        %v2940 = vmax.f32 %v2846, 0.0
        %v2941 = vmax.f32 %v2851, 0.0
        %v2942 = vmax.f32 %v2854, 0.0
        %v2943 = vmax.f32 %v2859, 0.0
        %v2944 = vmax.f32 %v2862, 0.0
        %v2945 = vmax.f32 %v2867, 0.0
        %v2946 = vmax.f32 %v2870, 0.0
        %v2947 = vmax.f32 %v2875, 0.0
        %v2948 = vmax.f32 %v2878, 0.0
        %v2949 = vmax.f32 %v2883, 0.0
        %v2950 = vmax.f32 %v2886, 0.0
        %v2951 = vmax.f32 %v2891, 0.0
        %v2952 = vmax.f32 %v2894, 0.0
        %v2953 = vmax.f32 %v2899, 0.0
        %v2954 = vmax.f32 %v2902, 0.0
        %v2955 = vmax.f32 %v2907, 0.0
        %v2956 = vmax.f32 %v2910, 0.0
        %v2957 = vmax.f32 %v2915, 0.0
        %v2958 = vmax.f32 %v2918, 0.0
        %v2959 = vmax.f32 %v2923, 0.0
        %v2960 = vmax.f32 %v2926, 0.0
        %v2961 = vpack.c.bf16 %v2930, %v2929
        %v2962 = vpack.c.bf16 %v2932, %v2931
        %v2963 = vpack.c.bf16 %v2934, %v2933
        %v2964 = vpack.c.bf16 %v2936, %v2935
        %v2965 = vpack.c.bf16 %v2938, %v2937
        %v2966 = vpack.c.bf16 %v2940, %v2939
        %v2967 = vpack.c.bf16 %v2942, %v2941
        %v2968 = vpack.c.bf16 %v2944, %v2943
        %v2969 = vpack.c.bf16 %v2946, %v2945
        %v2970 = vpack.c.bf16 %v2948, %v2947
        %v2971 = vpack.c.bf16 %v2950, %v2949
        %v2972 = vpack.c.bf16 %v2952, %v2951
        %v2973 = vpack.c.bf16 %v2954, %v2953
        %v2974 = vpack.c.bf16 %v2956, %v2955
        %v2975 = vpack.c.bf16 %v2958, %v2957
        %v2976 = vpack.c.bf16 %v2960, %v2959
        %v2993 = vunpack.c.l.b16 %v2961
        %v2994 = vunpack.c.h.b16 %v2961
        %v2995 = vunpack.c.l.b16 %v2962
        %v2996 = vunpack.c.h.b16 %v2962
        %v2997 = vunpack.c.l.b16 %v2963
        %v2998 = vunpack.c.h.b16 %v2963
        %v2999 = vunpack.c.l.b16 %v2964
        %v3000 = vunpack.c.h.b16 %v2964
        %v3001 = vunpack.c.l.b16 %v2965
        %v3002 = vunpack.c.h.b16 %v2965
        %v3003 = vunpack.c.l.b16 %v2966
        %v3004 = vunpack.c.h.b16 %v2966
        %v3005 = vunpack.c.l.b16 %v2967
        %v3006 = vunpack.c.h.b16 %v2967
        %v3007 = vunpack.c.l.b16 %v2968
        %v3008 = vunpack.c.h.b16 %v2968
        %v3009 = vunpack.c.l.b16 %v2969
        %v3010 = vunpack.c.h.b16 %v2969
        %v3011 = vunpack.c.l.b16 %v2970
        %v3012 = vunpack.c.h.b16 %v2970
        %v3013 = vunpack.c.l.b16 %v2971
        %v3014 = vunpack.c.h.b16 %v2971
        %v3015 = vunpack.c.l.b16 %v2972
        %v3016 = vunpack.c.h.b16 %v2972
        %v3017 = vunpack.c.l.b16 %v2973
        %v3018 = vunpack.c.h.b16 %v2973
        %v3019 = vunpack.c.l.b16 %v2974
        %v3020 = vunpack.c.h.b16 %v2974
        %v3021 = vunpack.c.l.b16 %v2975
        %v3022 = vunpack.c.h.b16 %v2975
        %v3023 = vunpack.c.l.b16 %v2976
        %v3024 = vunpack.c.h.b16 %v2976
        %v3025 = vpack.c.b16 %v2993, %v2993
        %v3026 = vpack.c.b16 %v2994, %v2994
        %v3027 = vpack.c.b16 %v2995, %v2995
        %v3028 = vpack.c.b16 %v2996, %v2996
        %v3029 = vpack.c.b16 %v2997, %v2997
        %v3030 = vpack.c.b16 %v2998, %v2998
        %v3031 = vpack.c.b16 %v2999, %v2999
        %v3032 = vpack.c.b16 %v3000, %v3000
        %v3033 = vpack.c.b16 %v3001, %v3001
        %v3034 = vpack.c.b16 %v3002, %v3002
        %v3035 = vpack.c.b16 %v3003, %v3003
        %v3036 = vpack.c.b16 %v3004, %v3004
        %v3037 = vpack.c.b16 %v3005, %v3005
        %v3038 = vpack.c.b16 %v3006, %v3006
        %v3039 = vpack.c.b16 %v3007, %v3007
        %v3040 = vpack.c.b16 %v3008, %v3008
        %v3041 = vpack.c.b16 %v3009, %v3009
        %v3042 = vpack.c.b16 %v3010, %v3010
        %v3043 = vpack.c.b16 %v3011, %v3011
        %v3044 = vpack.c.b16 %v3012, %v3012
        %v3045 = vpack.c.b16 %v3013, %v3013
        %v3046 = vpack.c.b16 %v3014, %v3014
        %v3047 = vpack.c.b16 %v3015, %v3015
        %v3048 = vpack.c.b16 %v3016, %v3016
        %v3049 = vpack.c.b16 %v3017, %v3017
        %v3050 = vpack.c.b16 %v3018, %v3018
        %v3051 = vpack.c.b16 %v3019, %v3019
        %v3052 = vpack.c.b16 %v3020, %v3020
        %v3053 = vpack.c.b16 %v3021, %v3021
        %v3054 = vpack.c.b16 %v3022, %v3022
        %v3055 = vpack.c.b16 %v3023, %v3023
        %v3056 = vpack.c.b16 %v3024, %v3024
        %vm3089 = vcmask 527360
        %3090 = vst.msk [vmem:[%s395] sm:$0xf] %vm3089, %v3025
        %3091 = vst.msk [vmem:[%s395 + $0x4] sm:$0xf] %vm3089, %v3026
        %3092 = vst.msk [vmem:[%s395 + $0x8] sm:$0xf] %vm3089, %v3027
        %3093 = vst.msk [vmem:[%s395 + $0xc] sm:$0xf] %vm3089, %v3028
        %3094 = vst.msk [vmem:[%s395 + $0x10] sm:$0xf] %vm3089, %v3029
        %3095 = vst.msk [vmem:[%s395 + $0x14] sm:$0xf] %vm3089, %v3030
        %3096 = vst.msk [vmem:[%s395 + $0x18] sm:$0xf] %vm3089, %v3031
        %3097 = vst.msk [vmem:[%s395 + $0x1c] sm:$0xf] %vm3089, %v3032
        %3098 = vst.msk [vmem:[%s395 + $0x20] sm:$0xf] %vm3089, %v3033
        %3099 = vst.msk [vmem:[%s395 + $0x24] sm:$0xf] %vm3089, %v3034
        %3100 = vst.msk [vmem:[%s395 + $0x28] sm:$0xf] %vm3089, %v3035
        %3101 = vst.msk [vmem:[%s395 + $0x2c] sm:$0xf] %vm3089, %v3036
        %3102 = vst.msk [vmem:[%s395 + $0x30] sm:$0xf] %vm3089, %v3037
        %3103 = vst.msk [vmem:[%s395 + $0x34] sm:$0xf] %vm3089, %v3038
        %3104 = vst.msk [vmem:[%s395 + $0x38] sm:$0xf] %vm3089, %v3039
        %3105 = vst.msk [vmem:[%s395 + $0x3c] sm:$0xf] %vm3089, %v3040
        %3106 = vst.msk [vmem:[%s395 + $0x40] sm:$0xf] %vm3089, %v3041
        %3107 = vst.msk [vmem:[%s395 + $0x44] sm:$0xf] %vm3089, %v3042
        %3108 = vst.msk [vmem:[%s395 + $0x48] sm:$0xf] %vm3089, %v3043
        %3109 = vst.msk [vmem:[%s395 + $0x4c] sm:$0xf] %vm3089, %v3044
        %3110 = vst.msk [vmem:[%s395 + $0x50] sm:$0xf] %vm3089, %v3045
        %3111 = vst.msk [vmem:[%s395 + $0x54] sm:$0xf] %vm3089, %v3046
        %3112 = vst.msk [vmem:[%s395 + $0x58] sm:$0xf] %vm3089, %v3047
        %3113 = vst.msk [vmem:[%s395 + $0x5c] sm:$0xf] %vm3089, %v3048
        %3114 = vst.msk [vmem:[%s395 + $0x60] sm:$0xf] %vm3089, %v3049
        %3115 = vst.msk [vmem:[%s395 + $0x64] sm:$0xf] %vm3089, %v3050
        %3116 = vst.msk [vmem:[%s395 + $0x68] sm:$0xf] %vm3089, %v3051
        %3117 = vst.msk [vmem:[%s395 + $0x6c] sm:$0xf] %vm3089, %v3052
        %3118 = vst.msk [vmem:[%s395 + $0x70] sm:$0xf] %vm3089, %v3053
        %3119 = vst.msk [vmem:[%s395 + $0x74] sm:$0xf] %vm3089, %v3054
        %3120 = vst.msk [vmem:[%s395 + $0x78] sm:$0xf] %vm3089, %v3055
        %3121 = vst.msk [vmem:[%s395 + $0x7c] sm:$0xf] %vm3089, %v3056
      $region56: #{tpu_custom_call.1} parent=47 // pred_fallthru
        _
      %s3122 = smul.u32 32, %s24
      %p3123 = scmp.lt.s32.totalorder %s23, 1
      %s3124 = scalar_select %p3123, %s23, 1
      %p3125 = scmp.lt.s32.totalorder %s3122, 31
      %s3126 = scalar_select %p3125, %s3122, 31
      %s3127 = smul.addr %s3124, 32
      %s3128 = sadd.s32 %s3126, %s3127
      %s3129 = smul.addr %s3128, 4
      %s3130 = scalar_lea.vmem %s7, %s3129
      // Predicated region
      $region57: #{tpu_custom_call.1} parent=47 // pred_check
        %p3131 = pneg %p225
      $region58: #{tpu_custom_call.1} parent=47 // pred_check_branch
        %3133 = sbr.rel (%p3131) target = $region60
      $region59: #{tpu_custom_call.1} parent=47 // pred_region
        %s3134 = smul.u32 32, %s24
      $region60: #{tpu_custom_call.1} parent=47 // pred_fallthru
        _
    $region48: #{tpu_custom_call.1} parent=5 // pred_fallthru
      _
    %p3135 = scmp.le.s32.totalorder 2, %s13
    // Predicated region
    $region61: #{tpu_custom_call.1} parent=5 // pred_check
      %p3136 = pneg %p3135
    $region62: #{tpu_custom_call.1} parent=5 // pred_check_branch
      %3138 = sbr.rel (%p3136) target = $region64
    $region63: #{tpu_custom_call.1} parent=5 // pred_region
      %s3139 = ssub.s32 %s13, 2
      // Predicated region
      $region65: #{tpu_custom_call.1} parent=63 // pred_check
        %p3140 = pneg %p231
      $region66: #{tpu_custom_call.1} parent=63 // pred_check_branch
        %3142 = sbr.rel (%p3140) target = $region68
      $region67: #{tpu_custom_call.1} parent=63 // pred_region
        %s3143 = smul.u32 32, %s27
        %p3144 = scmp.lt.s32.totalorder %s26, 1
        %s3145 = scalar_select %p3144, %s26, 1
        %p3146 = scmp.lt.s32.totalorder %s3143, 31
        %s3147 = scalar_select %p3146, %s3143, 31
        %s3148 = smul.addr %s3145, 32
        %s3149 = sadd.s32 %s3147, %s3148
        %s3150 = smul.addr %s3149, 4
        %s3151 = scalar_lea.vmem %s7, %s3150
      $region68: #{tpu_custom_call.1} parent=63 // pred_fallthru
        _
    $region64: #{tpu_custom_call.1} parent=5 // pred_fallthru
      _
  $region6: #{tpu_custom_call.1} parent=0 // loop_footer
    %s17 = sadd.s32 1, %s13
  $region7: #{tpu_custom_call.1} parent=0 // loop_footer_branch
    %12 = sbr.rel target = $region3
  $region8: #{tpu_custom_call.1} parent=0 // loop_exit
    _

</llo_original>
